<compile_context>
chip_gen: v7x
topology: tpu7x:2x2x1
jax: 0.10.0
libtpu: 0.0.40
codegen_flags: <defaults>
</compile_context>

<pallas_src>
import functools

import jax
import jax.numpy as jnp
from jax.experimental import pallas as pl
from jax.experimental.pallas import tpu as pltpu

# ---- small, self-consistent config (same structure as the PyTorch module) ----
VOCAB_SIZE = 256          # lane-dense logits (multiple of 128)
BLOCK_SIZE = 16           # max context length
N_EMBD     = 64
N_HEAD     = 4
N_LAYER    = 2
HEAD_SIZE  = N_EMBD // N_HEAD
LN_EPS     = 1e-5


def _layer_norm(x, g, b):
    mu = jnp.mean(x, axis=-1, keepdims=True)
    var = jnp.mean(jnp.square(x - mu), axis=-1, keepdims=True)
    return (x - mu) * jax.lax.rsqrt(var + LN_EPS) * g + b


# --------------------------- fused Pallas kernel ------------------------------
def fused_gpt_kernel(B, T,
                     x_ref,
                     ln1g_ref, ln1b_ref, wqkv_ref, wo_ref, bo_ref,
                     ln2g_ref, ln2b_ref, w1_ref, b1_ref, w2_ref, b2_ref,
                     lnfg_ref, lnfb_ref, wlm_ref, blm_ref,
                     out_ref):
    """All transformer Blocks + final LN + lm_head for a (B*T, C) activation slab."""
    M, C = x_ref.shape                      # M = B * T
    H, hd = N_HEAD, HEAD_SIZE
    x = x_ref[...]                          # f32 (M, C)

    # Causal mask, built once for all layers (hoisted out of the layer loop).
    row = jax.lax.broadcasted_iota(jnp.int32, (T, T), 0)
    col = jax.lax.broadcasted_iota(jnp.int32, (T, T), 1)
    causal = row >= col
    neg_big = jnp.float32(-1e30)            # finite -> no NaN risk on masked rows

    for l in range(N_LAYER):
        # ---- self-attention branch: x + sa(ln1(x)) ----
        xn = _layer_norm(x, ln1g_ref[l], ln1b_ref[l]).astype(jnp.bfloat16)
        # Fused QKV projection; attention scale n_embd**-0.5 is pre-folded into
        # the Q columns of wqkv (host side).
        qkv = jnp.dot(xn, wqkv_ref[l], preferred_element_type=jnp.float32)  # (M, 3C)
        q = qkv[:, :C]
        k = qkv[:, C:2 * C]
        v = qkv[:, 2 * C:]

        wo_l = wo_ref[l]                    # (H, hd, C) bf16
        sa = jnp.zeros((M, C), jnp.float32)
        for h in range(H):                  # short static loop over heads
            sl = slice(h * hd, (h + 1) * hd)
            qh = q[:, sl].reshape(B, T, hd)     # leading-dim split only
            kh = k[:, sl].reshape(B, T, hd)
            vh = v[:, sl].reshape(B, T, hd)
            s = jnp.einsum('bqd,bkd->bqk', qh, kh,
                           preferred_element_type=jnp.float32)    # (B, T, T)
            s = jnp.where(causal, s, neg_big)
            s = s - jnp.max(s, axis=-1, keepdims=True)
            p = jnp.exp(s)
            p = p * pl.reciprocal(jnp.sum(p, axis=-1, keepdims=True), approx=True)
            # TODO(synk): attention dropout omitted (identity / eval mode).
            oh = jnp.einsum('bqk,bkd->bqd', p.astype(jnp.bfloat16),
                            vh.astype(jnp.bfloat16),
                            preferred_element_type=jnp.float32)   # (B, T, hd)
            # Fold this head straight into the output projection (no lane concat).
            sa = sa + jnp.dot(oh.reshape(M, hd).astype(jnp.bfloat16), wo_l[h],
                              preferred_element_type=jnp.float32)
        x = x + sa + bo_ref[l]
        # TODO(synk): residual dropout omitted (identity / eval mode).

        # ---- feed-forward branch: x + ffwd(ln2(x)) ----
        xn2 = _layer_norm(x, ln2g_ref[l], ln2b_ref[l]).astype(jnp.bfloat16)
        h1 = jnp.dot(xn2, w1_ref[l], preferred_element_type=jnp.float32) + b1_ref[l]
        h1 = jnp.maximum(h1, 0.0)
        ff = jnp.dot(h1.astype(jnp.bfloat16), w2_ref[l],
                     preferred_element_type=jnp.float32) + b2_ref[l]
        x = x + ff
        # TODO(synk): MLP dropout omitted (identity / eval mode).

    # ---- final LayerNorm + lm_head (lane-dense V=256 output) ----
    xf = _layer_norm(x, lnfg_ref[...], lnfb_ref[...]).astype(jnp.bfloat16)
    out_ref[...] = (jnp.dot(xf, wlm_ref[...], preferred_element_type=jnp.float32)
                    + blm_ref[...])


# --------------------------- wrappers ------------------------------------------
def _const_spec(a):
    nd = a.ndim
    return pl.BlockSpec(a.shape, lambda i, _nd=nd: (0,) * _nd)


def gpt_pallas_forward(x_flat, prep, *, B, T, batch_splits=1):
    M, C = x_flat.shape
    V = prep['w_lm'].shape[-1]
    assert B % batch_splits == 0
    Bs = B // batch_splits
    Ms = Bs * T

    weight_args = (prep['ln1_g'], prep['ln1_b'],
                   prep['wqkv'], prep['wo'], prep['bo'],
                   prep['ln2_g'], prep['ln2_b'],
                   prep['w1'], prep['b1'], prep['w2'], prep['b2'],
                   prep['lnf_g'], prep['lnf_b'], prep['w_lm'], prep['b_lm'])

    in_specs = ([pl.BlockSpec((Ms, C), lambda i: (i, 0))]
                + [_const_spec(a) for a in weight_args])
    out_specs = pl.BlockSpec((Ms, V), lambda i: (i, 0))

    return pl.pallas_call(
        functools.partial(fused_gpt_kernel, Bs, T),
        out_shape=jax.ShapeDtypeStruct((M, V), jnp.float32),
        grid=(batch_splits,),
        in_specs=in_specs,
        out_specs=out_specs,
        compiler_params=pltpu.CompilerParams(
            dimension_semantics=("parallel",)),   # splits batch across TCs on v7x
    )(x_flat, *weight_args)


@functools.partial(jax.jit, static_argnames=("batch_splits",))
def gpt_forward(idx, prep, batch_splits=1):
    """GPTLanguageModel.forward(idx, targets=None) -> logits (B, T, vocab)."""
    B, T = idx.shape
    tok = jnp.take(prep['tok_emb'], idx, axis=0)              # (B, T, C)
    x = tok + prep['pos_emb'][:T][None]
    x_flat = x.reshape(B * T, N_EMBD)                         # fold B into matmul M
    logits = gpt_pallas_forward(x_flat, prep, B=B, T=T, batch_splits=batch_splits)
    return logits.reshape(B, T, VOCAB_SIZE)                   # loss=None path


# --------------------------- deterministic params ------------------------------
def init_params(key):
    ks = iter(jax.random.split(key, 8 + 10 * N_LAYER))
    std = 0.02
    C, H4, V = N_EMBD, 4 * N_EMBD, VOCAB_SIZE
    params = {
        'tok_emb': jax.random.normal(next(ks), (V, C), jnp.float32) * std,
        'pos_emb': jax.random.normal(next(ks), (BLOCK_SIZE, C), jnp.float32) * std,
        'lnf_g': jnp.ones((1, C), jnp.float32),
        'lnf_b': jnp.zeros((1, C), jnp.float32),
        'w_lm': jax.random.normal(next(ks), (C, V), jnp.float32) * std,
        'b_lm': jnp.zeros((1, V), jnp.float32),
        'layers': [],
    }
    for _ in range(N_LAYER):
        params['layers'].append({
            'ln1_g': jnp.ones((1, C), jnp.float32),
            'ln1_b': jnp.zeros((1, C), jnp.float32),
            'wq': jax.random.normal(next(ks), (C, C), jnp.float32) * std,
            'wk': jax.random.normal(next(ks), (C, C), jnp.float32) * std,
            'wv': jax.random.normal(next(ks), (C, C), jnp.float32) * std,
            'wo': jax.random.normal(next(ks), (C, C), jnp.float32) * std,
            'bo': jnp.zeros((1, C), jnp.float32),
            'ln2_g': jnp.ones((1, C), jnp.float32),
            'ln2_b': jnp.zeros((1, C), jnp.float32),
            'w1': jax.random.normal(next(ks), (C, H4), jnp.float32) * std,
            'b1': jnp.zeros((1, H4), jnp.float32),
            'w2': jax.random.normal(next(ks), (H4, C), jnp.float32) * std,
            'b2': jnp.zeros((1, C), jnp.float32),
        })
    return params


def prepare_params(params):
    """Host-side prep: stack per-layer weights along a leading layer axis, fuse
    Q/K/V into one (C, 3C) matmul weight with the attention scale folded into
    the Q columns, cast matmul weights to bf16 (LN params and biases stay f32
    for the elementwise path)."""
    C = N_EMBD
    scale = C ** (-0.5)      # PyTorch scales by n_embd**-0.5 (not head_size) — reproduced

    def stack(k):
        return jnp.stack([lp[k] for lp in params['layers']])

    wqkv = jnp.concatenate([stack('wq') * scale, stack('wk'), stack('wv')],
                           axis=-1)                              # (L, C, 3C)

    return {
        'tok_emb': params['tok_emb'],
        'pos_emb': params['pos_emb'],
        'ln1_g': stack('ln1_g'), 'ln1_b': stack('ln1_b'),
        'wqkv': wqkv.astype(jnp.bfloat16),
        # (L, C, C) -> (L, H, hd, C): rows of the output projection per head.
        'wo': stack('wo').reshape(N_LAYER, N_HEAD, HEAD_SIZE, C).astype(jnp.bfloat16),
        'bo': stack('bo'),
        'ln2_g': stack('ln2_g'), 'ln2_b': stack('ln2_b'),
        'w1': stack('w1').astype(jnp.bfloat16), 'b1': stack('b1'),
        'w2': stack('w2').astype(jnp.bfloat16), 'b2': stack('b2'),
        'lnf_g': params['lnf_g'], 'lnf_b': params['lnf_b'],
        'w_lm': params['w_lm'].astype(jnp.bfloat16), 'b_lm': params['b_lm'],
    }


# --------------------------- pure-JAX f32 reference ----------------------------
def ref_forward(idx, params):
    """f32 reference with the original PyTorch semantics (eval mode)."""
    B, T = idx.shape
    hp = jax.lax.Precision.HIGHEST
    x = jnp.take(params['tok_emb'], idx, axis=0) + params['pos_emb'][:T][None]
    causal = jnp.tril(jnp.ones((T, T), bool))
    for p in params['layers']:
        xn = _layer_norm(x, p['ln1_g'], p['ln1_b'])
        q = jnp.einsum('btc,cd->btd', xn, p['wq'], precision=hp)
        k = jnp.einsum('btc,cd->btd', xn, p['wk'], precision=hp)
        v = jnp.einsum('btc,cd->btd', xn, p['wv'], precision=hp)
        qh = q.reshape(B, T, N_HEAD, HEAD_SIZE)
        kh = k.reshape(B, T, N_HEAD, HEAD_SIZE)
        vh = v.reshape(B, T, N_HEAD, HEAD_SIZE)
        s = jnp.einsum('bqhd,bkhd->bhqk', qh, kh, precision=hp) * (N_EMBD ** -0.5)
        s = jnp.where(causal, s, -jnp.inf)
        w = jax.nn.softmax(s, axis=-1)
        att = jnp.einsum('bhqk,bkhd->bqhd', w, vh, precision=hp).reshape(B, T, N_EMBD)
        x = x + jnp.einsum('btc,cd->btd', att, p['wo'], precision=hp) + p['bo']
        xn2 = _layer_norm(x, p['ln2_g'], p['ln2_b'])
        h1 = jnp.maximum(jnp.einsum('btc,ch->bth', xn2, p['w1'], precision=hp) + p['b1'], 0.0)
        x = x + jnp.einsum('bth,hc->btc', h1, p['w2'], precision=hp) + p['b2']
    xf = _layer_norm(x, params['lnf_g'], params['lnf_b'])
    return jnp.einsum('btc,cv->btv', xf, params['w_lm'], precision=hp) + params['b_lm']


if __name__ == "__main__":
    key = jax.random.PRNGKey(0)
    pkey, ikey = jax.random.split(key)
    params = init_params(pkey)
    prep = prepare_params(params)

    B, T = 2, 8  # small example shapes (T <= BLOCK_SIZE)
    idx = jax.random.randint(ikey, (B, T), 0, VOCAB_SIZE, dtype=jnp.int32)

    # NOTE: on v7x, call with batch_splits=2 to use both TensorCores.
    logits = gpt_forward(idx, prep)
    logits = jax.block_until_ready(logits)
    assert logits.shape == (B, T, VOCAB_SIZE), logits.shape

    ref = ref_forward(idx, params)
    max_err = float(jnp.max(jnp.abs(logits - ref)))
    # bf16 matmul weights vs. f32 reference -> loose-ish tolerance.
    assert jnp.allclose(logits, ref, atol=2e-2, rtol=2e-2), max_err

    print("KERNEL_OK")
</pallas_src>

<mosaic_0001>
module attributes {stable_mosaic.version = 11 : i64} {
  func.func @fused_gpt_kernel(%arg0: i32, %arg1: memref<16x64xf32, #tpu.memory_space<vmem>>, %arg2: memref<2x1x64xf32, #tpu.memory_space<vmem>>, %arg3: memref<2x1x64xf32, #tpu.memory_space<vmem>>, %arg4: memref<2x64x192xbf16, #tpu.memory_space<vmem>>, %arg5: memref<2x4x16x64xbf16, #tpu.memory_space<vmem>>, %arg6: memref<2x1x64xf32, #tpu.memory_space<vmem>>, %arg7: memref<2x1x64xf32, #tpu.memory_space<vmem>>, %arg8: memref<2x1x64xf32, #tpu.memory_space<vmem>>, %arg9: memref<2x64x256xbf16, #tpu.memory_space<vmem>>, %arg10: memref<2x1x256xf32, #tpu.memory_space<vmem>>, %arg11: memref<2x256x64xbf16, #tpu.memory_space<vmem>>, %arg12: memref<2x1x64xf32, #tpu.memory_space<vmem>>, %arg13: memref<1x64xf32, #tpu.memory_space<vmem>>, %arg14: memref<1x64xf32, #tpu.memory_space<vmem>>, %arg15: memref<64x256xbf16, #tpu.memory_space<vmem>>, %arg16: memref<1x256xf32, #tpu.memory_space<vmem>>, %arg17: memref<16x256xf32, #tpu.memory_space<vmem>>) attributes {dimension_semantics = [#tpu.dimension_semantics<parallel>], iteration_bounds = array<i64: 1>, scalar_prefetch = 0 : i64, scratch_operands = 0 : i64, tpu.core_type = #tpu.core_type<tc>, window_params = [{transform_indices = @transform_0, window_bounds = array<i64: 16, 64>}, {pipeline_mode = #tpu.pipeline_mode<synchronous>, transform_indices = @transform_1, window_bounds = array<i64: 2, 1, 64>}, {pipeline_mode = #tpu.pipeline_mode<synchronous>, transform_indices = @transform_2, window_bounds = array<i64: 2, 1, 64>}, {pipeline_mode = #tpu.pipeline_mode<synchronous>, transform_indices = @transform_3, window_bounds = array<i64: 2, 64, 192>}, {pipeline_mode = #tpu.pipeline_mode<synchronous>, transform_indices = @transform_4, window_bounds = array<i64: 2, 4, 16, 64>}, {pipeline_mode = #tpu.pipeline_mode<synchronous>, transform_indices = @transform_5, window_bounds = array<i64: 2, 1, 64>}, {pipeline_mode = #tpu.pipeline_mode<synchronous>, transform_indices = @transform_6, window_bounds = array<i64: 2, 1, 64>}, {pipeline_mode = #tpu.pipeline_mode<synchronous>, transform_indices = @transform_7, window_bounds = array<i64: 2, 1, 64>}, {pipeline_mode = #tpu.pipeline_mode<synchronous>, transform_indices = @transform_8, window_bounds = array<i64: 2, 64, 256>}, {pipeline_mode = #tpu.pipeline_mode<synchronous>, transform_indices = @transform_9, window_bounds = array<i64: 2, 1, 256>}, {pipeline_mode = #tpu.pipeline_mode<synchronous>, transform_indices = @transform_10, window_bounds = array<i64: 2, 256, 64>}, {pipeline_mode = #tpu.pipeline_mode<synchronous>, transform_indices = @transform_11, window_bounds = array<i64: 2, 1, 64>}, {pipeline_mode = #tpu.pipeline_mode<synchronous>, transform_indices = @transform_12, window_bounds = array<i64: 1, 64>}, {pipeline_mode = #tpu.pipeline_mode<synchronous>, transform_indices = @transform_13, window_bounds = array<i64: 1, 64>}, {pipeline_mode = #tpu.pipeline_mode<synchronous>, transform_indices = @transform_14, window_bounds = array<i64: 64, 256>}, {pipeline_mode = #tpu.pipeline_mode<synchronous>, transform_indices = @transform_15, window_bounds = array<i64: 1, 256>}, {transform_indices = @transform_16, window_bounds = array<i64: 16, 256>}]} {
    %c0 = arith.constant 0 : index
    %c0_0 = arith.constant 0 : index
    %0 = vector.load %arg1[%c0, %c0_0] : memref<16x64xf32, #tpu.memory_space<vmem>>, vector<16x64xf32>
    %1 = tpu.iota {dimensions = array<i32: 0>} : vector<8x8xi32>
    %2 = tpu.iota {dimensions = array<i32: 1>} : vector<8x8xi32>
    %3 = arith.cmpi sge, %1, %2 : vector<8x8xi32>
    %c0_1 = arith.constant 0 : index
    %c0_2 = arith.constant 0 : index
    %c0_3 = arith.constant 0 : index
    %4 = vector.load %arg2[%c0_1, %c0_2, %c0_3] : memref<2x1x64xf32, #tpu.memory_space<vmem>>, vector<1x1x64xf32>
    %5 = vector.shape_cast %4 : vector<1x1x64xf32> to vector<1x64xf32>
    %c0_4 = arith.constant 0 : index
    %c0_5 = arith.constant 0 : index
    %c0_6 = arith.constant 0 : index
    %6 = vector.load %arg3[%c0_4, %c0_5, %c0_6] : memref<2x1x64xf32, #tpu.memory_space<vmem>>, vector<1x1x64xf32>
    %7 = vector.shape_cast %6 : vector<1x1x64xf32> to vector<1x64xf32>
    %cst = arith.constant dense<0.000000e+00> : vector<16xf32>
    %8 = vector.multi_reduction <add>, %0, %cst [1] : vector<16x64xf32> to vector<16xf32>
    %9 = vector.shape_cast %8 : vector<16xf32> to vector<16x1xf32>
    %cst_7 = arith.constant 6.400000e+01 : f32
    %10 = vector.broadcast %cst_7 : f32 to vector<16x1xf32>
    %11 = arith.divf %9, %10 : vector<16x1xf32>
    %12 = vector.broadcast %11 : vector<16x1xf32> to vector<16x64xf32>
    %13 = arith.subf %0, %12 : vector<16x64xf32>
    %14 = arith.mulf %13, %13 : vector<16x64xf32>
    %cst_8 = arith.constant dense<0.000000e+00> : vector<16xf32>
    %15 = vector.multi_reduction <add>, %14, %cst_8 [1] : vector<16x64xf32> to vector<16xf32>
    %16 = vector.shape_cast %15 : vector<16xf32> to vector<16x1xf32>
    %cst_9 = arith.constant 6.400000e+01 : f32
    %17 = vector.broadcast %cst_9 : f32 to vector<16x1xf32>
    %18 = arith.divf %16, %17 : vector<16x1xf32>
    %19 = vector.broadcast %11 : vector<16x1xf32> to vector<16x64xf32>
    %20 = arith.subf %0, %19 : vector<16x64xf32>
    %cst_10 = arith.constant 9.99999974E-6 : f32
    %21 = vector.broadcast %cst_10 : f32 to vector<16x1xf32>
    %22 = arith.addf %18, %21 : vector<16x1xf32>
    %23 = math.rsqrt %22 : vector<16x1xf32>
    %24 = vector.broadcast %23 : vector<16x1xf32> to vector<16x64xf32>
    %25 = arith.mulf %20, %24 : vector<16x64xf32>
    %26 = vector.broadcast %5 : vector<1x64xf32> to vector<16x64xf32>
    %27 = arith.mulf %25, %26 : vector<16x64xf32>
    %28 = vector.broadcast %7 : vector<1x64xf32> to vector<16x64xf32>
    %29 = arith.addf %27, %28 : vector<16x64xf32>
    %30 = arith.truncf %29 : vector<16x64xf32> to vector<16x64xbf16>
    %c0_11 = arith.constant 0 : index
    %c0_12 = arith.constant 0 : index
    %c0_13 = arith.constant 0 : index
    %31 = vector.load %arg4[%c0_11, %c0_12, %c0_13] : memref<2x64x192xbf16, #tpu.memory_space<vmem>>, vector<1x64x192xbf16>
    %32 = vector.shape_cast %31 : vector<1x64x192xbf16> to vector<64x192xbf16>
    %cst_14 = arith.constant dense<0.000000e+00> : vector<16x192xf32>
    %33 = tpu.matmul %30, %32, %cst_14 {dimension_numbers = #tpu.dot_dimension_numbers<[1], [0], [0], [1], [0, 0, 1, 1], [], []>} : vector<16x64xbf16>, vector<64x192xbf16>, vector<16x192xf32> -> vector<16x192xf32>
    %34 = vector.extract_strided_slice %33 {offsets = [0, 0], sizes = [16, 64], strides = [1, 1]} : vector<16x192xf32> to vector<16x64xf32>
    %35 = vector.extract_strided_slice %33 {offsets = [0, 64], sizes = [16, 64], strides = [1, 1]} : vector<16x192xf32> to vector<16x64xf32>
    %36 = vector.extract_strided_slice %33 {offsets = [0, 128], sizes = [16, 64], strides = [1, 1]} : vector<16x192xf32> to vector<16x64xf32>
    %c0_15 = arith.constant 0 : index
    %c0_16 = arith.constant 0 : index
    %c0_17 = arith.constant 0 : index
    %c0_18 = arith.constant 0 : index
    %37 = vector.load %arg5[%c0_15, %c0_16, %c0_17, %c0_18] : memref<2x4x16x64xbf16, #tpu.memory_space<vmem>>, vector<1x4x16x64xbf16>
    %38 = vector.shape_cast %37 : vector<1x4x16x64xbf16> to vector<4x16x64xbf16>
    %cst_19 = arith.constant 0.000000e+00 : f32
    %39 = vector.broadcast %cst_19 : f32 to vector<16x64xf32>
    %40 = vector.extract_strided_slice %34 {offsets = [0, 0], sizes = [16, 16], strides = [1, 1]} : vector<16x64xf32> to vector<16x16xf32>
    %41 = vector.shape_cast %40 : vector<16x16xf32> to vector<2x8x16xf32>
    %42 = vector.extract_strided_slice %35 {offsets = [0, 0], sizes = [16, 16], strides = [1, 1]} : vector<16x64xf32> to vector<16x16xf32>
    %43 = vector.shape_cast %42 : vector<16x16xf32> to vector<2x8x16xf32>
    %44 = vector.extract_strided_slice %36 {offsets = [0, 0], sizes = [16, 16], strides = [1, 1]} : vector<16x64xf32> to vector<16x16xf32>
    %45 = vector.shape_cast %44 : vector<16x16xf32> to vector<2x8x16xf32>
    "tpu.trace_start"() <{level = 10 : i32, message = "bqd,bkd->bqk"}> : () -> ()
    %cst_20 = arith.constant dense<0.000000e+00> : vector<2x8x8xf32>
    %46 = tpu.matmul %41, %43, %cst_20 {dimension_numbers = #tpu.dot_dimension_numbers<[2], [2], [1], [1], [0, 0, 0, 1, 1, 1], [0], [0]>} : vector<2x8x16xf32>, vector<2x8x16xf32>, vector<2x8x8xf32> -> vector<2x8x8xf32>
    %cst_21 = arith.constant -1.000000e+30 : f32
    "tpu.trace_stop"() : () -> ()
    %47 = vector.shape_cast %3 : vector<8x8xi1> to vector<1x8x8xi1>
    %48 = vector.broadcast %47 : vector<1x8x8xi1> to vector<2x8x8xi1>
    %49 = vector.broadcast %cst_21 : f32 to vector<2x8x8xf32>
    %50 = arith.select %48, %46, %49 : vector<2x8x8xi1>, vector<2x8x8xf32>
    %cst_22 = arith.constant dense<0xFF800000> : vector<2x8xf32>
    %51 = vector.multi_reduction <maximumf>, %50, %cst_22 [2] : vector<2x8x8xf32> to vector<2x8xf32>
    %52 = vector.shape_cast %51 : vector<2x8xf32> to vector<2x8x1xf32>
    %53 = vector.broadcast %52 : vector<2x8x1xf32> to vector<2x8x8xf32>
    %54 = arith.subf %50, %53 : vector<2x8x8xf32>
    %55 = math.exp %54 : vector<2x8x8xf32>
    %cst_23 = arith.constant dense<0.000000e+00> : vector<2x8xf32>
    %56 = vector.multi_reduction <add>, %55, %cst_23 [2] : vector<2x8x8xf32> to vector<2x8xf32>
    %57 = vector.shape_cast %56 : vector<2x8xf32> to vector<2x8x1xf32>
    %58 = tpu.reciprocal %57 {approx = true} : vector<2x8x1xf32> -> vector<2x8x1xf32>
    %59 = vector.broadcast %58 : vector<2x8x1xf32> to vector<2x8x8xf32>
    %60 = arith.mulf %55, %59 : vector<2x8x8xf32>
    %61 = arith.truncf %60 : vector<2x8x8xf32> to vector<2x8x8xbf16>
    %62 = arith.truncf %45 : vector<2x8x16xf32> to vector<2x8x16xbf16>
    "tpu.trace_start"() <{level = 10 : i32, message = "bqk,bkd->bqd"}> : () -> ()
    %cst_24 = arith.constant dense<0.000000e+00> : vector<2x8x16xf32>
    %63 = tpu.matmul %61, %62, %cst_24 {dimension_numbers = #tpu.dot_dimension_numbers<[2], [1], [1], [2], [0, 0, 0, 1, 1, 2], [0], [0]>} : vector<2x8x8xbf16>, vector<2x8x16xbf16>, vector<2x8x16xf32> -> vector<2x8x16xf32>
    "tpu.trace_stop"() : () -> ()
    %64 = vector.shape_cast %63 : vector<2x8x16xf32> to vector<16x16xf32>
    %65 = arith.truncf %64 : vector<16x16xf32> to vector<16x16xbf16>
    %66 = vector.extract_strided_slice %38 {offsets = [0, 0, 0], sizes = [1, 16, 64], strides = [1, 1, 1]} : vector<4x16x64xbf16> to vector<1x16x64xbf16>
    %67 = vector.shape_cast %66 : vector<1x16x64xbf16> to vector<16x64xbf16>
    %cst_25 = arith.constant dense<0.000000e+00> : vector<16x64xf32>
    %68 = tpu.matmul %65, %67, %cst_25 {dimension_numbers = #tpu.dot_dimension_numbers<[1], [0], [0], [1], [0, 0, 1, 1], [], []>} : vector<16x16xbf16>, vector<16x64xbf16>, vector<16x64xf32> -> vector<16x64xf32>
    %69 = arith.addf %39, %68 : vector<16x64xf32>
    %70 = vector.extract_strided_slice %34 {offsets = [0, 16], sizes = [16, 16], strides = [1, 1]} : vector<16x64xf32> to vector<16x16xf32>
    %71 = vector.shape_cast %70 : vector<16x16xf32> to vector<2x8x16xf32>
    %72 = vector.extract_strided_slice %35 {offsets = [0, 16], sizes = [16, 16], strides = [1, 1]} : vector<16x64xf32> to vector<16x16xf32>
    %73 = vector.shape_cast %72 : vector<16x16xf32> to vector<2x8x16xf32>
    %74 = vector.extract_strided_slice %36 {offsets = [0, 16], sizes = [16, 16], strides = [1, 1]} : vector<16x64xf32> to vector<16x16xf32>
    %75 = vector.shape_cast %74 : vector<16x16xf32> to vector<2x8x16xf32>
    "tpu.trace_start"() <{level = 10 : i32, message = "bqd,bkd->bqk"}> : () -> ()
    %cst_26 = arith.constant dense<0.000000e+00> : vector<2x8x8xf32>
    %76 = tpu.matmul %71, %73, %cst_26 {dimension_numbers = #tpu.dot_dimension_numbers<[2], [2], [1], [1], [0, 0, 0, 1, 1, 1], [0], [0]>} : vector<2x8x16xf32>, vector<2x8x16xf32>, vector<2x8x8xf32> -> vector<2x8x8xf32>
    %cst_27 = arith.constant -1.000000e+30 : f32
    "tpu.trace_stop"() : () -> ()
    %77 = vector.shape_cast %3 : vector<8x8xi1> to vector<1x8x8xi1>
    %78 = vector.broadcast %77 : vector<1x8x8xi1> to vector<2x8x8xi1>
    %79 = vector.broadcast %cst_27 : f32 to vector<2x8x8xf32>
    %80 = arith.select %78, %76, %79 : vector<2x8x8xi1>, vector<2x8x8xf32>
    %cst_28 = arith.constant dense<0xFF800000> : vector<2x8xf32>
    %81 = vector.multi_reduction <maximumf>, %80, %cst_28 [2] : vector<2x8x8xf32> to vector<2x8xf32>
    %82 = vector.shape_cast %81 : vector<2x8xf32> to vector<2x8x1xf32>
    %83 = vector.broadcast %82 : vector<2x8x1xf32> to vector<2x8x8xf32>
    %84 = arith.subf %80, %83 : vector<2x8x8xf32>
    %85 = math.exp %84 : vector<2x8x8xf32>
    %cst_29 = arith.constant dense<0.000000e+00> : vector<2x8xf32>
    %86 = vector.multi_reduction <add>, %85, %cst_29 [2] : vector<2x8x8xf32> to vector<2x8xf32>
    %87 = vector.shape_cast %86 : vector<2x8xf32> to vector<2x8x1xf32>
    %88 = tpu.reciprocal %87 {approx = true} : vector<2x8x1xf32> -> vector<2x8x1xf32>
    %89 = vector.broadcast %88 : vector<2x8x1xf32> to vector<2x8x8xf32>
    %90 = arith.mulf %85, %89 : vector<2x8x8xf32>
    %91 = arith.truncf %90 : vector<2x8x8xf32> to vector<2x8x8xbf16>
    %92 = arith.truncf %75 : vector<2x8x16xf32> to vector<2x8x16xbf16>
    "tpu.trace_start"() <{level = 10 : i32, message = "bqk,bkd->bqd"}> : () -> ()
    %cst_30 = arith.constant dense<0.000000e+00> : vector<2x8x16xf32>
    %93 = tpu.matmul %91, %92, %cst_30 {dimension_numbers = #tpu.dot_dimension_numbers<[2], [1], [1], [2], [0, 0, 0, 1, 1, 2], [0], [0]>} : vector<2x8x8xbf16>, vector<2x8x16xbf16>, vector<2x8x16xf32> -> vector<2x8x16xf32>
    "tpu.trace_stop"() : () -> ()
    %94 = vector.shape_cast %93 : vector<2x8x16xf32> to vector<16x16xf32>
    %95 = arith.truncf %94 : vector<16x16xf32> to vector<16x16xbf16>
    %96 = vector.extract_strided_slice %38 {offsets = [1, 0, 0], sizes = [1, 16, 64], strides = [1, 1, 1]} : vector<4x16x64xbf16> to vector<1x16x64xbf16>
    %97 = vector.shape_cast %96 : vector<1x16x64xbf16> to vector<16x64xbf16>
    %cst_31 = arith.constant dense<0.000000e+00> : vector<16x64xf32>
    %98 = tpu.matmul %95, %97, %cst_31 {dimension_numbers = #tpu.dot_dimension_numbers<[1], [0], [0], [1], [0, 0, 1, 1], [], []>} : vector<16x16xbf16>, vector<16x64xbf16>, vector<16x64xf32> -> vector<16x64xf32>
    %99 = arith.addf %69, %98 : vector<16x64xf32>
    %100 = vector.extract_strided_slice %34 {offsets = [0, 32], sizes = [16, 16], strides = [1, 1]} : vector<16x64xf32> to vector<16x16xf32>
    %101 = vector.shape_cast %100 : vector<16x16xf32> to vector<2x8x16xf32>
    %102 = vector.extract_strided_slice %35 {offsets = [0, 32], sizes = [16, 16], strides = [1, 1]} : vector<16x64xf32> to vector<16x16xf32>
    %103 = vector.shape_cast %102 : vector<16x16xf32> to vector<2x8x16xf32>
    %104 = vector.extract_strided_slice %36 {offsets = [0, 32], sizes = [16, 16], strides = [1, 1]} : vector<16x64xf32> to vector<16x16xf32>
    %105 = vector.shape_cast %104 : vector<16x16xf32> to vector<2x8x16xf32>
    "tpu.trace_start"() <{level = 10 : i32, message = "bqd,bkd->bqk"}> : () -> ()
    %cst_32 = arith.constant dense<0.000000e+00> : vector<2x8x8xf32>
    %106 = tpu.matmul %101, %103, %cst_32 {dimension_numbers = #tpu.dot_dimension_numbers<[2], [2], [1], [1], [0, 0, 0, 1, 1, 1], [0], [0]>} : vector<2x8x16xf32>, vector<2x8x16xf32>, vector<2x8x8xf32> -> vector<2x8x8xf32>
    %cst_33 = arith.constant -1.000000e+30 : f32
    "tpu.trace_stop"() : () -> ()
    %107 = vector.shape_cast %3 : vector<8x8xi1> to vector<1x8x8xi1>
    %108 = vector.broadcast %107 : vector<1x8x8xi1> to vector<2x8x8xi1>
    %109 = vector.broadcast %cst_33 : f32 to vector<2x8x8xf32>
    %110 = arith.select %108, %106, %109 : vector<2x8x8xi1>, vector<2x8x8xf32>
    %cst_34 = arith.constant dense<0xFF800000> : vector<2x8xf32>
    %111 = vector.multi_reduction <maximumf>, %110, %cst_34 [2] : vector<2x8x8xf32> to vector<2x8xf32>
    %112 = vector.shape_cast %111 : vector<2x8xf32> to vector<2x8x1xf32>
    %113 = vector.broadcast %112 : vector<2x8x1xf32> to vector<2x8x8xf32>
    %114 = arith.subf %110, %113 : vector<2x8x8xf32>
    %115 = math.exp %114 : vector<2x8x8xf32>
    %cst_35 = arith.constant dense<0.000000e+00> : vector<2x8xf32>
    %116 = vector.multi_reduction <add>, %115, %cst_35 [2] : vector<2x8x8xf32> to vector<2x8xf32>
    %117 = vector.shape_cast %116 : vector<2x8xf32> to vector<2x8x1xf32>
    %118 = tpu.reciprocal %117 {approx = true} : vector<2x8x1xf32> -> vector<2x8x1xf32>
    %119 = vector.broadcast %118 : vector<2x8x1xf32> to vector<2x8x8xf32>
    %120 = arith.mulf %115, %119 : vector<2x8x8xf32>
    %121 = arith.truncf %120 : vector<2x8x8xf32> to vector<2x8x8xbf16>
    %122 = arith.truncf %105 : vector<2x8x16xf32> to vector<2x8x16xbf16>
    "tpu.trace_start"() <{level = 10 : i32, message = "bqk,bkd->bqd"}> : () -> ()
    %cst_36 = arith.constant dense<0.000000e+00> : vector<2x8x16xf32>
    %123 = tpu.matmul %121, %122, %cst_36 {dimension_numbers = #tpu.dot_dimension_numbers<[2], [1], [1], [2], [0, 0, 0, 1, 1, 2], [0], [0]>} : vector<2x8x8xbf16>, vector<2x8x16xbf16>, vector<2x8x16xf32> -> vector<2x8x16xf32>
    "tpu.trace_stop"() : () -> ()
    %124 = vector.shape_cast %123 : vector<2x8x16xf32> to vector<16x16xf32>
    %125 = arith.truncf %124 : vector<16x16xf32> to vector<16x16xbf16>
    %126 = vector.extract_strided_slice %38 {offsets = [2, 0, 0], sizes = [1, 16, 64], strides = [1, 1, 1]} : vector<4x16x64xbf16> to vector<1x16x64xbf16>
    %127 = vector.shape_cast %126 : vector<1x16x64xbf16> to vector<16x64xbf16>
    %cst_37 = arith.constant dense<0.000000e+00> : vector<16x64xf32>
    %128 = tpu.matmul %125, %127, %cst_37 {dimension_numbers = #tpu.dot_dimension_numbers<[1], [0], [0], [1], [0, 0, 1, 1], [], []>} : vector<16x16xbf16>, vector<16x64xbf16>, vector<16x64xf32> -> vector<16x64xf32>
    %129 = arith.addf %99, %128 : vector<16x64xf32>
    %130 = vector.extract_strided_slice %34 {offsets = [0, 48], sizes = [16, 16], strides = [1, 1]} : vector<16x64xf32> to vector<16x16xf32>
    %131 = vector.shape_cast %130 : vector<16x16xf32> to vector<2x8x16xf32>
    %132 = vector.extract_strided_slice %35 {offsets = [0, 48], sizes = [16, 16], strides = [1, 1]} : vector<16x64xf32> to vector<16x16xf32>
    %133 = vector.shape_cast %132 : vector<16x16xf32> to vector<2x8x16xf32>
    %134 = vector.extract_strided_slice %36 {offsets = [0, 48], sizes = [16, 16], strides = [1, 1]} : vector<16x64xf32> to vector<16x16xf32>
    %135 = vector.shape_cast %134 : vector<16x16xf32> to vector<2x8x16xf32>
    "tpu.trace_start"() <{level = 10 : i32, message = "bqd,bkd->bqk"}> : () -> ()
    %cst_38 = arith.constant dense<0.000000e+00> : vector<2x8x8xf32>
    %136 = tpu.matmul %131, %133, %cst_38 {dimension_numbers = #tpu.dot_dimension_numbers<[2], [2], [1], [1], [0, 0, 0, 1, 1, 1], [0], [0]>} : vector<2x8x16xf32>, vector<2x8x16xf32>, vector<2x8x8xf32> -> vector<2x8x8xf32>
    %cst_39 = arith.constant -1.000000e+30 : f32
    "tpu.trace_stop"() : () -> ()
    %137 = vector.shape_cast %3 : vector<8x8xi1> to vector<1x8x8xi1>
    %138 = vector.broadcast %137 : vector<1x8x8xi1> to vector<2x8x8xi1>
    %139 = vector.broadcast %cst_39 : f32 to vector<2x8x8xf32>
    %140 = arith.select %138, %136, %139 : vector<2x8x8xi1>, vector<2x8x8xf32>
    %cst_40 = arith.constant dense<0xFF800000> : vector<2x8xf32>
    %141 = vector.multi_reduction <maximumf>, %140, %cst_40 [2] : vector<2x8x8xf32> to vector<2x8xf32>
    %142 = vector.shape_cast %141 : vector<2x8xf32> to vector<2x8x1xf32>
    %143 = vector.broadcast %142 : vector<2x8x1xf32> to vector<2x8x8xf32>
    %144 = arith.subf %140, %143 : vector<2x8x8xf32>
    %145 = math.exp %144 : vector<2x8x8xf32>
    %cst_41 = arith.constant dense<0.000000e+00> : vector<2x8xf32>
    %146 = vector.multi_reduction <add>, %145, %cst_41 [2] : vector<2x8x8xf32> to vector<2x8xf32>
    %147 = vector.shape_cast %146 : vector<2x8xf32> to vector<2x8x1xf32>
    %148 = tpu.reciprocal %147 {approx = true} : vector<2x8x1xf32> -> vector<2x8x1xf32>
    %149 = vector.broadcast %148 : vector<2x8x1xf32> to vector<2x8x8xf32>
    %150 = arith.mulf %145, %149 : vector<2x8x8xf32>
    %151 = arith.truncf %150 : vector<2x8x8xf32> to vector<2x8x8xbf16>
    %152 = arith.truncf %135 : vector<2x8x16xf32> to vector<2x8x16xbf16>
    "tpu.trace_start"() <{level = 10 : i32, message = "bqk,bkd->bqd"}> : () -> ()
    %cst_42 = arith.constant dense<0.000000e+00> : vector<2x8x16xf32>
    %153 = tpu.matmul %151, %152, %cst_42 {dimension_numbers = #tpu.dot_dimension_numbers<[2], [1], [1], [2], [0, 0, 0, 1, 1, 2], [0], [0]>} : vector<2x8x8xbf16>, vector<2x8x16xbf16>, vector<2x8x16xf32> -> vector<2x8x16xf32>
    "tpu.trace_stop"() : () -> ()
    %154 = vector.shape_cast %153 : vector<2x8x16xf32> to vector<16x16xf32>
    %155 = arith.truncf %154 : vector<16x16xf32> to vector<16x16xbf16>
    %156 = vector.extract_strided_slice %38 {offsets = [3, 0, 0], sizes = [1, 16, 64], strides = [1, 1, 1]} : vector<4x16x64xbf16> to vector<1x16x64xbf16>
    %157 = vector.shape_cast %156 : vector<1x16x64xbf16> to vector<16x64xbf16>
    %cst_43 = arith.constant dense<0.000000e+00> : vector<16x64xf32>
    %158 = tpu.matmul %155, %157, %cst_43 {dimension_numbers = #tpu.dot_dimension_numbers<[1], [0], [0], [1], [0, 0, 1, 1], [], []>} : vector<16x16xbf16>, vector<16x64xbf16>, vector<16x64xf32> -> vector<16x64xf32>
    %159 = arith.addf %129, %158 : vector<16x64xf32>
    %160 = arith.addf %0, %159 : vector<16x64xf32>
    %c0_44 = arith.constant 0 : index
    %c0_45 = arith.constant 0 : index
    %c0_46 = arith.constant 0 : index
    %161 = vector.load %arg6[%c0_44, %c0_45, %c0_46] : memref<2x1x64xf32, #tpu.memory_space<vmem>>, vector<1x1x64xf32>
    %162 = vector.shape_cast %161 : vector<1x1x64xf32> to vector<1x64xf32>
    %163 = vector.broadcast %162 : vector<1x64xf32> to vector<16x64xf32>
    %164 = arith.addf %160, %163 : vector<16x64xf32>
    %c0_47 = arith.constant 0 : index
    %c0_48 = arith.constant 0 : index
    %c0_49 = arith.constant 0 : index
    %165 = vector.load %arg7[%c0_47, %c0_48, %c0_49] : memref<2x1x64xf32, #tpu.memory_space<vmem>>, vector<1x1x64xf32>
    %166 = vector.shape_cast %165 : vector<1x1x64xf32> to vector<1x64xf32>
    %c0_50 = arith.constant 0 : index
    %c0_51 = arith.constant 0 : index
    %c0_52 = arith.constant 0 : index
    %167 = vector.load %arg8[%c0_50, %c0_51, %c0_52] : memref<2x1x64xf32, #tpu.memory_space<vmem>>, vector<1x1x64xf32>
    %168 = vector.shape_cast %167 : vector<1x1x64xf32> to vector<1x64xf32>
    %cst_53 = arith.constant dense<0.000000e+00> : vector<16xf32>
    %169 = vector.multi_reduction <add>, %164, %cst_53 [1] : vector<16x64xf32> to vector<16xf32>
    %170 = vector.shape_cast %169 : vector<16xf32> to vector<16x1xf32>
    %cst_54 = arith.constant 6.400000e+01 : f32
    %171 = vector.broadcast %cst_54 : f32 to vector<16x1xf32>
    %172 = arith.divf %170, %171 : vector<16x1xf32>
    %173 = vector.broadcast %172 : vector<16x1xf32> to vector<16x64xf32>
    %174 = arith.subf %164, %173 : vector<16x64xf32>
    %175 = arith.mulf %174, %174 : vector<16x64xf32>
    %cst_55 = arith.constant dense<0.000000e+00> : vector<16xf32>
    %176 = vector.multi_reduction <add>, %175, %cst_55 [1] : vector<16x64xf32> to vector<16xf32>
    %177 = vector.shape_cast %176 : vector<16xf32> to vector<16x1xf32>
    %cst_56 = arith.constant 6.400000e+01 : f32
    %178 = vector.broadcast %cst_56 : f32 to vector<16x1xf32>
    %179 = arith.divf %177, %178 : vector<16x1xf32>
    %180 = vector.broadcast %172 : vector<16x1xf32> to vector<16x64xf32>
    %181 = arith.subf %164, %180 : vector<16x64xf32>
    %cst_57 = arith.constant 9.99999974E-6 : f32
    %182 = vector.broadcast %cst_57 : f32 to vector<16x1xf32>
    %183 = arith.addf %179, %182 : vector<16x1xf32>
    %184 = math.rsqrt %183 : vector<16x1xf32>
    %185 = vector.broadcast %184 : vector<16x1xf32> to vector<16x64xf32>
    %186 = arith.mulf %181, %185 : vector<16x64xf32>
    %187 = vector.broadcast %166 : vector<1x64xf32> to vector<16x64xf32>
    %188 = arith.mulf %186, %187 : vector<16x64xf32>
    %189 = vector.broadcast %168 : vector<1x64xf32> to vector<16x64xf32>
    %190 = arith.addf %188, %189 : vector<16x64xf32>
    %191 = arith.truncf %190 : vector<16x64xf32> to vector<16x64xbf16>
    %c0_58 = arith.constant 0 : index
    %c0_59 = arith.constant 0 : index
    %c0_60 = arith.constant 0 : index
    %192 = vector.load %arg9[%c0_58, %c0_59, %c0_60] : memref<2x64x256xbf16, #tpu.memory_space<vmem>>, vector<1x64x256xbf16>
    %193 = vector.shape_cast %192 : vector<1x64x256xbf16> to vector<64x256xbf16>
    %cst_61 = arith.constant dense<0.000000e+00> : vector<16x256xf32>
    %194 = tpu.matmul %191, %193, %cst_61 {dimension_numbers = #tpu.dot_dimension_numbers<[1], [0], [0], [1], [0, 0, 1, 1], [], []>} : vector<16x64xbf16>, vector<64x256xbf16>, vector<16x256xf32> -> vector<16x256xf32>
    %c0_62 = arith.constant 0 : index
    %c0_63 = arith.constant 0 : index
    %c0_64 = arith.constant 0 : index
    %195 = vector.load %arg10[%c0_62, %c0_63, %c0_64] : memref<2x1x256xf32, #tpu.memory_space<vmem>>, vector<1x1x256xf32>
    %196 = vector.shape_cast %195 : vector<1x1x256xf32> to vector<1x256xf32>
    %197 = vector.broadcast %196 : vector<1x256xf32> to vector<16x256xf32>
    %198 = arith.addf %194, %197 : vector<16x256xf32>
    %cst_65 = arith.constant 0.000000e+00 : f32
    %199 = vector.broadcast %cst_65 : f32 to vector<16x256xf32>
    %200 = arith.maximumf %198, %199 : vector<16x256xf32>
    %201 = arith.truncf %200 : vector<16x256xf32> to vector<16x256xbf16>
    %c0_66 = arith.constant 0 : index
    %c0_67 = arith.constant 0 : index
    %c0_68 = arith.constant 0 : index
    %202 = vector.load %arg11[%c0_66, %c0_67, %c0_68] : memref<2x256x64xbf16, #tpu.memory_space<vmem>>, vector<1x256x64xbf16>
    %203 = vector.shape_cast %202 : vector<1x256x64xbf16> to vector<256x64xbf16>
    %cst_69 = arith.constant dense<0.000000e+00> : vector<16x64xf32>
    %204 = tpu.matmul %201, %203, %cst_69 {dimension_numbers = #tpu.dot_dimension_numbers<[1], [0], [0], [1], [0, 0, 1, 1], [], []>} : vector<16x256xbf16>, vector<256x64xbf16>, vector<16x64xf32> -> vector<16x64xf32>
    %c0_70 = arith.constant 0 : index
    %c0_71 = arith.constant 0 : index
    %c0_72 = arith.constant 0 : index
    %205 = vector.load %arg12[%c0_70, %c0_71, %c0_72] : memref<2x1x64xf32, #tpu.memory_space<vmem>>, vector<1x1x64xf32>
    %206 = vector.shape_cast %205 : vector<1x1x64xf32> to vector<1x64xf32>
    %207 = vector.broadcast %206 : vector<1x64xf32> to vector<16x64xf32>
    %208 = arith.addf %204, %207 : vector<16x64xf32>
    %209 = arith.addf %164, %208 : vector<16x64xf32>
    %c1 = arith.constant 1 : index
    %c0_73 = arith.constant 0 : index
    %c0_74 = arith.constant 0 : index
    %210 = vector.load %arg2[%c1, %c0_73, %c0_74] : memref<2x1x64xf32, #tpu.memory_space<vmem>>, vector<1x1x64xf32>
    %211 = vector.shape_cast %210 : vector<1x1x64xf32> to vector<1x64xf32>
    %c1_75 = arith.constant 1 : index
    %c0_76 = arith.constant 0 : index
    %c0_77 = arith.constant 0 : index
    %212 = vector.load %arg3[%c1_75, %c0_76, %c0_77] : memref<2x1x64xf32, #tpu.memory_space<vmem>>, vector<1x1x64xf32>
    %213 = vector.shape_cast %212 : vector<1x1x64xf32> to vector<1x64xf32>
    %cst_78 = arith.constant dense<0.000000e+00> : vector<16xf32>
    %214 = vector.multi_reduction <add>, %209, %cst_78 [1] : vector<16x64xf32> to vector<16xf32>
    %215 = vector.shape_cast %214 : vector<16xf32> to vector<16x1xf32>
    %cst_79 = arith.constant 6.400000e+01 : f32
    %216 = vector.broadcast %cst_79 : f32 to vector<16x1xf32>
    %217 = arith.divf %215, %216 : vector<16x1xf32>
    %218 = vector.broadcast %217 : vector<16x1xf32> to vector<16x64xf32>
    %219 = arith.subf %209, %218 : vector<16x64xf32>
    %220 = arith.mulf %219, %219 : vector<16x64xf32>
    %cst_80 = arith.constant dense<0.000000e+00> : vector<16xf32>
    %221 = vector.multi_reduction <add>, %220, %cst_80 [1] : vector<16x64xf32> to vector<16xf32>
    %222 = vector.shape_cast %221 : vector<16xf32> to vector<16x1xf32>
    %cst_81 = arith.constant 6.400000e+01 : f32
    %223 = vector.broadcast %cst_81 : f32 to vector<16x1xf32>
    %224 = arith.divf %222, %223 : vector<16x1xf32>
    %225 = vector.broadcast %217 : vector<16x1xf32> to vector<16x64xf32>
    %226 = arith.subf %209, %225 : vector<16x64xf32>
    %cst_82 = arith.constant 9.99999974E-6 : f32
    %227 = vector.broadcast %cst_82 : f32 to vector<16x1xf32>
    %228 = arith.addf %224, %227 : vector<16x1xf32>
    %229 = math.rsqrt %228 : vector<16x1xf32>
    %230 = vector.broadcast %229 : vector<16x1xf32> to vector<16x64xf32>
    %231 = arith.mulf %226, %230 : vector<16x64xf32>
    %232 = vector.broadcast %211 : vector<1x64xf32> to vector<16x64xf32>
    %233 = arith.mulf %231, %232 : vector<16x64xf32>
    %234 = vector.broadcast %213 : vector<1x64xf32> to vector<16x64xf32>
    %235 = arith.addf %233, %234 : vector<16x64xf32>
    %236 = arith.truncf %235 : vector<16x64xf32> to vector<16x64xbf16>
    %c1_83 = arith.constant 1 : index
    %c0_84 = arith.constant 0 : index
    %c0_85 = arith.constant 0 : index
    %237 = vector.load %arg4[%c1_83, %c0_84, %c0_85] : memref<2x64x192xbf16, #tpu.memory_space<vmem>>, vector<1x64x192xbf16>
    %238 = vector.shape_cast %237 : vector<1x64x192xbf16> to vector<64x192xbf16>
    %cst_86 = arith.constant dense<0.000000e+00> : vector<16x192xf32>
    %239 = tpu.matmul %236, %238, %cst_86 {dimension_numbers = #tpu.dot_dimension_numbers<[1], [0], [0], [1], [0, 0, 1, 1], [], []>} : vector<16x64xbf16>, vector<64x192xbf16>, vector<16x192xf32> -> vector<16x192xf32>
    %240 = vector.extract_strided_slice %239 {offsets = [0, 0], sizes = [16, 64], strides = [1, 1]} : vector<16x192xf32> to vector<16x64xf32>
    %241 = vector.extract_strided_slice %239 {offsets = [0, 64], sizes = [16, 64], strides = [1, 1]} : vector<16x192xf32> to vector<16x64xf32>
    %242 = vector.extract_strided_slice %239 {offsets = [0, 128], sizes = [16, 64], strides = [1, 1]} : vector<16x192xf32> to vector<16x64xf32>
    %c1_87 = arith.constant 1 : index
    %c0_88 = arith.constant 0 : index
    %c0_89 = arith.constant 0 : index
    %c0_90 = arith.constant 0 : index
    %243 = vector.load %arg5[%c1_87, %c0_88, %c0_89, %c0_90] : memref<2x4x16x64xbf16, #tpu.memory_space<vmem>>, vector<1x4x16x64xbf16>
    %244 = vector.shape_cast %243 : vector<1x4x16x64xbf16> to vector<4x16x64xbf16>
    %cst_91 = arith.constant 0.000000e+00 : f32
    %245 = vector.broadcast %cst_91 : f32 to vector<16x64xf32>
    %246 = vector.extract_strided_slice %240 {offsets = [0, 0], sizes = [16, 16], strides = [1, 1]} : vector<16x64xf32> to vector<16x16xf32>
    %247 = vector.shape_cast %246 : vector<16x16xf32> to vector<2x8x16xf32>
    %248 = vector.extract_strided_slice %241 {offsets = [0, 0], sizes = [16, 16], strides = [1, 1]} : vector<16x64xf32> to vector<16x16xf32>
    %249 = vector.shape_cast %248 : vector<16x16xf32> to vector<2x8x16xf32>
    %250 = vector.extract_strided_slice %242 {offsets = [0, 0], sizes = [16, 16], strides = [1, 1]} : vector<16x64xf32> to vector<16x16xf32>
    %251 = vector.shape_cast %250 : vector<16x16xf32> to vector<2x8x16xf32>
    "tpu.trace_start"() <{level = 10 : i32, message = "bqd,bkd->bqk"}> : () -> ()
    %cst_92 = arith.constant dense<0.000000e+00> : vector<2x8x8xf32>
    %252 = tpu.matmul %247, %249, %cst_92 {dimension_numbers = #tpu.dot_dimension_numbers<[2], [2], [1], [1], [0, 0, 0, 1, 1, 1], [0], [0]>} : vector<2x8x16xf32>, vector<2x8x16xf32>, vector<2x8x8xf32> -> vector<2x8x8xf32>
    %cst_93 = arith.constant -1.000000e+30 : f32
    "tpu.trace_stop"() : () -> ()
    %253 = vector.shape_cast %3 : vector<8x8xi1> to vector<1x8x8xi1>
    %254 = vector.broadcast %253 : vector<1x8x8xi1> to vector<2x8x8xi1>
    %255 = vector.broadcast %cst_93 : f32 to vector<2x8x8xf32>
    %256 = arith.select %254, %252, %255 : vector<2x8x8xi1>, vector<2x8x8xf32>
    %cst_94 = arith.constant dense<0xFF800000> : vector<2x8xf32>
    %257 = vector.multi_reduction <maximumf>, %256, %cst_94 [2] : vector<2x8x8xf32> to vector<2x8xf32>
    %258 = vector.shape_cast %257 : vector<2x8xf32> to vector<2x8x1xf32>
    %259 = vector.broadcast %258 : vector<2x8x1xf32> to vector<2x8x8xf32>
    %260 = arith.subf %256, %259 : vector<2x8x8xf32>
    %261 = math.exp %260 : vector<2x8x8xf32>
    %cst_95 = arith.constant dense<0.000000e+00> : vector<2x8xf32>
    %262 = vector.multi_reduction <add>, %261, %cst_95 [2] : vector<2x8x8xf32> to vector<2x8xf32>
    %263 = vector.shape_cast %262 : vector<2x8xf32> to vector<2x8x1xf32>
    %264 = tpu.reciprocal %263 {approx = true} : vector<2x8x1xf32> -> vector<2x8x1xf32>
    %265 = vector.broadcast %264 : vector<2x8x1xf32> to vector<2x8x8xf32>
    %266 = arith.mulf %261, %265 : vector<2x8x8xf32>
    %267 = arith.truncf %266 : vector<2x8x8xf32> to vector<2x8x8xbf16>
    %268 = arith.truncf %251 : vector<2x8x16xf32> to vector<2x8x16xbf16>
    "tpu.trace_start"() <{level = 10 : i32, message = "bqk,bkd->bqd"}> : () -> ()
    %cst_96 = arith.constant dense<0.000000e+00> : vector<2x8x16xf32>
    %269 = tpu.matmul %267, %268, %cst_96 {dimension_numbers = #tpu.dot_dimension_numbers<[2], [1], [1], [2], [0, 0, 0, 1, 1, 2], [0], [0]>} : vector<2x8x8xbf16>, vector<2x8x16xbf16>, vector<2x8x16xf32> -> vector<2x8x16xf32>
    "tpu.trace_stop"() : () -> ()
    %270 = vector.shape_cast %269 : vector<2x8x16xf32> to vector<16x16xf32>
    %271 = arith.truncf %270 : vector<16x16xf32> to vector<16x16xbf16>
    %272 = vector.extract_strided_slice %244 {offsets = [0, 0, 0], sizes = [1, 16, 64], strides = [1, 1, 1]} : vector<4x16x64xbf16> to vector<1x16x64xbf16>
    %273 = vector.shape_cast %272 : vector<1x16x64xbf16> to vector<16x64xbf16>
    %cst_97 = arith.constant dense<0.000000e+00> : vector<16x64xf32>
    %274 = tpu.matmul %271, %273, %cst_97 {dimension_numbers = #tpu.dot_dimension_numbers<[1], [0], [0], [1], [0, 0, 1, 1], [], []>} : vector<16x16xbf16>, vector<16x64xbf16>, vector<16x64xf32> -> vector<16x64xf32>
    %275 = arith.addf %245, %274 : vector<16x64xf32>
    %276 = vector.extract_strided_slice %240 {offsets = [0, 16], sizes = [16, 16], strides = [1, 1]} : vector<16x64xf32> to vector<16x16xf32>
    %277 = vector.shape_cast %276 : vector<16x16xf32> to vector<2x8x16xf32>
    %278 = vector.extract_strided_slice %241 {offsets = [0, 16], sizes = [16, 16], strides = [1, 1]} : vector<16x64xf32> to vector<16x16xf32>
    %279 = vector.shape_cast %278 : vector<16x16xf32> to vector<2x8x16xf32>
    %280 = vector.extract_strided_slice %242 {offsets = [0, 16], sizes = [16, 16], strides = [1, 1]} : vector<16x64xf32> to vector<16x16xf32>
    %281 = vector.shape_cast %280 : vector<16x16xf32> to vector<2x8x16xf32>
    "tpu.trace_start"() <{level = 10 : i32, message = "bqd,bkd->bqk"}> : () -> ()
    %cst_98 = arith.constant dense<0.000000e+00> : vector<2x8x8xf32>
    %282 = tpu.matmul %277, %279, %cst_98 {dimension_numbers = #tpu.dot_dimension_numbers<[2], [2], [1], [1], [0, 0, 0, 1, 1, 1], [0], [0]>} : vector<2x8x16xf32>, vector<2x8x16xf32>, vector<2x8x8xf32> -> vector<2x8x8xf32>
    %cst_99 = arith.constant -1.000000e+30 : f32
    "tpu.trace_stop"() : () -> ()
    %283 = vector.shape_cast %3 : vector<8x8xi1> to vector<1x8x8xi1>
    %284 = vector.broadcast %283 : vector<1x8x8xi1> to vector<2x8x8xi1>
    %285 = vector.broadcast %cst_99 : f32 to vector<2x8x8xf32>
    %286 = arith.select %284, %282, %285 : vector<2x8x8xi1>, vector<2x8x8xf32>
    %cst_100 = arith.constant dense<0xFF800000> : vector<2x8xf32>
    %287 = vector.multi_reduction <maximumf>, %286, %cst_100 [2] : vector<2x8x8xf32> to vector<2x8xf32>
    %288 = vector.shape_cast %287 : vector<2x8xf32> to vector<2x8x1xf32>
    %289 = vector.broadcast %288 : vector<2x8x1xf32> to vector<2x8x8xf32>
    %290 = arith.subf %286, %289 : vector<2x8x8xf32>
    %291 = math.exp %290 : vector<2x8x8xf32>
    %cst_101 = arith.constant dense<0.000000e+00> : vector<2x8xf32>
    %292 = vector.multi_reduction <add>, %291, %cst_101 [2] : vector<2x8x8xf32> to vector<2x8xf32>
    %293 = vector.shape_cast %292 : vector<2x8xf32> to vector<2x8x1xf32>
    %294 = tpu.reciprocal %293 {approx = true} : vector<2x8x1xf32> -> vector<2x8x1xf32>
    %295 = vector.broadcast %294 : vector<2x8x1xf32> to vector<2x8x8xf32>
    %296 = arith.mulf %291, %295 : vector<2x8x8xf32>
    %297 = arith.truncf %296 : vector<2x8x8xf32> to vector<2x8x8xbf16>
    %298 = arith.truncf %281 : vector<2x8x16xf32> to vector<2x8x16xbf16>
    "tpu.trace_start"() <{level = 10 : i32, message = "bqk,bkd->bqd"}> : () -> ()
    %cst_102 = arith.constant dense<0.000000e+00> : vector<2x8x16xf32>
    %299 = tpu.matmul %297, %298, %cst_102 {dimension_numbers = #tpu.dot_dimension_numbers<[2], [1], [1], [2], [0, 0, 0, 1, 1, 2], [0], [0]>} : vector<2x8x8xbf16>, vector<2x8x16xbf16>, vector<2x8x16xf32> -> vector<2x8x16xf32>
    "tpu.trace_stop"() : () -> ()
    %300 = vector.shape_cast %299 : vector<2x8x16xf32> to vector<16x16xf32>
    %301 = arith.truncf %300 : vector<16x16xf32> to vector<16x16xbf16>
    %302 = vector.extract_strided_slice %244 {offsets = [1, 0, 0], sizes = [1, 16, 64], strides = [1, 1, 1]} : vector<4x16x64xbf16> to vector<1x16x64xbf16>
    %303 = vector.shape_cast %302 : vector<1x16x64xbf16> to vector<16x64xbf16>
    %cst_103 = arith.constant dense<0.000000e+00> : vector<16x64xf32>
    %304 = tpu.matmul %301, %303, %cst_103 {dimension_numbers = #tpu.dot_dimension_numbers<[1], [0], [0], [1], [0, 0, 1, 1], [], []>} : vector<16x16xbf16>, vector<16x64xbf16>, vector<16x64xf32> -> vector<16x64xf32>
    %305 = arith.addf %275, %304 : vector<16x64xf32>
    %306 = vector.extract_strided_slice %240 {offsets = [0, 32], sizes = [16, 16], strides = [1, 1]} : vector<16x64xf32> to vector<16x16xf32>
    %307 = vector.shape_cast %306 : vector<16x16xf32> to vector<2x8x16xf32>
    %308 = vector.extract_strided_slice %241 {offsets = [0, 32], sizes = [16, 16], strides = [1, 1]} : vector<16x64xf32> to vector<16x16xf32>
    %309 = vector.shape_cast %308 : vector<16x16xf32> to vector<2x8x16xf32>
    %310 = vector.extract_strided_slice %242 {offsets = [0, 32], sizes = [16, 16], strides = [1, 1]} : vector<16x64xf32> to vector<16x16xf32>
    %311 = vector.shape_cast %310 : vector<16x16xf32> to vector<2x8x16xf32>
    "tpu.trace_start"() <{level = 10 : i32, message = "bqd,bkd->bqk"}> : () -> ()
    %cst_104 = arith.constant dense<0.000000e+00> : vector<2x8x8xf32>
    %312 = tpu.matmul %307, %309, %cst_104 {dimension_numbers = #tpu.dot_dimension_numbers<[2], [2], [1], [1], [0, 0, 0, 1, 1, 1], [0], [0]>} : vector<2x8x16xf32>, vector<2x8x16xf32>, vector<2x8x8xf32> -> vector<2x8x8xf32>
    %cst_105 = arith.constant -1.000000e+30 : f32
    "tpu.trace_stop"() : () -> ()
    %313 = vector.shape_cast %3 : vector<8x8xi1> to vector<1x8x8xi1>
    %314 = vector.broadcast %313 : vector<1x8x8xi1> to vector<2x8x8xi1>
    %315 = vector.broadcast %cst_105 : f32 to vector<2x8x8xf32>
    %316 = arith.select %314, %312, %315 : vector<2x8x8xi1>, vector<2x8x8xf32>
    %cst_106 = arith.constant dense<0xFF800000> : vector<2x8xf32>
    %317 = vector.multi_reduction <maximumf>, %316, %cst_106 [2] : vector<2x8x8xf32> to vector<2x8xf32>
    %318 = vector.shape_cast %317 : vector<2x8xf32> to vector<2x8x1xf32>
    %319 = vector.broadcast %318 : vector<2x8x1xf32> to vector<2x8x8xf32>
    %320 = arith.subf %316, %319 : vector<2x8x8xf32>
    %321 = math.exp %320 : vector<2x8x8xf32>
    %cst_107 = arith.constant dense<0.000000e+00> : vector<2x8xf32>
    %322 = vector.multi_reduction <add>, %321, %cst_107 [2] : vector<2x8x8xf32> to vector<2x8xf32>
    %323 = vector.shape_cast %322 : vector<2x8xf32> to vector<2x8x1xf32>
    %324 = tpu.reciprocal %323 {approx = true} : vector<2x8x1xf32> -> vector<2x8x1xf32>
    %325 = vector.broadcast %324 : vector<2x8x1xf32> to vector<2x8x8xf32>
    %326 = arith.mulf %321, %325 : vector<2x8x8xf32>
    %327 = arith.truncf %326 : vector<2x8x8xf32> to vector<2x8x8xbf16>
    %328 = arith.truncf %311 : vector<2x8x16xf32> to vector<2x8x16xbf16>
    "tpu.trace_start"() <{level = 10 : i32, message = "bqk,bkd->bqd"}> : () -> ()
    %cst_108 = arith.constant dense<0.000000e+00> : vector<2x8x16xf32>
    %329 = tpu.matmul %327, %328, %cst_108 {dimension_numbers = #tpu.dot_dimension_numbers<[2], [1], [1], [2], [0, 0, 0, 1, 1, 2], [0], [0]>} : vector<2x8x8xbf16>, vector<2x8x16xbf16>, vector<2x8x16xf32> -> vector<2x8x16xf32>
    "tpu.trace_stop"() : () -> ()
    %330 = vector.shape_cast %329 : vector<2x8x16xf32> to vector<16x16xf32>
    %331 = arith.truncf %330 : vector<16x16xf32> to vector<16x16xbf16>
    %332 = vector.extract_strided_slice %244 {offsets = [2, 0, 0], sizes = [1, 16, 64], strides = [1, 1, 1]} : vector<4x16x64xbf16> to vector<1x16x64xbf16>
    %333 = vector.shape_cast %332 : vector<1x16x64xbf16> to vector<16x64xbf16>
    %cst_109 = arith.constant dense<0.000000e+00> : vector<16x64xf32>
    %334 = tpu.matmul %331, %333, %cst_109 {dimension_numbers = #tpu.dot_dimension_numbers<[1], [0], [0], [1], [0, 0, 1, 1], [], []>} : vector<16x16xbf16>, vector<16x64xbf16>, vector<16x64xf32> -> vector<16x64xf32>
    %335 = arith.addf %305, %334 : vector<16x64xf32>
    %336 = vector.extract_strided_slice %240 {offsets = [0, 48], sizes = [16, 16], strides = [1, 1]} : vector<16x64xf32> to vector<16x16xf32>
    %337 = vector.shape_cast %336 : vector<16x16xf32> to vector<2x8x16xf32>
    %338 = vector.extract_strided_slice %241 {offsets = [0, 48], sizes = [16, 16], strides = [1, 1]} : vector<16x64xf32> to vector<16x16xf32>
    %339 = vector.shape_cast %338 : vector<16x16xf32> to vector<2x8x16xf32>
    %340 = vector.extract_strided_slice %242 {offsets = [0, 48], sizes = [16, 16], strides = [1, 1]} : vector<16x64xf32> to vector<16x16xf32>
    %341 = vector.shape_cast %340 : vector<16x16xf32> to vector<2x8x16xf32>
    "tpu.trace_start"() <{level = 10 : i32, message = "bqd,bkd->bqk"}> : () -> ()
    %cst_110 = arith.constant dense<0.000000e+00> : vector<2x8x8xf32>
    %342 = tpu.matmul %337, %339, %cst_110 {dimension_numbers = #tpu.dot_dimension_numbers<[2], [2], [1], [1], [0, 0, 0, 1, 1, 1], [0], [0]>} : vector<2x8x16xf32>, vector<2x8x16xf32>, vector<2x8x8xf32> -> vector<2x8x8xf32>
    %cst_111 = arith.constant -1.000000e+30 : f32
    "tpu.trace_stop"() : () -> ()
    %343 = vector.shape_cast %3 : vector<8x8xi1> to vector<1x8x8xi1>
    %344 = vector.broadcast %343 : vector<1x8x8xi1> to vector<2x8x8xi1>
    %345 = vector.broadcast %cst_111 : f32 to vector<2x8x8xf32>
    %346 = arith.select %344, %342, %345 : vector<2x8x8xi1>, vector<2x8x8xf32>
    %cst_112 = arith.constant dense<0xFF800000> : vector<2x8xf32>
    %347 = vector.multi_reduction <maximumf>, %346, %cst_112 [2] : vector<2x8x8xf32> to vector<2x8xf32>
    %348 = vector.shape_cast %347 : vector<2x8xf32> to vector<2x8x1xf32>
    %349 = vector.broadcast %348 : vector<2x8x1xf32> to vector<2x8x8xf32>
    %350 = arith.subf %346, %349 : vector<2x8x8xf32>
    %351 = math.exp %350 : vector<2x8x8xf32>
    %cst_113 = arith.constant dense<0.000000e+00> : vector<2x8xf32>
    %352 = vector.multi_reduction <add>, %351, %cst_113 [2] : vector<2x8x8xf32> to vector<2x8xf32>
    %353 = vector.shape_cast %352 : vector<2x8xf32> to vector<2x8x1xf32>
    %354 = tpu.reciprocal %353 {approx = true} : vector<2x8x1xf32> -> vector<2x8x1xf32>
    %355 = vector.broadcast %354 : vector<2x8x1xf32> to vector<2x8x8xf32>
    %356 = arith.mulf %351, %355 : vector<2x8x8xf32>
    %357 = arith.truncf %356 : vector<2x8x8xf32> to vector<2x8x8xbf16>
    %358 = arith.truncf %341 : vector<2x8x16xf32> to vector<2x8x16xbf16>
    "tpu.trace_start"() <{level = 10 : i32, message = "bqk,bkd->bqd"}> : () -> ()
    %cst_114 = arith.constant dense<0.000000e+00> : vector<2x8x16xf32>
    %359 = tpu.matmul %357, %358, %cst_114 {dimension_numbers = #tpu.dot_dimension_numbers<[2], [1], [1], [2], [0, 0, 0, 1, 1, 2], [0], [0]>} : vector<2x8x8xbf16>, vector<2x8x16xbf16>, vector<2x8x16xf32> -> vector<2x8x16xf32>
    "tpu.trace_stop"() : () -> ()
    %360 = vector.shape_cast %359 : vector<2x8x16xf32> to vector<16x16xf32>
    %361 = arith.truncf %360 : vector<16x16xf32> to vector<16x16xbf16>
    %362 = vector.extract_strided_slice %244 {offsets = [3, 0, 0], sizes = [1, 16, 64], strides = [1, 1, 1]} : vector<4x16x64xbf16> to vector<1x16x64xbf16>
    %363 = vector.shape_cast %362 : vector<1x16x64xbf16> to vector<16x64xbf16>
    %cst_115 = arith.constant dense<0.000000e+00> : vector<16x64xf32>
    %364 = tpu.matmul %361, %363, %cst_115 {dimension_numbers = #tpu.dot_dimension_numbers<[1], [0], [0], [1], [0, 0, 1, 1], [], []>} : vector<16x16xbf16>, vector<16x64xbf16>, vector<16x64xf32> -> vector<16x64xf32>
    %365 = arith.addf %335, %364 : vector<16x64xf32>
    %366 = arith.addf %209, %365 : vector<16x64xf32>
    %c1_116 = arith.constant 1 : index
    %c0_117 = arith.constant 0 : index
    %c0_118 = arith.constant 0 : index
    %367 = vector.load %arg6[%c1_116, %c0_117, %c0_118] : memref<2x1x64xf32, #tpu.memory_space<vmem>>, vector<1x1x64xf32>
    %368 = vector.shape_cast %367 : vector<1x1x64xf32> to vector<1x64xf32>
    %369 = vector.broadcast %368 : vector<1x64xf32> to vector<16x64xf32>
    %370 = arith.addf %366, %369 : vector<16x64xf32>
    %c1_119 = arith.constant 1 : index
    %c0_120 = arith.constant 0 : index
    %c0_121 = arith.constant 0 : index
    %371 = vector.load %arg7[%c1_119, %c0_120, %c0_121] : memref<2x1x64xf32, #tpu.memory_space<vmem>>, vector<1x1x64xf32>
    %372 = vector.shape_cast %371 : vector<1x1x64xf32> to vector<1x64xf32>
    %c1_122 = arith.constant 1 : index
    %c0_123 = arith.constant 0 : index
    %c0_124 = arith.constant 0 : index
    %373 = vector.load %arg8[%c1_122, %c0_123, %c0_124] : memref<2x1x64xf32, #tpu.memory_space<vmem>>, vector<1x1x64xf32>
    %374 = vector.shape_cast %373 : vector<1x1x64xf32> to vector<1x64xf32>
    %cst_125 = arith.constant dense<0.000000e+00> : vector<16xf32>
    %375 = vector.multi_reduction <add>, %370, %cst_125 [1] : vector<16x64xf32> to vector<16xf32>
    %376 = vector.shape_cast %375 : vector<16xf32> to vector<16x1xf32>
    %cst_126 = arith.constant 6.400000e+01 : f32
    %377 = vector.broadcast %cst_126 : f32 to vector<16x1xf32>
    %378 = arith.divf %376, %377 : vector<16x1xf32>
    %379 = vector.broadcast %378 : vector<16x1xf32> to vector<16x64xf32>
    %380 = arith.subf %370, %379 : vector<16x64xf32>
    %381 = arith.mulf %380, %380 : vector<16x64xf32>
    %cst_127 = arith.constant dense<0.000000e+00> : vector<16xf32>
    %382 = vector.multi_reduction <add>, %381, %cst_127 [1] : vector<16x64xf32> to vector<16xf32>
    %383 = vector.shape_cast %382 : vector<16xf32> to vector<16x1xf32>
    %cst_128 = arith.constant 6.400000e+01 : f32
    %384 = vector.broadcast %cst_128 : f32 to vector<16x1xf32>
    %385 = arith.divf %383, %384 : vector<16x1xf32>
    %386 = vector.broadcast %378 : vector<16x1xf32> to vector<16x64xf32>
    %387 = arith.subf %370, %386 : vector<16x64xf32>
    %cst_129 = arith.constant 9.99999974E-6 : f32
    %388 = vector.broadcast %cst_129 : f32 to vector<16x1xf32>
    %389 = arith.addf %385, %388 : vector<16x1xf32>
    %390 = math.rsqrt %389 : vector<16x1xf32>
    %391 = vector.broadcast %390 : vector<16x1xf32> to vector<16x64xf32>
    %392 = arith.mulf %387, %391 : vector<16x64xf32>
    %393 = vector.broadcast %372 : vector<1x64xf32> to vector<16x64xf32>
    %394 = arith.mulf %392, %393 : vector<16x64xf32>
    %395 = vector.broadcast %374 : vector<1x64xf32> to vector<16x64xf32>
    %396 = arith.addf %394, %395 : vector<16x64xf32>
    %397 = arith.truncf %396 : vector<16x64xf32> to vector<16x64xbf16>
    %c1_130 = arith.constant 1 : index
    %c0_131 = arith.constant 0 : index
    %c0_132 = arith.constant 0 : index
    %398 = vector.load %arg9[%c1_130, %c0_131, %c0_132] : memref<2x64x256xbf16, #tpu.memory_space<vmem>>, vector<1x64x256xbf16>
    %399 = vector.shape_cast %398 : vector<1x64x256xbf16> to vector<64x256xbf16>
    %cst_133 = arith.constant dense<0.000000e+00> : vector<16x256xf32>
    %400 = tpu.matmul %397, %399, %cst_133 {dimension_numbers = #tpu.dot_dimension_numbers<[1], [0], [0], [1], [0, 0, 1, 1], [], []>} : vector<16x64xbf16>, vector<64x256xbf16>, vector<16x256xf32> -> vector<16x256xf32>
    %c1_134 = arith.constant 1 : index
    %c0_135 = arith.constant 0 : index
    %c0_136 = arith.constant 0 : index
    %401 = vector.load %arg10[%c1_134, %c0_135, %c0_136] : memref<2x1x256xf32, #tpu.memory_space<vmem>>, vector<1x1x256xf32>
    %402 = vector.shape_cast %401 : vector<1x1x256xf32> to vector<1x256xf32>
    %403 = vector.broadcast %402 : vector<1x256xf32> to vector<16x256xf32>
    %404 = arith.addf %400, %403 : vector<16x256xf32>
    %cst_137 = arith.constant 0.000000e+00 : f32
    %405 = vector.broadcast %cst_137 : f32 to vector<16x256xf32>
    %406 = arith.maximumf %404, %405 : vector<16x256xf32>
    %407 = arith.truncf %406 : vector<16x256xf32> to vector<16x256xbf16>
    %c1_138 = arith.constant 1 : index
    %c0_139 = arith.constant 0 : index
    %c0_140 = arith.constant 0 : index
    %408 = vector.load %arg11[%c1_138, %c0_139, %c0_140] : memref<2x256x64xbf16, #tpu.memory_space<vmem>>, vector<1x256x64xbf16>
    %409 = vector.shape_cast %408 : vector<1x256x64xbf16> to vector<256x64xbf16>
    %cst_141 = arith.constant dense<0.000000e+00> : vector<16x64xf32>
    %410 = tpu.matmul %407, %409, %cst_141 {dimension_numbers = #tpu.dot_dimension_numbers<[1], [0], [0], [1], [0, 0, 1, 1], [], []>} : vector<16x256xbf16>, vector<256x64xbf16>, vector<16x64xf32> -> vector<16x64xf32>
    %c1_142 = arith.constant 1 : index
    %c0_143 = arith.constant 0 : index
    %c0_144 = arith.constant 0 : index
    %411 = vector.load %arg12[%c1_142, %c0_143, %c0_144] : memref<2x1x64xf32, #tpu.memory_space<vmem>>, vector<1x1x64xf32>
    %412 = vector.shape_cast %411 : vector<1x1x64xf32> to vector<1x64xf32>
    %413 = vector.broadcast %412 : vector<1x64xf32> to vector<16x64xf32>
    %414 = arith.addf %410, %413 : vector<16x64xf32>
    %415 = arith.addf %370, %414 : vector<16x64xf32>
    %c0_145 = arith.constant 0 : index
    %c0_146 = arith.constant 0 : index
    %416 = vector.load %arg13[%c0_145, %c0_146] : memref<1x64xf32, #tpu.memory_space<vmem>>, vector<1x64xf32>
    %c0_147 = arith.constant 0 : index
    %c0_148 = arith.constant 0 : index
    %417 = vector.load %arg14[%c0_147, %c0_148] : memref<1x64xf32, #tpu.memory_space<vmem>>, vector<1x64xf32>
    %cst_149 = arith.constant dense<0.000000e+00> : vector<16xf32>
    %418 = vector.multi_reduction <add>, %415, %cst_149 [1] : vector<16x64xf32> to vector<16xf32>
    %419 = vector.shape_cast %418 : vector<16xf32> to vector<16x1xf32>
    %cst_150 = arith.constant 6.400000e+01 : f32
    %420 = vector.broadcast %cst_150 : f32 to vector<16x1xf32>
    %421 = arith.divf %419, %420 : vector<16x1xf32>
    %422 = vector.broadcast %421 : vector<16x1xf32> to vector<16x64xf32>
    %423 = arith.subf %415, %422 : vector<16x64xf32>
    %424 = arith.mulf %423, %423 : vector<16x64xf32>
    %cst_151 = arith.constant dense<0.000000e+00> : vector<16xf32>
    %425 = vector.multi_reduction <add>, %424, %cst_151 [1] : vector<16x64xf32> to vector<16xf32>
    %426 = vector.shape_cast %425 : vector<16xf32> to vector<16x1xf32>
    %cst_152 = arith.constant 6.400000e+01 : f32
    %427 = vector.broadcast %cst_152 : f32 to vector<16x1xf32>
    %428 = arith.divf %426, %427 : vector<16x1xf32>
    %429 = vector.broadcast %421 : vector<16x1xf32> to vector<16x64xf32>
    %430 = arith.subf %415, %429 : vector<16x64xf32>
    %cst_153 = arith.constant 9.99999974E-6 : f32
    %431 = vector.broadcast %cst_153 : f32 to vector<16x1xf32>
    %432 = arith.addf %428, %431 : vector<16x1xf32>
    %433 = math.rsqrt %432 : vector<16x1xf32>
    %434 = vector.broadcast %433 : vector<16x1xf32> to vector<16x64xf32>
    %435 = arith.mulf %430, %434 : vector<16x64xf32>
    %436 = vector.broadcast %416 : vector<1x64xf32> to vector<16x64xf32>
    %437 = arith.mulf %435, %436 : vector<16x64xf32>
    %438 = vector.broadcast %417 : vector<1x64xf32> to vector<16x64xf32>
    %439 = arith.addf %437, %438 : vector<16x64xf32>
    %440 = arith.truncf %439 : vector<16x64xf32> to vector<16x64xbf16>
    %c0_154 = arith.constant 0 : index
    %c0_155 = arith.constant 0 : index
    %441 = vector.load %arg15[%c0_154, %c0_155] : memref<64x256xbf16, #tpu.memory_space<vmem>>, vector<64x256xbf16>
    %cst_156 = arith.constant dense<0.000000e+00> : vector<16x256xf32>
    %442 = tpu.matmul %440, %441, %cst_156 {dimension_numbers = #tpu.dot_dimension_numbers<[1], [0], [0], [1], [0, 0, 1, 1], [], []>} : vector<16x64xbf16>, vector<64x256xbf16>, vector<16x256xf32> -> vector<16x256xf32>
    %c0_157 = arith.constant 0 : index
    %c0_158 = arith.constant 0 : index
    %443 = vector.load %arg16[%c0_157, %c0_158] : memref<1x256xf32, #tpu.memory_space<vmem>>, vector<1x256xf32>
    %444 = vector.broadcast %443 : vector<1x256xf32> to vector<16x256xf32>
    %445 = arith.addf %442, %444 : vector<16x256xf32>
    %c0_159 = arith.constant 0 : index
    %c0_160 = arith.constant 0 : index
    %446 = vector.load %arg17[%c0_159, %c0_160] : memref<16x256xf32, #tpu.memory_space<vmem>>, vector<16x256xf32>
    tpu.vector_store %arg17[%c0_159, %c0_160], %445 {strides = array<i32>} : memref<16x256xf32, #tpu.memory_space<vmem>>, vector<16x256xf32>,
    return
  }
  func.func @transform_0(%arg0: i32) -> (i32, i32) {
    %c0_i32 = arith.constant 0 : i32
    %c0_i32_0 = arith.constant 0 : i32
    return %arg0, %c0_i32 : i32, i32
  }
  func.func @transform_1(%arg0: i32) -> (i32, i32, i32) {
    %c0_i32 = arith.constant 0 : i32
    %c0_i32_0 = arith.constant 0 : i32
    %c0_i32_1 = arith.constant 0 : i32
    %c0_i32_2 = arith.constant 0 : i32
    return %c0_i32, %c0_i32_0, %c0_i32_1 : i32, i32, i32
  }
  func.func @transform_2(%arg0: i32) -> (i32, i32, i32) {
    %c0_i32 = arith.constant 0 : i32
    %c0_i32_0 = arith.constant 0 : i32
    %c0_i32_1 = arith.constant 0 : i32
    %c0_i32_2 = arith.constant 0 : i32
    return %c0_i32, %c0_i32_0, %c0_i32_1 : i32, i32, i32
  }
  func.func @transform_3(%arg0: i32) -> (i32, i32, i32) {
    %c0_i32 = arith.constant 0 : i32
    %c0_i32_0 = arith.constant 0 : i32
    %c0_i32_1 = arith.constant 0 : i32
    %c0_i32_2 = arith.constant 0 : i32
    return %c0_i32, %c0_i32_0, %c0_i32_1 : i32, i32, i32
  }
  func.func @transform_4(%arg0: i32) -> (i32, i32, i32, i32) {
    %c0_i32 = arith.constant 0 : i32
    %c0_i32_0 = arith.constant 0 : i32
    %c0_i32_1 = arith.constant 0 : i32
    %c0_i32_2 = arith.constant 0 : i32
    %c0_i32_3 = arith.constant 0 : i32
    return %c0_i32, %c0_i32_0, %c0_i32_1, %c0_i32_2 : i32, i32, i32, i32
  }
  func.func @transform_5(%arg0: i32) -> (i32, i32, i32) {
    %c0_i32 = arith.constant 0 : i32
    %c0_i32_0 = arith.constant 0 : i32
    %c0_i32_1 = arith.constant 0 : i32
    %c0_i32_2 = arith.constant 0 : i32
    return %c0_i32, %c0_i32_0, %c0_i32_1 : i32, i32, i32
  }
  func.func @transform_6(%arg0: i32) -> (i32, i32, i32) {
    %c0_i32 = arith.constant 0 : i32
    %c0_i32_0 = arith.constant 0 : i32
    %c0_i32_1 = arith.constant 0 : i32
    %c0_i32_2 = arith.constant 0 : i32
    return %c0_i32, %c0_i32_0, %c0_i32_1 : i32, i32, i32
  }
  func.func @transform_7(%arg0: i32) -> (i32, i32, i32) {
    %c0_i32 = arith.constant 0 : i32
    %c0_i32_0 = arith.constant 0 : i32
    %c0_i32_1 = arith.constant 0 : i32
    %c0_i32_2 = arith.constant 0 : i32
    return %c0_i32, %c0_i32_0, %c0_i32_1 : i32, i32, i32
  }
  func.func @transform_8(%arg0: i32) -> (i32, i32, i32) {
    %c0_i32 = arith.constant 0 : i32
    %c0_i32_0 = arith.constant 0 : i32
    %c0_i32_1 = arith.constant 0 : i32
    %c0_i32_2 = arith.constant 0 : i32
    return %c0_i32, %c0_i32_0, %c0_i32_1 : i32, i32, i32
  }
  func.func @transform_9(%arg0: i32) -> (i32, i32, i32) {
    %c0_i32 = arith.constant 0 : i32
    %c0_i32_0 = arith.constant 0 : i32
    %c0_i32_1 = arith.constant 0 : i32
    %c0_i32_2 = arith.constant 0 : i32
    return %c0_i32, %c0_i32_0, %c0_i32_1 : i32, i32, i32
  }
  func.func @transform_10(%arg0: i32) -> (i32, i32, i32) {
    %c0_i32 = arith.constant 0 : i32
    %c0_i32_0 = arith.constant 0 : i32
    %c0_i32_1 = arith.constant 0 : i32
    %c0_i32_2 = arith.constant 0 : i32
    return %c0_i32, %c0_i32_0, %c0_i32_1 : i32, i32, i32
  }
  func.func @transform_11(%arg0: i32) -> (i32, i32, i32) {
    %c0_i32 = arith.constant 0 : i32
    %c0_i32_0 = arith.constant 0 : i32
    %c0_i32_1 = arith.constant 0 : i32
    %c0_i32_2 = arith.constant 0 : i32
    return %c0_i32, %c0_i32_0, %c0_i32_1 : i32, i32, i32
  }
  func.func @transform_12(%arg0: i32) -> (i32, i32) {
    %c0_i32 = arith.constant 0 : i32
    %c0_i32_0 = arith.constant 0 : i32
    %c0_i32_1 = arith.constant 0 : i32
    return %c0_i32, %c0_i32_0 : i32, i32
  }
  func.func @transform_13(%arg0: i32) -> (i32, i32) {
    %c0_i32 = arith.constant 0 : i32
    %c0_i32_0 = arith.constant 0 : i32
    %c0_i32_1 = arith.constant 0 : i32
    return %c0_i32, %c0_i32_0 : i32, i32
  }
  func.func @transform_14(%arg0: i32) -> (i32, i32) {
    %c0_i32 = arith.constant 0 : i32
    %c0_i32_0 = arith.constant 0 : i32
    %c0_i32_1 = arith.constant 0 : i32
    return %c0_i32, %c0_i32_0 : i32, i32
  }
  func.func @transform_15(%arg0: i32) -> (i32, i32) {
    %c0_i32 = arith.constant 0 : i32
    %c0_i32_0 = arith.constant 0 : i32
    %c0_i32_1 = arith.constant 0 : i32
    return %c0_i32, %c0_i32_0 : i32, i32
  }
  func.func @transform_16(%arg0: i32) -> (i32, i32) {
    %c0_i32 = arith.constant 0 : i32
    %c0_i32_0 = arith.constant 0 : i32
    return %arg0, %c0_i32 : i32, i32
  }
}

</mosaic_0001>

<llo_original>
// kernel: gpt_forward.1
$region0: #{gpt_forward.1}
  #allocation0 [shape = 'u32[]', space=smem, size = 0x4, offset = 0x4, fixed_abs, tag = 'smem constant byte address 0x4 - core index']
  #allocation1 [shape = 'u32[144,128]{1,0:T(1,128)}', space=vmem, size = 0x12000, scoped, tag = 'internal scratch']
  %s0 = inlined_call_operand.vmem [shape: f32[16,64], index: 0, kind: input, shape index: {}]
  %s1 = inlined_call_operand.vmem [shape: f32[2,1,64], index: 1, kind: input, shape index: {}]
  %s2 = inlined_call_operand.vmem [shape: f32[2,1,64], index: 2, kind: input, shape index: {}]
  %s3 = inlined_call_operand.vmem [shape: bf16[2,64,192], index: 3, kind: input, shape index: {}]
  %s4 = inlined_call_operand.vmem [shape: bf16[2,4,16,64], index: 4, kind: input, shape index: {}]
  %s5 = inlined_call_operand.vmem [shape: f32[2,1,64], index: 5, kind: input, shape index: {}]
  %s6 = inlined_call_operand.vmem [shape: f32[2,1,64], index: 6, kind: input, shape index: {}]
  %s7 = inlined_call_operand.vmem [shape: f32[2,1,64], index: 7, kind: input, shape index: {}]
  %s8 = inlined_call_operand.vmem [shape: bf16[2,64,256], index: 8, kind: input, shape index: {}]
  %s9 = inlined_call_operand.vmem [shape: f32[2,1,256], index: 9, kind: input, shape index: {}]
  %s10 = inlined_call_operand.vmem [shape: bf16[2,256,64], index: 10, kind: input, shape index: {}]
  %s11 = inlined_call_operand.vmem [shape: f32[2,1,64], index: 11, kind: input, shape index: {}]
  %s12 = inlined_call_operand.vmem [shape: f32[1,64], index: 12, kind: input, shape index: {}]
  %s13 = inlined_call_operand.vmem [shape: f32[1,64], index: 13, kind: input, shape index: {}]
  %s14 = inlined_call_operand.vmem [shape: bf16[64,256], index: 14, kind: input, shape index: {}]
  %s15 = inlined_call_operand.vmem [shape: f32[1,256], index: 15, kind: input, shape index: {}]
  %s16 = inlined_call_operand.hbm [shape: f32[16,256], index: 16, kind: output, shape index: {}]
  %s17 = sld [smem:[#allocation0]]
  $region74: #{gpt_forward.1} parent=0
    _
  %s19 = ssub.s32 1, %s17
  %s20 = scalar_select 0, %s19, %s17
  $region1: #{gpt_forward.1} parent=0
    #allocation2 [shape = 'u8[16384]{0}', space=vmem, size = 0x4000, scoped, tag = 'output window, operand 0, single buffered']
    #allocation3 [shape = 's32[1]{0}', space=sflag, size = 0x4, scoped, tag = 'scoped memory for gpt_forward.1']
    %21 = vsyncpa [#allocation3], 0
    // Predicated region
    $region2: #{gpt_forward.1} parent=1 // pred_check
      _
    $region3: #{gpt_forward.1} parent=1 // pred_check_branch
      %23 = sbr.rel (0) target = $region5
    $region4: #{gpt_forward.1} parent=1 // pred_region
      _
    $region5: #{gpt_forward.1} parent=1 // pred_fallthru
      _
    // Predicated region
    $region6: #{gpt_forward.1} parent=1 // pred_check
      _
    $region7: #{gpt_forward.1} parent=1 // pred_check_branch
      %25 = sbr.rel (0) target = $region9
    $region8: #{gpt_forward.1} parent=1 // pred_region
      _
    $region9: #{gpt_forward.1} parent=1 // pred_fallthru
      _
    // Predicated region
    $region10: #{gpt_forward.1} parent=1 // pred_check
      _
    $region11: #{gpt_forward.1} parent=1 // pred_check_branch
      %27 = sbr.rel (0) target = $region13
    $region12: #{gpt_forward.1} parent=1 // pred_region
      _
    $region13: #{gpt_forward.1} parent=1 // pred_fallthru
      _
    // Predicated region
    $region14: #{gpt_forward.1} parent=1 // pred_check
      _
    $region15: #{gpt_forward.1} parent=1 // pred_check_branch
      %29 = sbr.rel (0) target = $region17
    $region16: #{gpt_forward.1} parent=1 // pred_region
      _
    $region17: #{gpt_forward.1} parent=1 // pred_fallthru
      _
    // Predicated region
    $region18: #{gpt_forward.1} parent=1 // pred_check
      _
    $region19: #{gpt_forward.1} parent=1 // pred_check_branch
      %31 = sbr.rel (0) target = $region21
    $region20: #{gpt_forward.1} parent=1 // pred_region
      _
    $region21: #{gpt_forward.1} parent=1 // pred_fallthru
      _
    // Predicated region
    $region22: #{gpt_forward.1} parent=1 // pred_check
      _
    $region23: #{gpt_forward.1} parent=1 // pred_check_branch
      %33 = sbr.rel (0) target = $region25
    $region24: #{gpt_forward.1} parent=1 // pred_region
      _
    $region25: #{gpt_forward.1} parent=1 // pred_fallthru
      _
    // Predicated region
    $region26: #{gpt_forward.1} parent=1 // pred_check
      _
    $region27: #{gpt_forward.1} parent=1 // pred_check_branch
      %35 = sbr.rel (0) target = $region29
    $region28: #{gpt_forward.1} parent=1 // pred_region
      _
    $region29: #{gpt_forward.1} parent=1 // pred_fallthru
      _
    // Predicated region
    $region30: #{gpt_forward.1} parent=1 // pred_check
      _
    $region31: #{gpt_forward.1} parent=1 // pred_check_branch
      %37 = sbr.rel (0) target = $region33
    $region32: #{gpt_forward.1} parent=1 // pred_region
      _
    $region33: #{gpt_forward.1} parent=1 // pred_fallthru
      _
    // Predicated region
    $region34: #{gpt_forward.1} parent=1 // pred_check
      _
    $region35: #{gpt_forward.1} parent=1 // pred_check_branch
      %39 = sbr.rel (0) target = $region37
    $region36: #{gpt_forward.1} parent=1 // pred_region
      _
    $region37: #{gpt_forward.1} parent=1 // pred_fallthru
      _
    // Predicated region
    $region38: #{gpt_forward.1} parent=1 // pred_check
      _
    $region39: #{gpt_forward.1} parent=1 // pred_check_branch
      %41 = sbr.rel (0) target = $region41
    $region40: #{gpt_forward.1} parent=1 // pred_region
      _
    $region41: #{gpt_forward.1} parent=1 // pred_fallthru
      _
    // Predicated region
    $region42: #{gpt_forward.1} parent=1 // pred_check
      _
    $region43: #{gpt_forward.1} parent=1 // pred_check_branch
      %43 = sbr.rel (0) target = $region45
    $region44: #{gpt_forward.1} parent=1 // pred_region
      _
    $region45: #{gpt_forward.1} parent=1 // pred_fallthru
      _
    // Predicated region
    $region46: #{gpt_forward.1} parent=1 // pred_check
      _
    $region47: #{gpt_forward.1} parent=1 // pred_check_branch
      %45 = sbr.rel (0) target = $region49
    $region48: #{gpt_forward.1} parent=1 // pred_region
      _
    $region49: #{gpt_forward.1} parent=1 // pred_fallthru
      _
    // Predicated region
    $region50: #{gpt_forward.1} parent=1 // pred_check
      _
    $region51: #{gpt_forward.1} parent=1 // pred_check_branch
      %47 = sbr.rel (0) target = $region53
    $region52: #{gpt_forward.1} parent=1 // pred_region
      _
    $region53: #{gpt_forward.1} parent=1 // pred_fallthru
      _
    // Predicated region
    $region54: #{gpt_forward.1} parent=1 // pred_check
      _
    $region55: #{gpt_forward.1} parent=1 // pred_check_branch
      %49 = sbr.rel (0) target = $region57
    $region56: #{gpt_forward.1} parent=1 // pred_region
      _
    $region57: #{gpt_forward.1} parent=1 // pred_fallthru
      _
    // Predicated region
    $region58: #{gpt_forward.1} parent=1 // pred_check
      _
    $region59: #{gpt_forward.1} parent=1 // pred_check_branch
      %51 = sbr.rel (0) target = $region61
    $region60: #{gpt_forward.1} parent=1 // pred_region
      _
    $region61: #{gpt_forward.1} parent=1 // pred_fallthru
      _
    // Predicated region
    $region62: #{gpt_forward.1} parent=1 // pred_check
      _
    $region63: #{gpt_forward.1} parent=1 // pred_check_branch
      %53 = sbr.rel (0) target = $region65
    $region64: #{gpt_forward.1} parent=1 // pred_region
      _
    $region65: #{gpt_forward.1} parent=1 // pred_fallthru
      _
    %v55 = vld [vmem:[%s0] sm:$0xff]
    %v56 = vld [vmem:[%s0 + $0x8] sm:$0xff]
    %v57 = vlaneseq
    %v58 = vshrl.u32 %v57, 7
    %v59 = vlaneseq
    %v60 = vand.u32 %v59, 127
    %vm61 = vcmp.ge.s32.totalorder %v58, %v60
    %v62 = vld [vmem:[%s1] sm:$0x1]
    %v63 = vld [vmem:[%s2] sm:$0x1]
    %vm64 = vcmask 523264
    %v65 = vsel %vm64, %v55, 0.0
    %66 = vadd.xlane.f32.xlu0 %v65
    %v67 = vpop.xlane.xlu0 %66
    %v68 = vsel %vm64, %v56, 0.0
    %69 = vadd.xlane.f32.xlu0 %v68
    %v70 = vpop.xlane.xlu0 %69
    %v71 = vrcp.pop 64.0
    %v72 = vmul.f32 %v67, %v71
    %v73 = vmul.f32 %v70, %v71
    %v74 = vsub.f32 %v55, %v72
    %v75 = vsub.f32 %v56, %v73
    %v76 = vmul.f32 %v74, %v74
    %v77 = vmul.f32 %v75, %v75
    %v78 = vsel %vm64, %v76, 0.0
    %79 = vadd.xlane.f32.xlu0 %v78
    %v80 = vpop.xlane.xlu0 %79
    %v81 = vsel %vm64, %v77, 0.0
    %82 = vadd.xlane.f32.xlu0 %v81
    %v83 = vpop.xlane.xlu0 %82
    %v84 = vmul.f32 %v80, %v71
    %v85 = vmul.f32 %v83, %v71
    %v86 = vadd.f32 %v84, 1e-05
    %v87 = vadd.f32 %v85, 1e-05
    %v88 = vrsqrt.pop %v86
    %v89 = vrsqrt.pop %v87
    %v90 = vmul.f32 %v74, %v88
    %v91 = vmul.f32 %v75, %v89
    %v93 = vlaneseq
    %v94 = vshrl.u32 %v93, 7
    %v95 = vsub.s32 0, %v94
    %v96 = vrot.slane %v62, %v95
    %v98 = vmul.f32 %v90, %v96
    %v99 = vmul.f32 %v91, %v96
    %v101 = vlaneseq
    %v102 = vshrl.u32 %v101, 7
    %v103 = vsub.s32 0, %v102
    %v104 = vrot.slane %v63, %v103
    %v106 = vadd.f32 %v98, %v104
    %v107 = vadd.f32 %v99, %v104
    %v108 = vpack.c.bf16 %v107, %v106
    %v109 = vld [vmem:[%s3] sm:$0xff]
    %v110 = vld [vmem:[%s3 + $0x8] sm:$0xff]
    %v111 = vld [vmem:[%s3 + $0x10] sm:$0xff]
    %v112 = vld [vmem:[%s3 + $0x18] sm:$0xff]
    %v113 = vld [vmem:[%s3 + $0x20] sm:$0xff]
    %v114 = vld [vmem:[%s3 + $0x28] sm:$0xff]
    %v115 = vld [vmem:[%s3 + $0x30] sm:$0xff]
    %v116 = vld [vmem:[%s3 + $0x38] sm:$0xff]
    %v125 = vunpack.c.l.b16 %v109
    %v126 = vunpack.c.h.b16 %v109
    %v127 = vunpack.c.l.b16 %v110
    %v128 = vunpack.c.h.b16 %v110
    %v129 = vunpack.c.l.b16 %v111
    %v130 = vunpack.c.h.b16 %v111
    %v131 = vunpack.c.l.b16 %v112
    %v132 = vunpack.c.h.b16 %v112
    %v133 = vunpack.c.l.b16 %v113
    %v134 = vunpack.c.h.b16 %v113
    %v135 = vunpack.c.l.b16 %v114
    %v136 = vunpack.c.h.b16 %v114
    %v137 = vunpack.c.l.b16 %v115
    %v138 = vunpack.c.h.b16 %v115
    %v139 = vunpack.c.l.b16 %v116
    %v140 = vunpack.c.h.b16 %v116
    %v141 = vpack.c.b16 %v127, %v125
    %v142 = vpack.c.b16 %v128, %v126
    %v143 = vpack.c.b16 %v131, %v129
    %v144 = vpack.c.b16 %v132, %v130
    %v145 = vpack.c.b16 %v135, %v133
    %v146 = vpack.c.b16 %v136, %v134
    %v147 = vpack.c.b16 %v139, %v137
    %v148 = vpack.c.b16 %v140, %v138
    %v158 = vsel %vm64, %v108, 0
    %160 = vmatprep.subr.bf16.mxu0 %v142
    %161 = vmatpush1.bf16.msra.mxu0 %v141
    %162 = vmatprep.subr.bf16.mxu0 %v144
    %163 = vmatpush1.bf16.msra.mxu0 %v143
    %164 = vmatprep.subr.bf16.mxu0 %v146
    %165 = vmatpush1.bf16.msra.mxu0 %v145
    %166 = vmatprep.subr.bf16.mxu0 %v148
    %167 = vmatpush1.bf16.msra.mxu0 %v147
    %168 = vmatprep.subr.bf16.mxu0 0
    %169 = vmatpush1.bf16.msra.mxu0 0
    %170 = vmatprep.subr.bf16.mxu0 0
    %171 = vmatpush1.bf16.msra.mxu0 0
    %172 = vmatprep.subr.bf16.mxu0 0
    %173 = vmatpush1.bf16.msra.mxu0 0
    %174 = vmatprep.subr.bf16.mxu0 0
    %175 = vmatpush1.bf16.msra.mxu0 0
    %176 = vmatprep.subr.bf16.mxu0 0
    %177 = vmatpush1.bf16.msra.mxu0 0
    %178 = vmatprep.subr.bf16.mxu0 0
    %179 = vmatpush1.bf16.msra.mxu0 0
    %180 = vmatprep.subr.bf16.mxu0 0
    %181 = vmatpush1.bf16.msra.mxu0 0
    %182 = vmatprep.subr.bf16.mxu0 0
    %183 = vmatpush1.bf16.msra.mxu0 0
    %184 = vmatprep.subr.bf16.mxu0 0
    %185 = vmatpush1.bf16.msra.mxu0 0
    %186 = vmatprep.subr.bf16.mxu0 0
    %187 = vmatpush1.bf16.msra.mxu0 0
    %188 = vmatprep.subr.bf16.mxu0 0
    %189 = vmatpush1.bf16.msra.mxu0 0
    %190 = vmatprep.subr.bf16.mxu0 0
    %191 = vmatpush1.bf16.msra.mxu0 0
    %192 = vmatprep.mubr.bf16.mxu0 0
    %193 = vmatmul.mubr.bf16.gmra.mrb[0].mxu0 %v158
    %v194 = vpop.f32.mrb[0].mxu0
    %v195 = vadd.f32 0.0, %v194
    %v196 = vpop.f32.mrb[0].mxu0
    %v197 = vadd.f32 0.0, %v196
    %v198 = vpop.f32.mrb[0].mxu0
    %v199 = vadd.f32 0.0, %v198
    %v200 = vpop.f32.mrb[0].mxu0
    %v201 = vadd.f32 0.0, %v200
    %202 = vdwg.mxu0
    %v203 = vld [vmem:[%s4] sm:$0xf]
    %v204 = vld [vmem:[%s4 + $0x4] sm:$0xf]
    %v205 = vld [vmem:[%s4 + $0x8] sm:$0xf]
    %v206 = vld [vmem:[%s4 + $0xc] sm:$0xf]
    %v207 = vld [vmem:[%s4 + $0x10] sm:$0xf]
    %v208 = vld [vmem:[%s4 + $0x14] sm:$0xf]
    %v209 = vld [vmem:[%s4 + $0x18] sm:$0xf]
    %v210 = vld [vmem:[%s4 + $0x1c] sm:$0xf]
    %212 = vrot.lane.b32.xlu0 %v195, 64
    %v213 = vpop.permute.xlu0 %212
    %vm214 = vcmask 130048
    %v215 = vsel %vm214, %v195, 0
    %v217 = vsel %vm214, %v213, 0
    %219 = vmatprep.subr.mxu0 0.0
    %220 = vmatpush1.xpose.msra.mxu0 %v217
    %221 = vmatprep.subr.mxu0 0.0
    %222 = vmatpush1.xpose.msra.mxu0 0.0
    %223 = vmatprep.subr.mxu0 0.0
    %224 = vmatpush1.xpose.msra.mxu0 0.0
    %225 = vmatprep.subr.mxu0 0.0
    %226 = vmatpush1.xpose.msra.mxu0 0.0
    %227 = vmatprep.subr.mxu0 0.0
    %228 = vmatpush1.xpose.msra.mxu0 0.0
    %229 = vmatprep.subr.mxu0 0.0
    %230 = vmatpush1.xpose.msra.mxu0 0.0
    %231 = vmatprep.subr.mxu0 0.0
    %232 = vmatpush1.xpose.msra.mxu0 0.0
    %233 = vmatprep.subr.mxu0 0.0
    %234 = vmatpush1.xpose.msra.mxu0 0.0
    %235 = vmatprep.subr.mxu0 0.0
    %236 = vmatpush1.xpose.msra.mxu0 0.0
    %237 = vmatprep.subr.mxu0 0.0
    %238 = vmatpush1.xpose.msra.mxu0 0.0
    %239 = vmatprep.subr.mxu0 0.0
    %240 = vmatpush1.xpose.msra.mxu0 0.0
    %241 = vmatprep.subr.mxu0 0.0
    %242 = vmatpush1.xpose.msra.mxu0 0.0
    %243 = vmatprep.subr.mxu0 0.0
    %244 = vmatpush1.xpose.msra.mxu0 0.0
    %245 = vmatprep.subr.mxu0 0.0
    %246 = vmatpush1.xpose.msra.mxu0 0.0
    %247 = vmatprep.subr.mxu0 0.0
    %248 = vmatpush1.xpose.msra.mxu0 0.0
    %249 = vmatprep.subr.mxu0 0.0
    %250 = vmatpush1.xpose.msra.mxu0 0.0
    %251 = vmatprep.subr.mxu0 0.0
    %252 = vmatpush1.xpose.msra.mxu0 0.0
    %253 = vmatprep.subr.mxu0 0.0
    %254 = vmatpush1.xpose.msra.mxu0 0.0
    %255 = vmatprep.subr.mxu0 0.0
    %256 = vmatpush1.xpose.msra.mxu0 0.0
    %257 = vmatprep.subr.mxu0 0.0
    %258 = vmatpush1.xpose.msra.mxu0 0.0
    %259 = vmatprep.subr.mxu0 0.0
    %260 = vmatpush1.xpose.msra.mxu0 0.0
    %261 = vmatprep.subr.mxu0 0.0
    %262 = vmatpush1.xpose.msra.mxu0 0.0
    %263 = vmatprep.subr.mxu0 0.0
    %264 = vmatpush1.xpose.msra.mxu0 0.0
    %265 = vmatprep.subr.mxu0 0.0
    %266 = vmatpush1.xpose.msra.mxu0 0.0
    %267 = vmatprep.subr.mxu0 0.0
    %268 = vmatpush1.xpose.msra.mxu0 0.0
    %269 = vmatprep.subr.mxu0 0.0
    %270 = vmatpush1.xpose.msra.mxu0 0.0
    %271 = vmatprep.subr.mxu0 0.0
    %272 = vmatpush1.xpose.msra.mxu0 0.0
    %273 = vmatprep.subr.mxu0 0.0
    %274 = vmatpush1.xpose.msra.mxu0 0.0
    %275 = vmatprep.subr.mxu0 0.0
    %276 = vmatpush1.xpose.msra.mxu0 0.0
    %277 = vmatprep.subr.mxu0 0.0
    %278 = vmatpush1.xpose.msra.mxu0 0.0
    %279 = vmatprep.subr.mxu0 0.0
    %280 = vmatpush1.xpose.msra.mxu0 0.0
    %281 = vmatprep.subr.mxu0 0.0
    %282 = vmatpush1.xpose.msra.mxu0 0.0
    %283 = vmatprep.mubr.f32.mxu0 0.0
    %284 = vmatmul.mubr.f32.gmra.mrb[0].mxu0 %v215
    %v285 = vpop.f32.mrb[0].mxu0
    %v286 = vadd.f32 0.0, %v285
    %v287 = vpop.f32.mrb[0].mxu0
    %288 = vdwg.mxu0
    %290 = vrot.lane.b32.xlu0 %v199, 64
    %v291 = vpop.permute.xlu0 %290
    %v292 = vsel %vm214, %v199, 0
    %v294 = vsel %vm214, %v291, 0
    %296 = vmatprep.subr.mxu0 0.0
    %297 = vmatpush1.xpose.msra.mxu0 %v294
    %298 = vmatprep.subr.mxu0 0.0
    %299 = vmatpush1.xpose.msra.mxu0 0.0
    %300 = vmatprep.subr.mxu0 0.0
    %301 = vmatpush1.xpose.msra.mxu0 0.0
    %302 = vmatprep.subr.mxu0 0.0
    %303 = vmatpush1.xpose.msra.mxu0 0.0
    %304 = vmatprep.subr.mxu0 0.0
    %305 = vmatpush1.xpose.msra.mxu0 0.0
    %306 = vmatprep.subr.mxu0 0.0
    %307 = vmatpush1.xpose.msra.mxu0 0.0
    %308 = vmatprep.subr.mxu0 0.0
    %309 = vmatpush1.xpose.msra.mxu0 0.0
    %310 = vmatprep.subr.mxu0 0.0
    %311 = vmatpush1.xpose.msra.mxu0 0.0
    %312 = vmatprep.subr.mxu0 0.0
    %313 = vmatpush1.xpose.msra.mxu0 0.0
    %314 = vmatprep.subr.mxu0 0.0
    %315 = vmatpush1.xpose.msra.mxu0 0.0
    %316 = vmatprep.subr.mxu0 0.0
    %317 = vmatpush1.xpose.msra.mxu0 0.0
    %318 = vmatprep.subr.mxu0 0.0
    %319 = vmatpush1.xpose.msra.mxu0 0.0
    %320 = vmatprep.subr.mxu0 0.0
    %321 = vmatpush1.xpose.msra.mxu0 0.0
    %322 = vmatprep.subr.mxu0 0.0
    %323 = vmatpush1.xpose.msra.mxu0 0.0
    %324 = vmatprep.subr.mxu0 0.0
    %325 = vmatpush1.xpose.msra.mxu0 0.0
    %326 = vmatprep.subr.mxu0 0.0
    %327 = vmatpush1.xpose.msra.mxu0 0.0
    %328 = vmatprep.subr.mxu0 0.0
    %329 = vmatpush1.xpose.msra.mxu0 0.0
    %330 = vmatprep.subr.mxu0 0.0
    %331 = vmatpush1.xpose.msra.mxu0 0.0
    %332 = vmatprep.subr.mxu0 0.0
    %333 = vmatpush1.xpose.msra.mxu0 0.0
    %334 = vmatprep.subr.mxu0 0.0
    %335 = vmatpush1.xpose.msra.mxu0 0.0
    %336 = vmatprep.subr.mxu0 0.0
    %337 = vmatpush1.xpose.msra.mxu0 0.0
    %338 = vmatprep.subr.mxu0 0.0
    %339 = vmatpush1.xpose.msra.mxu0 0.0
    %340 = vmatprep.subr.mxu0 0.0
    %341 = vmatpush1.xpose.msra.mxu0 0.0
    %342 = vmatprep.subr.mxu0 0.0
    %343 = vmatpush1.xpose.msra.mxu0 0.0
    %344 = vmatprep.subr.mxu0 0.0
    %345 = vmatpush1.xpose.msra.mxu0 0.0
    %346 = vmatprep.subr.mxu0 0.0
    %347 = vmatpush1.xpose.msra.mxu0 0.0
    %348 = vmatprep.subr.mxu0 0.0
    %349 = vmatpush1.xpose.msra.mxu0 0.0
    %350 = vmatprep.subr.mxu0 0.0
    %351 = vmatpush1.xpose.msra.mxu0 0.0
    %352 = vmatprep.subr.mxu0 0.0
    %353 = vmatpush1.xpose.msra.mxu0 0.0
    %354 = vmatprep.subr.mxu0 0.0
    %355 = vmatpush1.xpose.msra.mxu0 0.0
    %356 = vmatprep.subr.mxu0 0.0
    %357 = vmatpush1.xpose.msra.mxu0 0.0
    %358 = vmatprep.subr.mxu0 0.0
    %359 = vmatpush1.xpose.msra.mxu0 0.0
    %360 = vmatprep.mubr.f32.mxu0 0.0
    %361 = vmatmul.mubr.f32.gmra.mrb[0].mxu0 %v292
    %v362 = vpop.f32.mrb[0].mxu0
    %v363 = vadd.f32 0.0, %v362
    %v364 = vpop.f32.mrb[0].mxu0
    %365 = vdwg.mxu0
    %v366 = vsel %vm61, 1, 0
    %vm367 = vcmp.eq.s32.totalorder %v366, 1
    %v368 = vsel %vm367, %v286, -1e+30
    %v369 = vsel %vm367, %v363, -1e+30
    %vm370 = vcmask 64512
    %v371 = vsel %vm370, %v368, -inf
    %372 = vmax.xlane.f32.xlu0 %v371
    %v373 = vpop.xlane.xlu0 %372
    %v374 = vsel %vm370, %v369, -inf
    %375 = vmax.xlane.f32.xlu0 %v374
    %v376 = vpop.xlane.xlu0 %375
    %v377 = vsub.f32 %v368, %v373
    %v378 = vsub.f32 %v369, %v376
    %v379 = vmul.f32 %v377, 1.442695
    %v380 = vpow.pop %v379
    %v381 = vmul.f32 %v378, 1.442695
    %v382 = vpow.pop %v381
    %v383 = vsel %vm370, %v380, 0.0
    %384 = vadd.xlane.f32.xlu0 %v383
    %v385 = vpop.xlane.xlu0 %384
    %v386 = vsel %vm370, %v382, 0.0
    %387 = vadd.xlane.f32.xlu0 %v386
    %v388 = vpop.xlane.xlu0 %387
    %v389 = vrcp.pop %v385
    %v390 = vrcp.pop %v388
    %v391 = vmul.f32 %v380, %v389
    %v392 = vmul.f32 %v382, %v390
    %v393 = vpack.c.bf16 %v391, %v391
    %v394 = vpack.c.bf16 %v392, %v392
    %v395 = vpack.c.bf16 %v197, %v197
    %v396 = vpack.c.bf16 %v201, %v201
    %v398 = vsel %vm370, %v393, 0
    %vm400 = vcmask 1043456
    %v402 = vsel %vm400, %v395, 0
    %404 = vmatprep.subr.bf16.mxu0 0
    %405 = vmatpush1.bf16.msra.mxu0 %v402
    %406 = vmatprep.subr.bf16.mxu0 0
    %407 = vmatpush1.bf16.msra.mxu0 0
    %408 = vmatprep.subr.bf16.mxu0 0
    %409 = vmatpush1.bf16.msra.mxu0 0
    %410 = vmatprep.subr.bf16.mxu0 0
    %411 = vmatpush1.bf16.msra.mxu0 0
    %412 = vmatprep.subr.bf16.mxu0 0
    %413 = vmatpush1.bf16.msra.mxu0 0
    %414 = vmatprep.subr.bf16.mxu0 0
    %415 = vmatpush1.bf16.msra.mxu0 0
    %416 = vmatprep.subr.bf16.mxu0 0
    %417 = vmatpush1.bf16.msra.mxu0 0
    %418 = vmatprep.subr.bf16.mxu0 0
    %419 = vmatpush1.bf16.msra.mxu0 0
    %420 = vmatprep.subr.bf16.mxu0 0
    %421 = vmatpush1.bf16.msra.mxu0 0
    %422 = vmatprep.subr.bf16.mxu0 0
    %423 = vmatpush1.bf16.msra.mxu0 0
    %424 = vmatprep.subr.bf16.mxu0 0
    %425 = vmatpush1.bf16.msra.mxu0 0
    %426 = vmatprep.subr.bf16.mxu0 0
    %427 = vmatpush1.bf16.msra.mxu0 0
    %428 = vmatprep.subr.bf16.mxu0 0
    %429 = vmatpush1.bf16.msra.mxu0 0
    %430 = vmatprep.subr.bf16.mxu0 0
    %431 = vmatpush1.bf16.msra.mxu0 0
    %432 = vmatprep.subr.bf16.mxu0 0
    %433 = vmatpush1.bf16.msra.mxu0 0
    %434 = vmatprep.subr.bf16.mxu0 0
    %435 = vmatpush1.bf16.msra.mxu0 0
    %436 = vmatprep.mubr.bf16.mxu0 0
    %437 = vmatmul.mubr.bf16.gmra.mrb[0].mxu0 %v398
    %v438 = vpop.f32.mrb[0].mxu0
    %v439 = vadd.f32 0.0, %v438
    %v440 = vpop.f32.mrb[0].mxu0
    %v441 = vpop.f32.mrb[0].mxu0
    %v442 = vpop.f32.mrb[0].mxu0
    %443 = vdwg.mxu0
    %v445 = vsel %vm370, %v394, 0
    %v448 = vsel %vm400, %v396, 0
    %450 = vmatprep.subr.bf16.mxu0 0
    %451 = vmatpush1.bf16.msra.mxu0 %v448
    %452 = vmatprep.subr.bf16.mxu0 0
    %453 = vmatpush1.bf16.msra.mxu0 0
    %454 = vmatprep.subr.bf16.mxu0 0
    %455 = vmatpush1.bf16.msra.mxu0 0
    %456 = vmatprep.subr.bf16.mxu0 0
    %457 = vmatpush1.bf16.msra.mxu0 0
    %458 = vmatprep.subr.bf16.mxu0 0
    %459 = vmatpush1.bf16.msra.mxu0 0
    %460 = vmatprep.subr.bf16.mxu0 0
    %461 = vmatpush1.bf16.msra.mxu0 0
    %462 = vmatprep.subr.bf16.mxu0 0
    %463 = vmatpush1.bf16.msra.mxu0 0
    %464 = vmatprep.subr.bf16.mxu0 0
    %465 = vmatpush1.bf16.msra.mxu0 0
    %466 = vmatprep.subr.bf16.mxu0 0
    %467 = vmatpush1.bf16.msra.mxu0 0
    %468 = vmatprep.subr.bf16.mxu0 0
    %469 = vmatpush1.bf16.msra.mxu0 0
    %470 = vmatprep.subr.bf16.mxu0 0
    %471 = vmatpush1.bf16.msra.mxu0 0
    %472 = vmatprep.subr.bf16.mxu0 0
    %473 = vmatpush1.bf16.msra.mxu0 0
    %474 = vmatprep.subr.bf16.mxu0 0
    %475 = vmatpush1.bf16.msra.mxu0 0
    %476 = vmatprep.subr.bf16.mxu0 0
    %477 = vmatpush1.bf16.msra.mxu0 0
    %478 = vmatprep.subr.bf16.mxu0 0
    %479 = vmatpush1.bf16.msra.mxu0 0
    %480 = vmatprep.subr.bf16.mxu0 0
    %481 = vmatpush1.bf16.msra.mxu0 0
    %482 = vmatprep.mubr.bf16.mxu0 0
    %483 = vmatmul.mubr.bf16.gmra.mrb[0].mxu0 %v445
    %v484 = vpop.f32.mrb[0].mxu0
    %v485 = vadd.f32 0.0, %v484
    %v486 = vpop.f32.mrb[0].mxu0
    %v487 = vpop.f32.mrb[0].mxu0
    %v488 = vpop.f32.mrb[0].mxu0
    %489 = vdwg.mxu0
    %v490 = vpack.c.bf16 %v485, %v439
    %491 = vrot.lane.b32.xlu0 %v195, 112
    %v492 = vpop.permute.xlu0 %491
    %493 = vrot.lane.b32.xlu0 %v195, 48
    %v494 = vpop.permute.xlu0 %493
    %v495 = vsel %vm214, %v492, 0
    %v497 = vsel %vm214, %v494, 0
    %499 = vmatprep.subr.mxu0 0.0
    %500 = vmatpush1.xpose.msra.mxu0 %v497
    %501 = vmatprep.subr.mxu0 0.0
    %502 = vmatpush1.xpose.msra.mxu0 0.0
    %503 = vmatprep.subr.mxu0 0.0
    %504 = vmatpush1.xpose.msra.mxu0 0.0
    %505 = vmatprep.subr.mxu0 0.0
    %506 = vmatpush1.xpose.msra.mxu0 0.0
    %507 = vmatprep.subr.mxu0 0.0
    %508 = vmatpush1.xpose.msra.mxu0 0.0
    %509 = vmatprep.subr.mxu0 0.0
    %510 = vmatpush1.xpose.msra.mxu0 0.0
    %511 = vmatprep.subr.mxu0 0.0
    %512 = vmatpush1.xpose.msra.mxu0 0.0
    %513 = vmatprep.subr.mxu0 0.0
    %514 = vmatpush1.xpose.msra.mxu0 0.0
    %515 = vmatprep.subr.mxu0 0.0
    %516 = vmatpush1.xpose.msra.mxu0 0.0
    %517 = vmatprep.subr.mxu0 0.0
    %518 = vmatpush1.xpose.msra.mxu0 0.0
    %519 = vmatprep.subr.mxu0 0.0
    %520 = vmatpush1.xpose.msra.mxu0 0.0
    %521 = vmatprep.subr.mxu0 0.0
    %522 = vmatpush1.xpose.msra.mxu0 0.0
    %523 = vmatprep.subr.mxu0 0.0
    %524 = vmatpush1.xpose.msra.mxu0 0.0
    %525 = vmatprep.subr.mxu0 0.0
    %526 = vmatpush1.xpose.msra.mxu0 0.0
    %527 = vmatprep.subr.mxu0 0.0
    %528 = vmatpush1.xpose.msra.mxu0 0.0
    %529 = vmatprep.subr.mxu0 0.0
    %530 = vmatpush1.xpose.msra.mxu0 0.0
    %531 = vmatprep.subr.mxu0 0.0
    %532 = vmatpush1.xpose.msra.mxu0 0.0
    %533 = vmatprep.subr.mxu0 0.0
    %534 = vmatpush1.xpose.msra.mxu0 0.0
    %535 = vmatprep.subr.mxu0 0.0
    %536 = vmatpush1.xpose.msra.mxu0 0.0
    %537 = vmatprep.subr.mxu0 0.0
    %538 = vmatpush1.xpose.msra.mxu0 0.0
    %539 = vmatprep.subr.mxu0 0.0
    %540 = vmatpush1.xpose.msra.mxu0 0.0
    %541 = vmatprep.subr.mxu0 0.0
    %542 = vmatpush1.xpose.msra.mxu0 0.0
    %543 = vmatprep.subr.mxu0 0.0
    %544 = vmatpush1.xpose.msra.mxu0 0.0
    %545 = vmatprep.subr.mxu0 0.0
    %546 = vmatpush1.xpose.msra.mxu0 0.0
    %547 = vmatprep.subr.mxu0 0.0
    %548 = vmatpush1.xpose.msra.mxu0 0.0
    %549 = vmatprep.subr.mxu0 0.0
    %550 = vmatpush1.xpose.msra.mxu0 0.0
    %551 = vmatprep.subr.mxu0 0.0
    %552 = vmatpush1.xpose.msra.mxu0 0.0
    %553 = vmatprep.subr.mxu0 0.0
    %554 = vmatpush1.xpose.msra.mxu0 0.0
    %555 = vmatprep.subr.mxu0 0.0
    %556 = vmatpush1.xpose.msra.mxu0 0.0
    %557 = vmatprep.subr.mxu0 0.0
    %558 = vmatpush1.xpose.msra.mxu0 0.0
    %559 = vmatprep.subr.mxu0 0.0
    %560 = vmatpush1.xpose.msra.mxu0 0.0
    %561 = vmatprep.subr.mxu0 0.0
    %562 = vmatpush1.xpose.msra.mxu0 0.0
    %563 = vmatprep.mubr.f32.mxu0 0.0
    %564 = vmatmul.mubr.f32.gmra.mrb[0].mxu0 %v495
    %v565 = vpop.f32.mrb[0].mxu0
    %v566 = vadd.f32 0.0, %v565
    %v567 = vpop.f32.mrb[0].mxu0
    %568 = vdwg.mxu0
    %569 = vrot.lane.b32.xlu0 %v199, 112
    %v570 = vpop.permute.xlu0 %569
    %571 = vrot.lane.b32.xlu0 %v199, 48
    %v572 = vpop.permute.xlu0 %571
    %v573 = vsel %vm214, %v570, 0
    %v575 = vsel %vm214, %v572, 0
    %577 = vmatprep.subr.mxu0 0.0
    %578 = vmatpush1.xpose.msra.mxu0 %v575
    %579 = vmatprep.subr.mxu0 0.0
    %580 = vmatpush1.xpose.msra.mxu0 0.0
    %581 = vmatprep.subr.mxu0 0.0
    %582 = vmatpush1.xpose.msra.mxu0 0.0
    %583 = vmatprep.subr.mxu0 0.0
    %584 = vmatpush1.xpose.msra.mxu0 0.0
    %585 = vmatprep.subr.mxu0 0.0
    %586 = vmatpush1.xpose.msra.mxu0 0.0
    %587 = vmatprep.subr.mxu0 0.0
    %588 = vmatpush1.xpose.msra.mxu0 0.0
    %589 = vmatprep.subr.mxu0 0.0
    %590 = vmatpush1.xpose.msra.mxu0 0.0
    %591 = vmatprep.subr.mxu0 0.0
    %592 = vmatpush1.xpose.msra.mxu0 0.0
    %593 = vmatprep.subr.mxu0 0.0
    %594 = vmatpush1.xpose.msra.mxu0 0.0
    %595 = vmatprep.subr.mxu0 0.0
    %596 = vmatpush1.xpose.msra.mxu0 0.0
    %597 = vmatprep.subr.mxu0 0.0
    %598 = vmatpush1.xpose.msra.mxu0 0.0
    %599 = vmatprep.subr.mxu0 0.0
    %600 = vmatpush1.xpose.msra.mxu0 0.0
    %601 = vmatprep.subr.mxu0 0.0
    %602 = vmatpush1.xpose.msra.mxu0 0.0
    %603 = vmatprep.subr.mxu0 0.0
    %604 = vmatpush1.xpose.msra.mxu0 0.0
    %605 = vmatprep.subr.mxu0 0.0
    %606 = vmatpush1.xpose.msra.mxu0 0.0
    %607 = vmatprep.subr.mxu0 0.0
    %608 = vmatpush1.xpose.msra.mxu0 0.0
    %609 = vmatprep.subr.mxu0 0.0
    %610 = vmatpush1.xpose.msra.mxu0 0.0
    %611 = vmatprep.subr.mxu0 0.0
    %612 = vmatpush1.xpose.msra.mxu0 0.0
    %613 = vmatprep.subr.mxu0 0.0
    %614 = vmatpush1.xpose.msra.mxu0 0.0
    %615 = vmatprep.subr.mxu0 0.0
    %616 = vmatpush1.xpose.msra.mxu0 0.0
    %617 = vmatprep.subr.mxu0 0.0
    %618 = vmatpush1.xpose.msra.mxu0 0.0
    %619 = vmatprep.subr.mxu0 0.0
    %620 = vmatpush1.xpose.msra.mxu0 0.0
    %621 = vmatprep.subr.mxu0 0.0
    %622 = vmatpush1.xpose.msra.mxu0 0.0
    %623 = vmatprep.subr.mxu0 0.0
    %624 = vmatpush1.xpose.msra.mxu0 0.0
    %625 = vmatprep.subr.mxu0 0.0
    %626 = vmatpush1.xpose.msra.mxu0 0.0
    %627 = vmatprep.subr.mxu0 0.0
    %628 = vmatpush1.xpose.msra.mxu0 0.0
    %629 = vmatprep.subr.mxu0 0.0
    %630 = vmatpush1.xpose.msra.mxu0 0.0
    %631 = vmatprep.subr.mxu0 0.0
    %632 = vmatpush1.xpose.msra.mxu0 0.0
    %633 = vmatprep.subr.mxu0 0.0
    %634 = vmatpush1.xpose.msra.mxu0 0.0
    %635 = vmatprep.subr.mxu0 0.0
    %636 = vmatpush1.xpose.msra.mxu0 0.0
    %637 = vmatprep.subr.mxu0 0.0
    %638 = vmatpush1.xpose.msra.mxu0 0.0
    %639 = vmatprep.subr.mxu0 0.0
    %640 = vmatpush1.xpose.msra.mxu0 0.0
    %641 = vmatprep.mubr.f32.mxu0 0.0
    %642 = vmatmul.mubr.f32.gmra.mrb[0].mxu0 %v573
    %v643 = vpop.f32.mrb[0].mxu0
    %v644 = vadd.f32 0.0, %v643
    %v645 = vpop.f32.mrb[0].mxu0
    %646 = vdwg.mxu0
    %v647 = vsel %vm367, %v566, -1e+30
    %v648 = vsel %vm367, %v644, -1e+30
    %v649 = vsel %vm370, %v647, -inf
    %650 = vmax.xlane.f32.xlu0 %v649
    %v651 = vpop.xlane.xlu0 %650
    %v652 = vsel %vm370, %v648, -inf
    %653 = vmax.xlane.f32.xlu0 %v652
    %v654 = vpop.xlane.xlu0 %653
    %v655 = vsub.f32 %v647, %v651
    %v656 = vsub.f32 %v648, %v654
    %v657 = vmul.f32 %v655, 1.442695
    %v658 = vpow.pop %v657
    %v659 = vmul.f32 %v656, 1.442695
    %v660 = vpow.pop %v659
    %v661 = vsel %vm370, %v658, 0.0
    %662 = vadd.xlane.f32.xlu0 %v661
    %v663 = vpop.xlane.xlu0 %662
    %v664 = vsel %vm370, %v660, 0.0
    %665 = vadd.xlane.f32.xlu0 %v664
    %v666 = vpop.xlane.xlu0 %665
    %v667 = vrcp.pop %v663
    %v668 = vrcp.pop %v666
    %v669 = vmul.f32 %v658, %v667
    %v670 = vmul.f32 %v660, %v668
    %v671 = vpack.c.bf16 %v669, %v669
    %v672 = vpack.c.bf16 %v670, %v670
    %674 = vrot.lane.b32.xlu0 %v395, 112
    %v675 = vpop.permute.xlu0 %674
    %v677 = vsel %vm370, %v671, 0
    %v680 = vsel %vm400, %v675, 0
    %682 = vmatprep.subr.bf16.mxu0 0
    %683 = vmatpush1.bf16.msra.mxu0 %v680
    %684 = vmatprep.subr.bf16.mxu0 0
    %685 = vmatpush1.bf16.msra.mxu0 0
    %686 = vmatprep.subr.bf16.mxu0 0
    %687 = vmatpush1.bf16.msra.mxu0 0
    %688 = vmatprep.subr.bf16.mxu0 0
    %689 = vmatpush1.bf16.msra.mxu0 0
    %690 = vmatprep.subr.bf16.mxu0 0
    %691 = vmatpush1.bf16.msra.mxu0 0
    %692 = vmatprep.subr.bf16.mxu0 0
    %693 = vmatpush1.bf16.msra.mxu0 0
    %694 = vmatprep.subr.bf16.mxu0 0
    %695 = vmatpush1.bf16.msra.mxu0 0
    %696 = vmatprep.subr.bf16.mxu0 0
    %697 = vmatpush1.bf16.msra.mxu0 0
    %698 = vmatprep.subr.bf16.mxu0 0
    %699 = vmatpush1.bf16.msra.mxu0 0
    %700 = vmatprep.subr.bf16.mxu0 0
    %701 = vmatpush1.bf16.msra.mxu0 0
    %702 = vmatprep.subr.bf16.mxu0 0
    %703 = vmatpush1.bf16.msra.mxu0 0
    %704 = vmatprep.subr.bf16.mxu0 0
    %705 = vmatpush1.bf16.msra.mxu0 0
    %706 = vmatprep.subr.bf16.mxu0 0
    %707 = vmatpush1.bf16.msra.mxu0 0
    %708 = vmatprep.subr.bf16.mxu0 0
    %709 = vmatpush1.bf16.msra.mxu0 0
    %710 = vmatprep.subr.bf16.mxu0 0
    %711 = vmatpush1.bf16.msra.mxu0 0
    %712 = vmatprep.subr.bf16.mxu0 0
    %713 = vmatpush1.bf16.msra.mxu0 0
    %714 = vmatprep.mubr.bf16.mxu0 0
    %715 = vmatmul.mubr.bf16.gmra.mrb[0].mxu0 %v677
    %v716 = vpop.f32.mrb[0].mxu0
    %v717 = vadd.f32 0.0, %v716
    %v718 = vpop.f32.mrb[0].mxu0
    %v719 = vpop.f32.mrb[0].mxu0
    %v720 = vpop.f32.mrb[0].mxu0
    %721 = vdwg.mxu0
    %723 = vrot.lane.b32.xlu0 %v396, 112
    %v724 = vpop.permute.xlu0 %723
    %v726 = vsel %vm370, %v672, 0
    %v729 = vsel %vm400, %v724, 0
    %731 = vmatprep.subr.bf16.mxu0 0
    %732 = vmatpush1.bf16.msra.mxu0 %v729
    %733 = vmatprep.subr.bf16.mxu0 0
    %734 = vmatpush1.bf16.msra.mxu0 0
    %735 = vmatprep.subr.bf16.mxu0 0
    %736 = vmatpush1.bf16.msra.mxu0 0
    %737 = vmatprep.subr.bf16.mxu0 0
    %738 = vmatpush1.bf16.msra.mxu0 0
    %739 = vmatprep.subr.bf16.mxu0 0
    %740 = vmatpush1.bf16.msra.mxu0 0
    %741 = vmatprep.subr.bf16.mxu0 0
    %742 = vmatpush1.bf16.msra.mxu0 0
    %743 = vmatprep.subr.bf16.mxu0 0
    %744 = vmatpush1.bf16.msra.mxu0 0
    %745 = vmatprep.subr.bf16.mxu0 0
    %746 = vmatpush1.bf16.msra.mxu0 0
    %747 = vmatprep.subr.bf16.mxu0 0
    %748 = vmatpush1.bf16.msra.mxu0 0
    %749 = vmatprep.subr.bf16.mxu0 0
    %750 = vmatpush1.bf16.msra.mxu0 0
    %751 = vmatprep.subr.bf16.mxu0 0
    %752 = vmatpush1.bf16.msra.mxu0 0
    %753 = vmatprep.subr.bf16.mxu0 0
    %754 = vmatpush1.bf16.msra.mxu0 0
    %755 = vmatprep.subr.bf16.mxu0 0
    %756 = vmatpush1.bf16.msra.mxu0 0
    %757 = vmatprep.subr.bf16.mxu0 0
    %758 = vmatpush1.bf16.msra.mxu0 0
    %759 = vmatprep.subr.bf16.mxu0 0
    %760 = vmatpush1.bf16.msra.mxu0 0
    %761 = vmatprep.subr.bf16.mxu0 0
    %762 = vmatpush1.bf16.msra.mxu0 0
    %763 = vmatprep.mubr.bf16.mxu0 0
    %764 = vmatmul.mubr.bf16.gmra.mrb[0].mxu0 %v726
    %v765 = vpop.f32.mrb[0].mxu0
    %v766 = vadd.f32 0.0, %v765
    %v767 = vpop.f32.mrb[0].mxu0
    %v768 = vpop.f32.mrb[0].mxu0
    %v769 = vpop.f32.mrb[0].mxu0
    %770 = vdwg.mxu0
    %v771 = vpack.c.bf16 %v766, %v717
    %v774 = vunpack.c.l.b16 %v205
    %v775 = vunpack.c.l.b16 %v206
    %v776 = vpack.c.b16 %v775, %v774
    %v779 = vsel %vm214, %v771, 0
    %781 = vmatprep.subr.bf16.mxu0 0
    %782 = vmatpush1.bf16.msra.mxu0 %v776
    %783 = vmatprep.subr.bf16.mxu0 0
    %784 = vmatpush1.bf16.msra.mxu0 0
    %785 = vmatprep.subr.bf16.mxu0 0
    %786 = vmatpush1.bf16.msra.mxu0 0
    %787 = vmatprep.subr.bf16.mxu0 0
    %788 = vmatpush1.bf16.msra.mxu0 0
    %789 = vmatprep.subr.bf16.mxu0 0
    %790 = vmatpush1.bf16.msra.mxu0 0
    %791 = vmatprep.subr.bf16.mxu0 0
    %792 = vmatpush1.bf16.msra.mxu0 0
    %793 = vmatprep.subr.bf16.mxu0 0
    %794 = vmatpush1.bf16.msra.mxu0 0
    %795 = vmatprep.subr.bf16.mxu0 0
    %796 = vmatpush1.bf16.msra.mxu0 0
    %797 = vmatprep.subr.bf16.mxu0 0
    %798 = vmatpush1.bf16.msra.mxu0 0
    %799 = vmatprep.subr.bf16.mxu0 0
    %800 = vmatpush1.bf16.msra.mxu0 0
    %801 = vmatprep.subr.bf16.mxu0 0
    %802 = vmatpush1.bf16.msra.mxu0 0
    %803 = vmatprep.subr.bf16.mxu0 0
    %804 = vmatpush1.bf16.msra.mxu0 0
    %805 = vmatprep.subr.bf16.mxu0 0
    %806 = vmatpush1.bf16.msra.mxu0 0
    %807 = vmatprep.subr.bf16.mxu0 0
    %808 = vmatpush1.bf16.msra.mxu0 0
    %809 = vmatprep.subr.bf16.mxu0 0
    %810 = vmatpush1.bf16.msra.mxu0 0
    %811 = vmatprep.subr.bf16.mxu0 0
    %812 = vmatpush1.bf16.msra.mxu0 0
    %813 = vmatprep.mubr.bf16.mxu0 0
    %814 = vmatmul.mubr.bf16.gmra.mrb[0].mxu0 %v779
    %v815 = vpop.f32.mrb[0].mxu0
    %v816 = vadd.f32 0.0, %v815
    %v817 = vpop.f32.mrb[0].mxu0
    %v818 = vpop.f32.mrb[0].mxu0
    %v819 = vadd.f32 0.0, %v818
    %v820 = vpop.f32.mrb[0].mxu0
    %821 = vdwg.mxu0
    %v824 = vunpack.c.l.b16 %v203
    %v825 = vunpack.c.l.b16 %v204
    %v826 = vpack.c.b16 %v825, %v824
    %v829 = vsel %vm214, %v490, 0
    %831 = vmatprep.subr.bf16.mxu0 0
    %832 = vmatpush1.bf16.msra.mxu0 %v826
    %833 = vmatprep.subr.bf16.mxu0 0
    %834 = vmatpush1.bf16.msra.mxu0 0
    %835 = vmatprep.subr.bf16.mxu0 0
    %836 = vmatpush1.bf16.msra.mxu0 0
    %837 = vmatprep.subr.bf16.mxu0 0
    %838 = vmatpush1.bf16.msra.mxu0 0
    %839 = vmatprep.subr.bf16.mxu0 0
    %840 = vmatpush1.bf16.msra.mxu0 0
    %841 = vmatprep.subr.bf16.mxu0 0
    %842 = vmatpush1.bf16.msra.mxu0 0
    %843 = vmatprep.subr.bf16.mxu0 0
    %844 = vmatpush1.bf16.msra.mxu0 0
    %845 = vmatprep.subr.bf16.mxu0 0
    %846 = vmatpush1.bf16.msra.mxu0 0
    %847 = vmatprep.subr.bf16.mxu0 0
    %848 = vmatpush1.bf16.msra.mxu0 0
    %849 = vmatprep.subr.bf16.mxu0 0
    %850 = vmatpush1.bf16.msra.mxu0 0
    %851 = vmatprep.subr.bf16.mxu0 0
    %852 = vmatpush1.bf16.msra.mxu0 0
    %853 = vmatprep.subr.bf16.mxu0 0
    %854 = vmatpush1.bf16.msra.mxu0 0
    %855 = vmatprep.subr.bf16.mxu0 0
    %856 = vmatpush1.bf16.msra.mxu0 0
    %857 = vmatprep.subr.bf16.mxu0 0
    %858 = vmatpush1.bf16.msra.mxu0 0
    %859 = vmatprep.subr.bf16.mxu0 0
    %860 = vmatpush1.bf16.msra.mxu0 0
    %861 = vmatprep.subr.bf16.mxu0 0
    %862 = vmatpush1.bf16.msra.mxu0 0
    %863 = vmatprep.mubr.bf16.mxu0 0
    %864 = vmatmul.mubr.bf16.gmra.mrb[0].mxu0 %v829
    %v865 = vpop.f32.mrb[0].mxu0
    %v866 = vadd.f32 %v816, %v865
    %v867 = vpop.f32.mrb[0].mxu0
    %v868 = vpop.f32.mrb[0].mxu0
    %v869 = vadd.f32 %v819, %v868
    %v870 = vpop.f32.mrb[0].mxu0
    %871 = vdwg.mxu0
    %872 = vrot.lane.b32.xlu0 %v195, 96
    %v873 = vpop.permute.xlu0 %872
    %874 = vrot.lane.b32.xlu0 %v195, 32
    %v875 = vpop.permute.xlu0 %874
    %v876 = vsel %vm214, %v873, 0
    %v878 = vsel %vm214, %v875, 0
    %880 = vmatprep.subr.mxu0 0.0
    %881 = vmatpush1.xpose.msra.mxu0 %v878
    %882 = vmatprep.subr.mxu0 0.0
    %883 = vmatpush1.xpose.msra.mxu0 0.0
    %884 = vmatprep.subr.mxu0 0.0
    %885 = vmatpush1.xpose.msra.mxu0 0.0
    %886 = vmatprep.subr.mxu0 0.0
    %887 = vmatpush1.xpose.msra.mxu0 0.0
    %888 = vmatprep.subr.mxu0 0.0
    %889 = vmatpush1.xpose.msra.mxu0 0.0
    %890 = vmatprep.subr.mxu0 0.0
    %891 = vmatpush1.xpose.msra.mxu0 0.0
    %892 = vmatprep.subr.mxu0 0.0
    %893 = vmatpush1.xpose.msra.mxu0 0.0
    %894 = vmatprep.subr.mxu0 0.0
    %895 = vmatpush1.xpose.msra.mxu0 0.0
    %896 = vmatprep.subr.mxu0 0.0
    %897 = vmatpush1.xpose.msra.mxu0 0.0
    %898 = vmatprep.subr.mxu0 0.0
    %899 = vmatpush1.xpose.msra.mxu0 0.0
    %900 = vmatprep.subr.mxu0 0.0
    %901 = vmatpush1.xpose.msra.mxu0 0.0
    %902 = vmatprep.subr.mxu0 0.0
    %903 = vmatpush1.xpose.msra.mxu0 0.0
    %904 = vmatprep.subr.mxu0 0.0
    %905 = vmatpush1.xpose.msra.mxu0 0.0
    %906 = vmatprep.subr.mxu0 0.0
    %907 = vmatpush1.xpose.msra.mxu0 0.0
    %908 = vmatprep.subr.mxu0 0.0
    %909 = vmatpush1.xpose.msra.mxu0 0.0
    %910 = vmatprep.subr.mxu0 0.0
    %911 = vmatpush1.xpose.msra.mxu0 0.0
    %912 = vmatprep.subr.mxu0 0.0
    %913 = vmatpush1.xpose.msra.mxu0 0.0
    %914 = vmatprep.subr.mxu0 0.0
    %915 = vmatpush1.xpose.msra.mxu0 0.0
    %916 = vmatprep.subr.mxu0 0.0
    %917 = vmatpush1.xpose.msra.mxu0 0.0
    %918 = vmatprep.subr.mxu0 0.0
    %919 = vmatpush1.xpose.msra.mxu0 0.0
    %920 = vmatprep.subr.mxu0 0.0
    %921 = vmatpush1.xpose.msra.mxu0 0.0
    %922 = vmatprep.subr.mxu0 0.0
    %923 = vmatpush1.xpose.msra.mxu0 0.0
    %924 = vmatprep.subr.mxu0 0.0
    %925 = vmatpush1.xpose.msra.mxu0 0.0
    %926 = vmatprep.subr.mxu0 0.0
    %927 = vmatpush1.xpose.msra.mxu0 0.0
    %928 = vmatprep.subr.mxu0 0.0
    %929 = vmatpush1.xpose.msra.mxu0 0.0
    %930 = vmatprep.subr.mxu0 0.0
    %931 = vmatpush1.xpose.msra.mxu0 0.0
    %932 = vmatprep.subr.mxu0 0.0
    %933 = vmatpush1.xpose.msra.mxu0 0.0
    %934 = vmatprep.subr.mxu0 0.0
    %935 = vmatpush1.xpose.msra.mxu0 0.0
    %936 = vmatprep.subr.mxu0 0.0
    %937 = vmatpush1.xpose.msra.mxu0 0.0
    %938 = vmatprep.subr.mxu0 0.0
    %939 = vmatpush1.xpose.msra.mxu0 0.0
    %940 = vmatprep.subr.mxu0 0.0
    %941 = vmatpush1.xpose.msra.mxu0 0.0
    %942 = vmatprep.subr.mxu0 0.0
    %943 = vmatpush1.xpose.msra.mxu0 0.0
    %944 = vmatprep.mubr.f32.mxu0 0.0
    %945 = vmatmul.mubr.f32.gmra.mrb[0].mxu0 %v876
    %v946 = vpop.f32.mrb[0].mxu0
    %v947 = vadd.f32 0.0, %v946
    %v948 = vpop.f32.mrb[0].mxu0
    %949 = vdwg.mxu0
    %950 = vrot.lane.b32.xlu0 %v199, 96
    %v951 = vpop.permute.xlu0 %950
    %952 = vrot.lane.b32.xlu0 %v199, 32
    %v953 = vpop.permute.xlu0 %952
    %v954 = vsel %vm214, %v951, 0
    %v956 = vsel %vm214, %v953, 0
    %958 = vmatprep.subr.mxu0 0.0
    %959 = vmatpush1.xpose.msra.mxu0 %v956
    %960 = vmatprep.subr.mxu0 0.0
    %961 = vmatpush1.xpose.msra.mxu0 0.0
    %962 = vmatprep.subr.mxu0 0.0
    %963 = vmatpush1.xpose.msra.mxu0 0.0
    %964 = vmatprep.subr.mxu0 0.0
    %965 = vmatpush1.xpose.msra.mxu0 0.0
    %966 = vmatprep.subr.mxu0 0.0
    %967 = vmatpush1.xpose.msra.mxu0 0.0
    %968 = vmatprep.subr.mxu0 0.0
    %969 = vmatpush1.xpose.msra.mxu0 0.0
    %970 = vmatprep.subr.mxu0 0.0
    %971 = vmatpush1.xpose.msra.mxu0 0.0
    %972 = vmatprep.subr.mxu0 0.0
    %973 = vmatpush1.xpose.msra.mxu0 0.0
    %974 = vmatprep.subr.mxu0 0.0
    %975 = vmatpush1.xpose.msra.mxu0 0.0
    %976 = vmatprep.subr.mxu0 0.0
    %977 = vmatpush1.xpose.msra.mxu0 0.0
    %978 = vmatprep.subr.mxu0 0.0
    %979 = vmatpush1.xpose.msra.mxu0 0.0
    %980 = vmatprep.subr.mxu0 0.0
    %981 = vmatpush1.xpose.msra.mxu0 0.0
    %982 = vmatprep.subr.mxu0 0.0
    %983 = vmatpush1.xpose.msra.mxu0 0.0
    %984 = vmatprep.subr.mxu0 0.0
    %985 = vmatpush1.xpose.msra.mxu0 0.0
    %986 = vmatprep.subr.mxu0 0.0
    %987 = vmatpush1.xpose.msra.mxu0 0.0
    %988 = vmatprep.subr.mxu0 0.0
    %989 = vmatpush1.xpose.msra.mxu0 0.0
    %990 = vmatprep.subr.mxu0 0.0
    %991 = vmatpush1.xpose.msra.mxu0 0.0
    %992 = vmatprep.subr.mxu0 0.0
    %993 = vmatpush1.xpose.msra.mxu0 0.0
    %994 = vmatprep.subr.mxu0 0.0
    %995 = vmatpush1.xpose.msra.mxu0 0.0
    %996 = vmatprep.subr.mxu0 0.0
    %997 = vmatpush1.xpose.msra.mxu0 0.0
    %998 = vmatprep.subr.mxu0 0.0
    %999 = vmatpush1.xpose.msra.mxu0 0.0
    %1000 = vmatprep.subr.mxu0 0.0
    %1001 = vmatpush1.xpose.msra.mxu0 0.0
    %1002 = vmatprep.subr.mxu0 0.0
    %1003 = vmatpush1.xpose.msra.mxu0 0.0
    %1004 = vmatprep.subr.mxu0 0.0
    %1005 = vmatpush1.xpose.msra.mxu0 0.0
    %1006 = vmatprep.subr.mxu0 0.0
    %1007 = vmatpush1.xpose.msra.mxu0 0.0
    %1008 = vmatprep.subr.mxu0 0.0
    %1009 = vmatpush1.xpose.msra.mxu0 0.0
    %1010 = vmatprep.subr.mxu0 0.0
    %1011 = vmatpush1.xpose.msra.mxu0 0.0
    %1012 = vmatprep.subr.mxu0 0.0
    %1013 = vmatpush1.xpose.msra.mxu0 0.0
    %1014 = vmatprep.subr.mxu0 0.0
    %1015 = vmatpush1.xpose.msra.mxu0 0.0
    %1016 = vmatprep.subr.mxu0 0.0
    %1017 = vmatpush1.xpose.msra.mxu0 0.0
    %1018 = vmatprep.subr.mxu0 0.0
    %1019 = vmatpush1.xpose.msra.mxu0 0.0
    %1020 = vmatprep.subr.mxu0 0.0
    %1021 = vmatpush1.xpose.msra.mxu0 0.0
    %1022 = vmatprep.mubr.f32.mxu0 0.0
    %1023 = vmatmul.mubr.f32.gmra.mrb[0].mxu0 %v954
    %v1024 = vpop.f32.mrb[0].mxu0
    %v1025 = vadd.f32 0.0, %v1024
    %v1026 = vpop.f32.mrb[0].mxu0
    %1027 = vdwg.mxu0
    %v1028 = vsel %vm367, %v947, -1e+30
    %v1029 = vsel %vm367, %v1025, -1e+30
    %v1030 = vsel %vm370, %v1028, -inf
    %1031 = vmax.xlane.f32.xlu0 %v1030
    %v1032 = vpop.xlane.xlu0 %1031
    %v1033 = vsel %vm370, %v1029, -inf
    %1034 = vmax.xlane.f32.xlu0 %v1033
    %v1035 = vpop.xlane.xlu0 %1034
    %v1036 = vsub.f32 %v1028, %v1032
    %v1037 = vsub.f32 %v1029, %v1035
    %v1038 = vmul.f32 %v1036, 1.442695
    %v1039 = vpow.pop %v1038
    %v1040 = vmul.f32 %v1037, 1.442695
    %v1041 = vpow.pop %v1040
    %v1042 = vsel %vm370, %v1039, 0.0
    %1043 = vadd.xlane.f32.xlu0 %v1042
    %v1044 = vpop.xlane.xlu0 %1043
    %v1045 = vsel %vm370, %v1041, 0.0
    %1046 = vadd.xlane.f32.xlu0 %v1045
    %v1047 = vpop.xlane.xlu0 %1046
    %v1048 = vrcp.pop %v1044
    %v1049 = vrcp.pop %v1047
    %v1050 = vmul.f32 %v1039, %v1048
    %v1051 = vmul.f32 %v1041, %v1049
    %v1052 = vpack.c.bf16 %v1050, %v1050
    %v1053 = vpack.c.bf16 %v1051, %v1051
    %1054 = vrot.lane.b32.xlu0 %v395, 96
    %v1055 = vpop.permute.xlu0 %1054
    %v1057 = vsel %vm370, %v1052, 0
    %v1060 = vsel %vm400, %v1055, 0
    %1062 = vmatprep.subr.bf16.mxu0 0
    %1063 = vmatpush1.bf16.msra.mxu0 %v1060
    %1064 = vmatprep.subr.bf16.mxu0 0
    %1065 = vmatpush1.bf16.msra.mxu0 0
    %1066 = vmatprep.subr.bf16.mxu0 0
    %1067 = vmatpush1.bf16.msra.mxu0 0
    %1068 = vmatprep.subr.bf16.mxu0 0
    %1069 = vmatpush1.bf16.msra.mxu0 0
    %1070 = vmatprep.subr.bf16.mxu0 0
    %1071 = vmatpush1.bf16.msra.mxu0 0
    %1072 = vmatprep.subr.bf16.mxu0 0
    %1073 = vmatpush1.bf16.msra.mxu0 0
    %1074 = vmatprep.subr.bf16.mxu0 0
    %1075 = vmatpush1.bf16.msra.mxu0 0
    %1076 = vmatprep.subr.bf16.mxu0 0
    %1077 = vmatpush1.bf16.msra.mxu0 0
    %1078 = vmatprep.subr.bf16.mxu0 0
    %1079 = vmatpush1.bf16.msra.mxu0 0
    %1080 = vmatprep.subr.bf16.mxu0 0
    %1081 = vmatpush1.bf16.msra.mxu0 0
    %1082 = vmatprep.subr.bf16.mxu0 0
    %1083 = vmatpush1.bf16.msra.mxu0 0
    %1084 = vmatprep.subr.bf16.mxu0 0
    %1085 = vmatpush1.bf16.msra.mxu0 0
    %1086 = vmatprep.subr.bf16.mxu0 0
    %1087 = vmatpush1.bf16.msra.mxu0 0
    %1088 = vmatprep.subr.bf16.mxu0 0
    %1089 = vmatpush1.bf16.msra.mxu0 0
    %1090 = vmatprep.subr.bf16.mxu0 0
    %1091 = vmatpush1.bf16.msra.mxu0 0
    %1092 = vmatprep.subr.bf16.mxu0 0
    %1093 = vmatpush1.bf16.msra.mxu0 0
    %1094 = vmatprep.mubr.bf16.mxu0 0
    %1095 = vmatmul.mubr.bf16.gmra.mrb[0].mxu0 %v1057
    %v1096 = vpop.f32.mrb[0].mxu0
    %v1097 = vadd.f32 0.0, %v1096
    %v1098 = vpop.f32.mrb[0].mxu0
    %v1099 = vpop.f32.mrb[0].mxu0
    %v1100 = vpop.f32.mrb[0].mxu0
    %1101 = vdwg.mxu0
    %1102 = vrot.lane.b32.xlu0 %v396, 96
    %v1103 = vpop.permute.xlu0 %1102
    %v1105 = vsel %vm370, %v1053, 0
    %v1108 = vsel %vm400, %v1103, 0
    %1110 = vmatprep.subr.bf16.mxu0 0
    %1111 = vmatpush1.bf16.msra.mxu0 %v1108
    %1112 = vmatprep.subr.bf16.mxu0 0
    %1113 = vmatpush1.bf16.msra.mxu0 0
    %1114 = vmatprep.subr.bf16.mxu0 0
    %1115 = vmatpush1.bf16.msra.mxu0 0
    %1116 = vmatprep.subr.bf16.mxu0 0
    %1117 = vmatpush1.bf16.msra.mxu0 0
    %1118 = vmatprep.subr.bf16.mxu0 0
    %1119 = vmatpush1.bf16.msra.mxu0 0
    %1120 = vmatprep.subr.bf16.mxu0 0
    %1121 = vmatpush1.bf16.msra.mxu0 0
    %1122 = vmatprep.subr.bf16.mxu0 0
    %1123 = vmatpush1.bf16.msra.mxu0 0
    %1124 = vmatprep.subr.bf16.mxu0 0
    %1125 = vmatpush1.bf16.msra.mxu0 0
    %1126 = vmatprep.subr.bf16.mxu0 0
    %1127 = vmatpush1.bf16.msra.mxu0 0
    %1128 = vmatprep.subr.bf16.mxu0 0
    %1129 = vmatpush1.bf16.msra.mxu0 0
    %1130 = vmatprep.subr.bf16.mxu0 0
    %1131 = vmatpush1.bf16.msra.mxu0 0
    %1132 = vmatprep.subr.bf16.mxu0 0
    %1133 = vmatpush1.bf16.msra.mxu0 0
    %1134 = vmatprep.subr.bf16.mxu0 0
    %1135 = vmatpush1.bf16.msra.mxu0 0
    %1136 = vmatprep.subr.bf16.mxu0 0
    %1137 = vmatpush1.bf16.msra.mxu0 0
    %1138 = vmatprep.subr.bf16.mxu0 0
    %1139 = vmatpush1.bf16.msra.mxu0 0
    %1140 = vmatprep.subr.bf16.mxu0 0
    %1141 = vmatpush1.bf16.msra.mxu0 0
    %1142 = vmatprep.mubr.bf16.mxu0 0
    %1143 = vmatmul.mubr.bf16.gmra.mrb[0].mxu0 %v1105
    %v1144 = vpop.f32.mrb[0].mxu0
    %v1145 = vadd.f32 0.0, %v1144
    %v1146 = vpop.f32.mrb[0].mxu0
    %v1147 = vpop.f32.mrb[0].mxu0
    %v1148 = vpop.f32.mrb[0].mxu0
    %1149 = vdwg.mxu0
    %v1150 = vpack.c.bf16 %v1145, %v1097
    %v1153 = vunpack.c.l.b16 %v207
    %v1154 = vunpack.c.l.b16 %v208
    %v1155 = vpack.c.b16 %v1154, %v1153
    %v1158 = vsel %vm214, %v1150, 0
    %1160 = vmatprep.subr.bf16.mxu0 0
    %1161 = vmatpush1.bf16.msra.mxu0 %v1155
    %1162 = vmatprep.subr.bf16.mxu0 0
    %1163 = vmatpush1.bf16.msra.mxu0 0
    %1164 = vmatprep.subr.bf16.mxu0 0
    %1165 = vmatpush1.bf16.msra.mxu0 0
    %1166 = vmatprep.subr.bf16.mxu0 0
    %1167 = vmatpush1.bf16.msra.mxu0 0
    %1168 = vmatprep.subr.bf16.mxu0 0
    %1169 = vmatpush1.bf16.msra.mxu0 0
    %1170 = vmatprep.subr.bf16.mxu0 0
    %1171 = vmatpush1.bf16.msra.mxu0 0
    %1172 = vmatprep.subr.bf16.mxu0 0
    %1173 = vmatpush1.bf16.msra.mxu0 0
    %1174 = vmatprep.subr.bf16.mxu0 0
    %1175 = vmatpush1.bf16.msra.mxu0 0
    %1176 = vmatprep.subr.bf16.mxu0 0
    %1177 = vmatpush1.bf16.msra.mxu0 0
    %1178 = vmatprep.subr.bf16.mxu0 0
    %1179 = vmatpush1.bf16.msra.mxu0 0
    %1180 = vmatprep.subr.bf16.mxu0 0
    %1181 = vmatpush1.bf16.msra.mxu0 0
    %1182 = vmatprep.subr.bf16.mxu0 0
    %1183 = vmatpush1.bf16.msra.mxu0 0
    %1184 = vmatprep.subr.bf16.mxu0 0
    %1185 = vmatpush1.bf16.msra.mxu0 0
    %1186 = vmatprep.subr.bf16.mxu0 0
    %1187 = vmatpush1.bf16.msra.mxu0 0
    %1188 = vmatprep.subr.bf16.mxu0 0
    %1189 = vmatpush1.bf16.msra.mxu0 0
    %1190 = vmatprep.subr.bf16.mxu0 0
    %1191 = vmatpush1.bf16.msra.mxu0 0
    %1192 = vmatprep.mubr.bf16.mxu0 0
    %1193 = vmatmul.mubr.bf16.gmra.mrb[0].mxu0 %v1158
    %v1194 = vpop.f32.mrb[0].mxu0
    %v1195 = vadd.f32 0.0, %v1194
    %v1196 = vpop.f32.mrb[0].mxu0
    %v1197 = vpop.f32.mrb[0].mxu0
    %v1198 = vadd.f32 0.0, %v1197
    %v1199 = vpop.f32.mrb[0].mxu0
    %1200 = vdwg.mxu0
    %v1201 = vadd.f32 %v866, %v1195
    %v1202 = vadd.f32 %v869, %v1198
    %1203 = vrot.lane.b32.xlu0 %v195, 80
    %v1204 = vpop.permute.xlu0 %1203
    %1205 = vrot.lane.b32.xlu0 %v195, 16
    %v1206 = vpop.permute.xlu0 %1205
    %v1207 = vsel %vm214, %v1204, 0
    %v1209 = vsel %vm214, %v1206, 0
    %1211 = vmatprep.subr.mxu0 0.0
    %1212 = vmatpush1.xpose.msra.mxu0 %v1209
    %1213 = vmatprep.subr.mxu0 0.0
    %1214 = vmatpush1.xpose.msra.mxu0 0.0
    %1215 = vmatprep.subr.mxu0 0.0
    %1216 = vmatpush1.xpose.msra.mxu0 0.0
    %1217 = vmatprep.subr.mxu0 0.0
    %1218 = vmatpush1.xpose.msra.mxu0 0.0
    %1219 = vmatprep.subr.mxu0 0.0
    %1220 = vmatpush1.xpose.msra.mxu0 0.0
    %1221 = vmatprep.subr.mxu0 0.0
    %1222 = vmatpush1.xpose.msra.mxu0 0.0
    %1223 = vmatprep.subr.mxu0 0.0
    %1224 = vmatpush1.xpose.msra.mxu0 0.0
    %1225 = vmatprep.subr.mxu0 0.0
    %1226 = vmatpush1.xpose.msra.mxu0 0.0
    %1227 = vmatprep.subr.mxu0 0.0
    %1228 = vmatpush1.xpose.msra.mxu0 0.0
    %1229 = vmatprep.subr.mxu0 0.0
    %1230 = vmatpush1.xpose.msra.mxu0 0.0
    %1231 = vmatprep.subr.mxu0 0.0
    %1232 = vmatpush1.xpose.msra.mxu0 0.0
    %1233 = vmatprep.subr.mxu0 0.0
    %1234 = vmatpush1.xpose.msra.mxu0 0.0
    %1235 = vmatprep.subr.mxu0 0.0
    %1236 = vmatpush1.xpose.msra.mxu0 0.0
    %1237 = vmatprep.subr.mxu0 0.0
    %1238 = vmatpush1.xpose.msra.mxu0 0.0
    %1239 = vmatprep.subr.mxu0 0.0
    %1240 = vmatpush1.xpose.msra.mxu0 0.0
    %1241 = vmatprep.subr.mxu0 0.0
    %1242 = vmatpush1.xpose.msra.mxu0 0.0
    %1243 = vmatprep.subr.mxu0 0.0
    %1244 = vmatpush1.xpose.msra.mxu0 0.0
    %1245 = vmatprep.subr.mxu0 0.0
    %1246 = vmatpush1.xpose.msra.mxu0 0.0
    %1247 = vmatprep.subr.mxu0 0.0
    %1248 = vmatpush1.xpose.msra.mxu0 0.0
    %1249 = vmatprep.subr.mxu0 0.0
    %1250 = vmatpush1.xpose.msra.mxu0 0.0
    %1251 = vmatprep.subr.mxu0 0.0
    %1252 = vmatpush1.xpose.msra.mxu0 0.0
    %1253 = vmatprep.subr.mxu0 0.0
    %1254 = vmatpush1.xpose.msra.mxu0 0.0
    %1255 = vmatprep.subr.mxu0 0.0
    %1256 = vmatpush1.xpose.msra.mxu0 0.0
    %1257 = vmatprep.subr.mxu0 0.0
    %1258 = vmatpush1.xpose.msra.mxu0 0.0
    %1259 = vmatprep.subr.mxu0 0.0
    %1260 = vmatpush1.xpose.msra.mxu0 0.0
    %1261 = vmatprep.subr.mxu0 0.0
    %1262 = vmatpush1.xpose.msra.mxu0 0.0
    %1263 = vmatprep.subr.mxu0 0.0
    %1264 = vmatpush1.xpose.msra.mxu0 0.0
    %1265 = vmatprep.subr.mxu0 0.0
    %1266 = vmatpush1.xpose.msra.mxu0 0.0
    %1267 = vmatprep.subr.mxu0 0.0
    %1268 = vmatpush1.xpose.msra.mxu0 0.0
    %1269 = vmatprep.subr.mxu0 0.0
    %1270 = vmatpush1.xpose.msra.mxu0 0.0
    %1271 = vmatprep.subr.mxu0 0.0
    %1272 = vmatpush1.xpose.msra.mxu0 0.0
    %1273 = vmatprep.subr.mxu0 0.0
    %1274 = vmatpush1.xpose.msra.mxu0 0.0
    %1275 = vmatprep.mubr.f32.mxu0 0.0
    %1276 = vmatmul.mubr.f32.gmra.mrb[0].mxu0 %v1207
    %v1277 = vpop.f32.mrb[0].mxu0
    %v1278 = vadd.f32 0.0, %v1277
    %v1279 = vpop.f32.mrb[0].mxu0
    %1280 = vdwg.mxu0
    %1281 = vrot.lane.b32.xlu0 %v199, 80
    %v1282 = vpop.permute.xlu0 %1281
    %1283 = vrot.lane.b32.xlu0 %v199, 16
    %v1284 = vpop.permute.xlu0 %1283
    %v1285 = vsel %vm214, %v1282, 0
    %v1287 = vsel %vm214, %v1284, 0
    %1289 = vmatprep.subr.mxu0 0.0
    %1290 = vmatpush1.xpose.msra.mxu0 %v1287
    %1291 = vmatprep.subr.mxu0 0.0
    %1292 = vmatpush1.xpose.msra.mxu0 0.0
    %1293 = vmatprep.subr.mxu0 0.0
    %1294 = vmatpush1.xpose.msra.mxu0 0.0
    %1295 = vmatprep.subr.mxu0 0.0
    %1296 = vmatpush1.xpose.msra.mxu0 0.0
    %1297 = vmatprep.subr.mxu0 0.0
    %1298 = vmatpush1.xpose.msra.mxu0 0.0
    %1299 = vmatprep.subr.mxu0 0.0
    %1300 = vmatpush1.xpose.msra.mxu0 0.0
    %1301 = vmatprep.subr.mxu0 0.0
    %1302 = vmatpush1.xpose.msra.mxu0 0.0
    %1303 = vmatprep.subr.mxu0 0.0
    %1304 = vmatpush1.xpose.msra.mxu0 0.0
    %1305 = vmatprep.subr.mxu0 0.0
    %1306 = vmatpush1.xpose.msra.mxu0 0.0
    %1307 = vmatprep.subr.mxu0 0.0
    %1308 = vmatpush1.xpose.msra.mxu0 0.0
    %1309 = vmatprep.subr.mxu0 0.0
    %1310 = vmatpush1.xpose.msra.mxu0 0.0
    %1311 = vmatprep.subr.mxu0 0.0
    %1312 = vmatpush1.xpose.msra.mxu0 0.0
    %1313 = vmatprep.subr.mxu0 0.0
    %1314 = vmatpush1.xpose.msra.mxu0 0.0
    %1315 = vmatprep.subr.mxu0 0.0
    %1316 = vmatpush1.xpose.msra.mxu0 0.0
    %1317 = vmatprep.subr.mxu0 0.0
    %1318 = vmatpush1.xpose.msra.mxu0 0.0
    %1319 = vmatprep.subr.mxu0 0.0
    %1320 = vmatpush1.xpose.msra.mxu0 0.0
    %1321 = vmatprep.subr.mxu0 0.0
    %1322 = vmatpush1.xpose.msra.mxu0 0.0
    %1323 = vmatprep.subr.mxu0 0.0
    %1324 = vmatpush1.xpose.msra.mxu0 0.0
    %1325 = vmatprep.subr.mxu0 0.0
    %1326 = vmatpush1.xpose.msra.mxu0 0.0
    %1327 = vmatprep.subr.mxu0 0.0
    %1328 = vmatpush1.xpose.msra.mxu0 0.0
    %1329 = vmatprep.subr.mxu0 0.0
    %1330 = vmatpush1.xpose.msra.mxu0 0.0
    %1331 = vmatprep.subr.mxu0 0.0
    %1332 = vmatpush1.xpose.msra.mxu0 0.0
    %1333 = vmatprep.subr.mxu0 0.0
    %1334 = vmatpush1.xpose.msra.mxu0 0.0
    %1335 = vmatprep.subr.mxu0 0.0
    %1336 = vmatpush1.xpose.msra.mxu0 0.0
    %1337 = vmatprep.subr.mxu0 0.0
    %1338 = vmatpush1.xpose.msra.mxu0 0.0
    %1339 = vmatprep.subr.mxu0 0.0
    %1340 = vmatpush1.xpose.msra.mxu0 0.0
    %1341 = vmatprep.subr.mxu0 0.0
    %1342 = vmatpush1.xpose.msra.mxu0 0.0
    %1343 = vmatprep.subr.mxu0 0.0
    %1344 = vmatpush1.xpose.msra.mxu0 0.0
    %1345 = vmatprep.subr.mxu0 0.0
    %1346 = vmatpush1.xpose.msra.mxu0 0.0
    %1347 = vmatprep.subr.mxu0 0.0
    %1348 = vmatpush1.xpose.msra.mxu0 0.0
    %1349 = vmatprep.subr.mxu0 0.0
    %1350 = vmatpush1.xpose.msra.mxu0 0.0
    %1351 = vmatprep.subr.mxu0 0.0
    %1352 = vmatpush1.xpose.msra.mxu0 0.0
    %1353 = vmatprep.mubr.f32.mxu0 0.0
    %1354 = vmatmul.mubr.f32.gmra.mrb[0].mxu0 %v1285
    %v1355 = vpop.f32.mrb[0].mxu0
    %v1356 = vadd.f32 0.0, %v1355
    %v1357 = vpop.f32.mrb[0].mxu0
    %1358 = vdwg.mxu0
    %v1359 = vsel %vm367, %v1278, -1e+30
    %v1360 = vsel %vm367, %v1356, -1e+30
    %v1361 = vsel %vm370, %v1359, -inf
    %1362 = vmax.xlane.f32.xlu0 %v1361
    %v1363 = vpop.xlane.xlu0 %1362
    %v1364 = vsel %vm370, %v1360, -inf
    %1365 = vmax.xlane.f32.xlu0 %v1364
    %v1366 = vpop.xlane.xlu0 %1365
    %v1367 = vsub.f32 %v1359, %v1363
    %v1368 = vsub.f32 %v1360, %v1366
    %v1369 = vmul.f32 %v1367, 1.442695
    %v1370 = vpow.pop %v1369
    %v1371 = vmul.f32 %v1368, 1.442695
    %v1372 = vpow.pop %v1371
    %v1373 = vsel %vm370, %v1370, 0.0
    %1374 = vadd.xlane.f32.xlu0 %v1373
    %v1375 = vpop.xlane.xlu0 %1374
    %v1376 = vsel %vm370, %v1372, 0.0
    %1377 = vadd.xlane.f32.xlu0 %v1376
    %v1378 = vpop.xlane.xlu0 %1377
    %v1379 = vrcp.pop %v1375
    %v1380 = vrcp.pop %v1378
    %v1381 = vmul.f32 %v1370, %v1379
    %v1382 = vmul.f32 %v1372, %v1380
    %v1383 = vpack.c.bf16 %v1381, %v1381
    %v1384 = vpack.c.bf16 %v1382, %v1382
    %1385 = vrot.lane.b32.xlu0 %v395, 80
    %v1386 = vpop.permute.xlu0 %1385
    %v1388 = vsel %vm370, %v1383, 0
    %v1391 = vsel %vm400, %v1386, 0
    %1393 = vmatprep.subr.bf16.mxu0 0
    %1394 = vmatpush1.bf16.msra.mxu0 %v1391
    %1395 = vmatprep.subr.bf16.mxu0 0
    %1396 = vmatpush1.bf16.msra.mxu0 0
    %1397 = vmatprep.subr.bf16.mxu0 0
    %1398 = vmatpush1.bf16.msra.mxu0 0
    %1399 = vmatprep.subr.bf16.mxu0 0
    %1400 = vmatpush1.bf16.msra.mxu0 0
    %1401 = vmatprep.subr.bf16.mxu0 0
    %1402 = vmatpush1.bf16.msra.mxu0 0
    %1403 = vmatprep.subr.bf16.mxu0 0
    %1404 = vmatpush1.bf16.msra.mxu0 0
    %1405 = vmatprep.subr.bf16.mxu0 0
    %1406 = vmatpush1.bf16.msra.mxu0 0
    %1407 = vmatprep.subr.bf16.mxu0 0
    %1408 = vmatpush1.bf16.msra.mxu0 0
    %1409 = vmatprep.subr.bf16.mxu0 0
    %1410 = vmatpush1.bf16.msra.mxu0 0
    %1411 = vmatprep.subr.bf16.mxu0 0
    %1412 = vmatpush1.bf16.msra.mxu0 0
    %1413 = vmatprep.subr.bf16.mxu0 0
    %1414 = vmatpush1.bf16.msra.mxu0 0
    %1415 = vmatprep.subr.bf16.mxu0 0
    %1416 = vmatpush1.bf16.msra.mxu0 0
    %1417 = vmatprep.subr.bf16.mxu0 0
    %1418 = vmatpush1.bf16.msra.mxu0 0
    %1419 = vmatprep.subr.bf16.mxu0 0
    %1420 = vmatpush1.bf16.msra.mxu0 0
    %1421 = vmatprep.subr.bf16.mxu0 0
    %1422 = vmatpush1.bf16.msra.mxu0 0
    %1423 = vmatprep.subr.bf16.mxu0 0
    %1424 = vmatpush1.bf16.msra.mxu0 0
    %1425 = vmatprep.mubr.bf16.mxu0 0
    %1426 = vmatmul.mubr.bf16.gmra.mrb[0].mxu0 %v1388
    %v1427 = vpop.f32.mrb[0].mxu0
    %v1428 = vadd.f32 0.0, %v1427
    %v1429 = vpop.f32.mrb[0].mxu0
    %v1430 = vpop.f32.mrb[0].mxu0
    %v1431 = vpop.f32.mrb[0].mxu0
    %1432 = vdwg.mxu0
    %1433 = vrot.lane.b32.xlu0 %v396, 80
    %v1434 = vpop.permute.xlu0 %1433
    %v1436 = vsel %vm370, %v1384, 0
    %v1439 = vsel %vm400, %v1434, 0
    %1441 = vmatprep.subr.bf16.mxu0 0
    %1442 = vmatpush1.bf16.msra.mxu0 %v1439
    %1443 = vmatprep.subr.bf16.mxu0 0
    %1444 = vmatpush1.bf16.msra.mxu0 0
    %1445 = vmatprep.subr.bf16.mxu0 0
    %1446 = vmatpush1.bf16.msra.mxu0 0
    %1447 = vmatprep.subr.bf16.mxu0 0
    %1448 = vmatpush1.bf16.msra.mxu0 0
    %1449 = vmatprep.subr.bf16.mxu0 0
    %1450 = vmatpush1.bf16.msra.mxu0 0
    %1451 = vmatprep.subr.bf16.mxu0 0
    %1452 = vmatpush1.bf16.msra.mxu0 0
    %1453 = vmatprep.subr.bf16.mxu0 0
    %1454 = vmatpush1.bf16.msra.mxu0 0
    %1455 = vmatprep.subr.bf16.mxu0 0
    %1456 = vmatpush1.bf16.msra.mxu0 0
    %1457 = vmatprep.subr.bf16.mxu0 0
    %1458 = vmatpush1.bf16.msra.mxu0 0
    %1459 = vmatprep.subr.bf16.mxu0 0
    %1460 = vmatpush1.bf16.msra.mxu0 0
    %1461 = vmatprep.subr.bf16.mxu0 0
    %1462 = vmatpush1.bf16.msra.mxu0 0
    %1463 = vmatprep.subr.bf16.mxu0 0
    %1464 = vmatpush1.bf16.msra.mxu0 0
    %1465 = vmatprep.subr.bf16.mxu0 0
    %1466 = vmatpush1.bf16.msra.mxu0 0
    %1467 = vmatprep.subr.bf16.mxu0 0
    %1468 = vmatpush1.bf16.msra.mxu0 0
    %1469 = vmatprep.subr.bf16.mxu0 0
    %1470 = vmatpush1.bf16.msra.mxu0 0
    %1471 = vmatprep.subr.bf16.mxu0 0
    %1472 = vmatpush1.bf16.msra.mxu0 0
    %1473 = vmatprep.mubr.bf16.mxu0 0
    %1474 = vmatmul.mubr.bf16.gmra.mrb[0].mxu0 %v1436
    %v1475 = vpop.f32.mrb[0].mxu0
    %v1476 = vadd.f32 0.0, %v1475
    %v1477 = vpop.f32.mrb[0].mxu0
    %v1478 = vpop.f32.mrb[0].mxu0
    %v1479 = vpop.f32.mrb[0].mxu0
    %1480 = vdwg.mxu0
    %v1481 = vpack.c.bf16 %v1476, %v1428
    %v1484 = vunpack.c.l.b16 %v209
    %v1485 = vunpack.c.l.b16 %v210
    %v1486 = vpack.c.b16 %v1485, %v1484
    %v1489 = vsel %vm214, %v1481, 0
    %1491 = vmatprep.subr.bf16.mxu0 0
    %1492 = vmatpush1.bf16.msra.mxu0 %v1486
    %1493 = vmatprep.subr.bf16.mxu0 0
    %1494 = vmatpush1.bf16.msra.mxu0 0
    %1495 = vmatprep.subr.bf16.mxu0 0
    %1496 = vmatpush1.bf16.msra.mxu0 0
    %1497 = vmatprep.subr.bf16.mxu0 0
    %1498 = vmatpush1.bf16.msra.mxu0 0
    %1499 = vmatprep.subr.bf16.mxu0 0
    %1500 = vmatpush1.bf16.msra.mxu0 0
    %1501 = vmatprep.subr.bf16.mxu0 0
    %1502 = vmatpush1.bf16.msra.mxu0 0
    %1503 = vmatprep.subr.bf16.mxu0 0
    %1504 = vmatpush1.bf16.msra.mxu0 0
    %1505 = vmatprep.subr.bf16.mxu0 0
    %1506 = vmatpush1.bf16.msra.mxu0 0
    %1507 = vmatprep.subr.bf16.mxu0 0
    %1508 = vmatpush1.bf16.msra.mxu0 0
    %1509 = vmatprep.subr.bf16.mxu0 0
    %1510 = vmatpush1.bf16.msra.mxu0 0
    %1511 = vmatprep.subr.bf16.mxu0 0
    %1512 = vmatpush1.bf16.msra.mxu0 0
    %1513 = vmatprep.subr.bf16.mxu0 0
    %1514 = vmatpush1.bf16.msra.mxu0 0
    %1515 = vmatprep.subr.bf16.mxu0 0
    %1516 = vmatpush1.bf16.msra.mxu0 0
    %1517 = vmatprep.subr.bf16.mxu0 0
    %1518 = vmatpush1.bf16.msra.mxu0 0
    %1519 = vmatprep.subr.bf16.mxu0 0
    %1520 = vmatpush1.bf16.msra.mxu0 0
    %1521 = vmatprep.subr.bf16.mxu0 0
    %1522 = vmatpush1.bf16.msra.mxu0 0
    %1523 = vmatprep.mubr.bf16.mxu0 0
    %1524 = vmatmul.mubr.bf16.gmra.mrb[0].mxu0 %v1489
    %v1525 = vpop.f32.mrb[0].mxu0
    %v1526 = vadd.f32 0.0, %v1525
    %v1527 = vpop.f32.mrb[0].mxu0
    %v1528 = vpop.f32.mrb[0].mxu0
    %v1529 = vadd.f32 0.0, %v1528
    %v1530 = vpop.f32.mrb[0].mxu0
    %1531 = vdwg.mxu0
    %v1532 = vadd.f32 %v1201, %v1526
    %v1533 = vadd.f32 %v1202, %v1529
    %v1534 = vadd.f32 %v55, %v1532
    %v1535 = vadd.f32 %v56, %v1533
    %v1536 = vld [vmem:[%s5] sm:$0x1]
    %v1538 = vlaneseq
    %v1539 = vshrl.u32 %v1538, 7
    %v1540 = vsub.s32 0, %v1539
    %v1541 = vrot.slane %v1536, %v1540
    %v1543 = vadd.f32 %v1534, %v1541
    %v1544 = vadd.f32 %v1535, %v1541
    %v1545 = vld [vmem:[%s6] sm:$0x1]
    %v1546 = vld [vmem:[%s7] sm:$0x1]
    %v1547 = vsel %vm64, %v1543, 0.0
    %1548 = vadd.xlane.f32.xlu0 %v1547
    %v1549 = vpop.xlane.xlu0 %1548
    %v1550 = vsel %vm64, %v1544, 0.0
    %1551 = vadd.xlane.f32.xlu0 %v1550
    %v1552 = vpop.xlane.xlu0 %1551
    %v1553 = vmul.f32 %v1549, %v71
    %v1554 = vmul.f32 %v1552, %v71
    %v1555 = vsub.f32 %v1543, %v1553
    %v1556 = vsub.f32 %v1544, %v1554
    %v1557 = vmul.f32 %v1555, %v1555
    %v1558 = vmul.f32 %v1556, %v1556
    %v1559 = vsel %vm64, %v1557, 0.0
    %1560 = vadd.xlane.f32.xlu0 %v1559
    %v1561 = vpop.xlane.xlu0 %1560
    %v1562 = vsel %vm64, %v1558, 0.0
    %1563 = vadd.xlane.f32.xlu0 %v1562
    %v1564 = vpop.xlane.xlu0 %1563
    %v1565 = vmul.f32 %v1561, %v71
    %v1566 = vmul.f32 %v1564, %v71
    %v1567 = vadd.f32 %v1565, 1e-05
    %v1568 = vadd.f32 %v1566, 1e-05
    %v1569 = vrsqrt.pop %v1567
    %v1570 = vrsqrt.pop %v1568
    %v1571 = vmul.f32 %v1555, %v1569
    %v1572 = vmul.f32 %v1556, %v1570
    %v1574 = vlaneseq
    %v1575 = vshrl.u32 %v1574, 7
    %v1576 = vsub.s32 0, %v1575
    %v1577 = vrot.slane %v1545, %v1576
    %v1579 = vmul.f32 %v1571, %v1577
    %v1580 = vmul.f32 %v1572, %v1577
    %v1582 = vlaneseq
    %v1583 = vshrl.u32 %v1582, 7
    %v1584 = vsub.s32 0, %v1583
    %v1585 = vrot.slane %v1546, %v1584
    %v1587 = vadd.f32 %v1579, %v1585
    %v1588 = vadd.f32 %v1580, %v1585
    %v1589 = vpack.c.bf16 %v1588, %v1587
    %v1590 = vld [vmem:[%s8] sm:$0xff]
    %v1591 = vld [vmem:[%s8 + $0x8] sm:$0xff]
    %v1592 = vld [vmem:[%s8 + $0x10] sm:$0xff]
    %v1593 = vld [vmem:[%s8 + $0x18] sm:$0xff]
    %v1594 = vld [vmem:[%s8 + $0x20] sm:$0xff]
    %v1595 = vld [vmem:[%s8 + $0x28] sm:$0xff]
    %v1596 = vld [vmem:[%s8 + $0x30] sm:$0xff]
    %v1597 = vld [vmem:[%s8 + $0x38] sm:$0xff]
    %v1598 = vld [vmem:[%s9] sm:$0x3]
    %v1600 = vlaneseq
    %v1601 = vshrl.u32 %v1600, 7
    %v1602 = vsub.s32 0, %v1601
    %v1603 = vrot.slane %v1598, %v1602
    %v1604 = vlaneseq
    %v1605 = vshrl.u32 %v1604, 7
    %v1606 = vsub.s32 1, %v1605
    %v1607 = vrot.slane %v1598, %v1606
    %v1618 = vunpack.c.l.b16 %v1590
    %v1619 = vunpack.c.h.b16 %v1590
    %v1620 = vunpack.c.l.b16 %v1591
    %v1621 = vunpack.c.h.b16 %v1591
    %v1622 = vunpack.c.l.b16 %v1592
    %v1623 = vunpack.c.h.b16 %v1592
    %v1624 = vunpack.c.l.b16 %v1593
    %v1625 = vunpack.c.h.b16 %v1593
    %v1626 = vunpack.c.l.b16 %v1594
    %v1627 = vunpack.c.h.b16 %v1594
    %v1628 = vunpack.c.l.b16 %v1595
    %v1629 = vunpack.c.h.b16 %v1595
    %v1630 = vunpack.c.l.b16 %v1596
    %v1631 = vunpack.c.h.b16 %v1596
    %v1632 = vunpack.c.l.b16 %v1597
    %v1633 = vunpack.c.h.b16 %v1597
    %v1634 = vpack.c.b16 %v1620, %v1618
    %v1635 = vpack.c.b16 %v1621, %v1619
    %v1636 = vpack.c.b16 %v1624, %v1622
    %v1637 = vpack.c.b16 %v1625, %v1623
    %v1638 = vpack.c.b16 %v1628, %v1626
    %v1639 = vpack.c.b16 %v1629, %v1627
    %v1640 = vpack.c.b16 %v1632, %v1630
    %v1641 = vpack.c.b16 %v1633, %v1631
    %v1651 = vsel %vm64, %v1589, 0
    %1653 = vmatprep.subr.bf16.mxu0 %v1635
    %1654 = vmatpush1.bf16.msra.mxu0 %v1634
    %1655 = vmatprep.subr.bf16.mxu0 %v1637
    %1656 = vmatpush1.bf16.msra.mxu0 %v1636
    %1657 = vmatprep.subr.bf16.mxu0 %v1639
    %1658 = vmatpush1.bf16.msra.mxu0 %v1638
    %1659 = vmatprep.subr.bf16.mxu0 %v1641
    %1660 = vmatpush1.bf16.msra.mxu0 %v1640
    %1661 = vmatprep.subr.bf16.mxu0 0
    %1662 = vmatpush1.bf16.msra.mxu0 0
    %1663 = vmatprep.subr.bf16.mxu0 0
    %1664 = vmatpush1.bf16.msra.mxu0 0
    %1665 = vmatprep.subr.bf16.mxu0 0
    %1666 = vmatpush1.bf16.msra.mxu0 0
    %1667 = vmatprep.subr.bf16.mxu0 0
    %1668 = vmatpush1.bf16.msra.mxu0 0
    %1669 = vmatprep.subr.bf16.mxu0 0
    %1670 = vmatpush1.bf16.msra.mxu0 0
    %1671 = vmatprep.subr.bf16.mxu0 0
    %1672 = vmatpush1.bf16.msra.mxu0 0
    %1673 = vmatprep.subr.bf16.mxu0 0
    %1674 = vmatpush1.bf16.msra.mxu0 0
    %1675 = vmatprep.subr.bf16.mxu0 0
    %1676 = vmatpush1.bf16.msra.mxu0 0
    %1677 = vmatprep.subr.bf16.mxu0 0
    %1678 = vmatpush1.bf16.msra.mxu0 0
    %1679 = vmatprep.subr.bf16.mxu0 0
    %1680 = vmatpush1.bf16.msra.mxu0 0
    %1681 = vmatprep.subr.bf16.mxu0 0
    %1682 = vmatpush1.bf16.msra.mxu0 0
    %1683 = vmatprep.subr.bf16.mxu0 0
    %1684 = vmatpush1.bf16.msra.mxu0 0
    %1685 = vmatprep.mubr.bf16.mxu0 0
    %1686 = vmatmul.mubr.bf16.gmra.mrb[0].mxu0 %v1651
    %v1687 = vpop.f32.mrb[0].mxu0
    %v1688 = vadd.f32 %v1603, %v1687
    %v1689 = vpop.f32.mrb[0].mxu0
    %v1690 = vadd.f32 %v1607, %v1689
    %v1691 = vpop.f32.mrb[0].mxu0
    %v1692 = vadd.f32 %v1603, %v1691
    %v1693 = vpop.f32.mrb[0].mxu0
    %v1694 = vadd.f32 %v1607, %v1693
    %1695 = vdwg.mxu0
    %v1696 = vmax.f32 %v1688, 0.0
    %v1697 = vmax.f32 %v1690, 0.0
    %v1698 = vmax.f32 %v1692, 0.0
    %v1699 = vmax.f32 %v1694, 0.0
    %v1700 = vpack.c.bf16 %v1698, %v1696
    %v1701 = vpack.c.bf16 %v1699, %v1697
    %v1702 = vld [vmem:[%s10] sm:$0xf]
    %v1703 = vld [vmem:[%s10 + $0x4] sm:$0xf]
    %v1704 = vld [vmem:[%s10 + $0x8] sm:$0xf]
    %v1705 = vld [vmem:[%s10 + $0xc] sm:$0xf]
    %v1706 = vld [vmem:[%s10 + $0x10] sm:$0xf]
    %v1707 = vld [vmem:[%s10 + $0x14] sm:$0xf]
    %v1708 = vld [vmem:[%s10 + $0x18] sm:$0xf]
    %v1709 = vld [vmem:[%s10 + $0x1c] sm:$0xf]
    %v1710 = vld [vmem:[%s10 + $0x20] sm:$0xf]
    %v1711 = vld [vmem:[%s10 + $0x24] sm:$0xf]
    %v1712 = vld [vmem:[%s10 + $0x28] sm:$0xf]
    %v1713 = vld [vmem:[%s10 + $0x2c] sm:$0xf]
    %v1714 = vld [vmem:[%s10 + $0x30] sm:$0xf]
    %v1715 = vld [vmem:[%s10 + $0x34] sm:$0xf]
    %v1716 = vld [vmem:[%s10 + $0x38] sm:$0xf]
    %v1717 = vld [vmem:[%s10 + $0x3c] sm:$0xf]
    %v1718 = vld [vmem:[%s10 + $0x40] sm:$0xf]
    %v1719 = vld [vmem:[%s10 + $0x44] sm:$0xf]
    %v1720 = vld [vmem:[%s10 + $0x48] sm:$0xf]
    %v1721 = vld [vmem:[%s10 + $0x4c] sm:$0xf]
    %v1722 = vld [vmem:[%s10 + $0x50] sm:$0xf]
    %v1723 = vld [vmem:[%s10 + $0x54] sm:$0xf]
    %v1724 = vld [vmem:[%s10 + $0x58] sm:$0xf]
    %v1725 = vld [vmem:[%s10 + $0x5c] sm:$0xf]
    %v1726 = vld [vmem:[%s10 + $0x60] sm:$0xf]
    %v1727 = vld [vmem:[%s10 + $0x64] sm:$0xf]
    %v1728 = vld [vmem:[%s10 + $0x68] sm:$0xf]
    %v1729 = vld [vmem:[%s10 + $0x6c] sm:$0xf]
    %v1730 = vld [vmem:[%s10 + $0x70] sm:$0xf]
    %v1731 = vld [vmem:[%s10 + $0x74] sm:$0xf]
    %v1732 = vld [vmem:[%s10 + $0x78] sm:$0xf]
    %v1733 = vld [vmem:[%s10 + $0x7c] sm:$0xf]
    %v1734 = vld [vmem:[%s11] sm:$0x1]
    %v1736 = vlaneseq
    %v1737 = vshrl.u32 %v1736, 7
    %v1738 = vsub.s32 0, %v1737
    %v1739 = vrot.slane %v1734, %v1738
    %v1773 = vunpack.c.l.b16 %v1702
    %v1774 = vunpack.c.l.b16 %v1703
    %v1775 = vunpack.c.l.b16 %v1704
    %v1776 = vunpack.c.l.b16 %v1705
    %v1777 = vunpack.c.l.b16 %v1706
    %v1778 = vunpack.c.l.b16 %v1707
    %v1779 = vunpack.c.l.b16 %v1708
    %v1780 = vunpack.c.l.b16 %v1709
    %v1781 = vunpack.c.l.b16 %v1710
    %v1782 = vunpack.c.l.b16 %v1711
    %v1783 = vunpack.c.l.b16 %v1712
    %v1784 = vunpack.c.l.b16 %v1713
    %v1785 = vunpack.c.l.b16 %v1714
    %v1786 = vunpack.c.l.b16 %v1715
    %v1787 = vunpack.c.l.b16 %v1716
    %v1788 = vunpack.c.l.b16 %v1717
    %v1789 = vunpack.c.l.b16 %v1718
    %v1790 = vunpack.c.l.b16 %v1719
    %v1791 = vunpack.c.l.b16 %v1720
    %v1792 = vunpack.c.l.b16 %v1721
    %v1793 = vunpack.c.l.b16 %v1722
    %v1794 = vunpack.c.l.b16 %v1723
    %v1795 = vunpack.c.l.b16 %v1724
    %v1796 = vunpack.c.l.b16 %v1725
    %v1797 = vunpack.c.l.b16 %v1726
    %v1798 = vunpack.c.l.b16 %v1727
    %v1799 = vunpack.c.l.b16 %v1728
    %v1800 = vunpack.c.l.b16 %v1729
    %v1801 = vunpack.c.l.b16 %v1730
    %v1802 = vunpack.c.l.b16 %v1731
    %v1803 = vunpack.c.l.b16 %v1732
    %v1804 = vunpack.c.l.b16 %v1733
    %v1805 = vpack.c.b16 %v1774, %v1773
    %v1806 = vpack.c.b16 %v1776, %v1775
    %v1807 = vpack.c.b16 %v1778, %v1777
    %v1808 = vpack.c.b16 %v1780, %v1779
    %v1809 = vpack.c.b16 %v1782, %v1781
    %v1810 = vpack.c.b16 %v1784, %v1783
    %v1811 = vpack.c.b16 %v1786, %v1785
    %v1812 = vpack.c.b16 %v1788, %v1787
    %v1813 = vpack.c.b16 %v1790, %v1789
    %v1814 = vpack.c.b16 %v1792, %v1791
    %v1815 = vpack.c.b16 %v1794, %v1793
    %v1816 = vpack.c.b16 %v1796, %v1795
    %v1817 = vpack.c.b16 %v1798, %v1797
    %v1818 = vpack.c.b16 %v1800, %v1799
    %v1819 = vpack.c.b16 %v1802, %v1801
    %v1820 = vpack.c.b16 %v1804, %v1803
    %1837 = vmatprep.subr.bf16.mxu0 0
    %1838 = vmatpush1.bf16.msra.mxu0 %v1805
    %1839 = vmatprep.subr.bf16.mxu0 0
    %1840 = vmatpush1.bf16.msra.mxu0 %v1806
    %1841 = vmatprep.subr.bf16.mxu0 0
    %1842 = vmatpush1.bf16.msra.mxu0 %v1807
    %1843 = vmatprep.subr.bf16.mxu0 0
    %1844 = vmatpush1.bf16.msra.mxu0 %v1808
    %1845 = vmatprep.subr.bf16.mxu0 0
    %1846 = vmatpush1.bf16.msra.mxu0 %v1809
    %1847 = vmatprep.subr.bf16.mxu0 0
    %1848 = vmatpush1.bf16.msra.mxu0 %v1810
    %1849 = vmatprep.subr.bf16.mxu0 0
    %1850 = vmatpush1.bf16.msra.mxu0 %v1811
    %1851 = vmatprep.subr.bf16.mxu0 0
    %1852 = vmatpush1.bf16.msra.mxu0 %v1812
    %1853 = vmatprep.subr.bf16.mxu0 0
    %1854 = vmatpush1.bf16.msra.mxu0 %v1813
    %1855 = vmatprep.subr.bf16.mxu0 0
    %1856 = vmatpush1.bf16.msra.mxu0 %v1814
    %1857 = vmatprep.subr.bf16.mxu0 0
    %1858 = vmatpush1.bf16.msra.mxu0 %v1815
    %1859 = vmatprep.subr.bf16.mxu0 0
    %1860 = vmatpush1.bf16.msra.mxu0 %v1816
    %1861 = vmatprep.subr.bf16.mxu0 0
    %1862 = vmatpush1.bf16.msra.mxu0 %v1817
    %1863 = vmatprep.subr.bf16.mxu0 0
    %1864 = vmatpush1.bf16.msra.mxu0 %v1818
    %1865 = vmatprep.subr.bf16.mxu0 0
    %1866 = vmatpush1.bf16.msra.mxu0 %v1819
    %1867 = vmatprep.subr.bf16.mxu0 0
    %1868 = vmatpush1.bf16.msra.mxu0 %v1820
    %1869 = vmatprep.mubr.bf16.mxu0 %v1701
    %1870 = vmatmul.mubr.bf16.gmra.mrb[0].mxu0 %v1700
    %v1871 = vpop.f32.mrb[0].mxu0
    %v1872 = vadd.f32 %v1739, %v1871
    %v1873 = vpop.f32.mrb[0].mxu0
    %v1874 = vpop.f32.mrb[0].mxu0
    %v1875 = vadd.f32 %v1739, %v1874
    %v1876 = vpop.f32.mrb[0].mxu0
    %1877 = vdwg.mxu0
    %v1878 = vadd.f32 %v1543, %v1872
    %v1879 = vadd.f32 %v1544, %v1875
    %s1880 = scalar_lea.vmem %s1, 1
    %v1881 = vld [vmem:[%s1880] sm:$0x1]
    %s1882 = scalar_lea.vmem %s2, 1
    %v1883 = vld [vmem:[%s1882] sm:$0x1]
    %v1884 = vsel %vm64, %v1878, 0.0
    %1885 = vadd.xlane.f32.xlu0 %v1884
    %v1886 = vpop.xlane.xlu0 %1885
    %v1887 = vsel %vm64, %v1879, 0.0
    %1888 = vadd.xlane.f32.xlu0 %v1887
    %v1889 = vpop.xlane.xlu0 %1888
    %v1890 = vmul.f32 %v1886, %v71
    %v1891 = vmul.f32 %v1889, %v71
    %v1892 = vsub.f32 %v1878, %v1890
    %v1893 = vsub.f32 %v1879, %v1891
    %v1894 = vmul.f32 %v1892, %v1892
    %v1895 = vmul.f32 %v1893, %v1893
    %v1896 = vsel %vm64, %v1894, 0.0
    %1897 = vadd.xlane.f32.xlu0 %v1896
    %v1898 = vpop.xlane.xlu0 %1897
    %v1899 = vsel %vm64, %v1895, 0.0
    %1900 = vadd.xlane.f32.xlu0 %v1899
    %v1901 = vpop.xlane.xlu0 %1900
    %v1902 = vmul.f32 %v1898, %v71
    %v1903 = vmul.f32 %v1901, %v71
    %v1904 = vadd.f32 %v1902, 1e-05
    %v1905 = vadd.f32 %v1903, 1e-05
    %v1906 = vrsqrt.pop %v1904
    %v1907 = vrsqrt.pop %v1905
    %v1908 = vmul.f32 %v1892, %v1906
    %v1909 = vmul.f32 %v1893, %v1907
    %v1911 = vlaneseq
    %v1912 = vshrl.u32 %v1911, 7
    %v1913 = vsub.s32 0, %v1912
    %v1914 = vrot.slane %v1881, %v1913
    %v1916 = vmul.f32 %v1908, %v1914
    %v1917 = vmul.f32 %v1909, %v1914
    %v1919 = vlaneseq
    %v1920 = vshrl.u32 %v1919, 7
    %v1921 = vsub.s32 0, %v1920
    %v1922 = vrot.slane %v1883, %v1921
    %v1924 = vadd.f32 %v1916, %v1922
    %v1925 = vadd.f32 %v1917, %v1922
    %v1926 = vpack.c.bf16 %v1925, %v1924
    %s1927 = scalar_lea.vmem %s3, 64
    %v1928 = vld [vmem:[%s1927] sm:$0xff]
    %v1929 = vld [vmem:[%s1927 + $0x8] sm:$0xff]
    %v1930 = vld [vmem:[%s1927 + $0x10] sm:$0xff]
    %v1931 = vld [vmem:[%s1927 + $0x18] sm:$0xff]
    %v1932 = vld [vmem:[%s1927 + $0x20] sm:$0xff]
    %v1933 = vld [vmem:[%s1927 + $0x28] sm:$0xff]
    %v1934 = vld [vmem:[%s1927 + $0x30] sm:$0xff]
    %v1935 = vld [vmem:[%s1927 + $0x38] sm:$0xff]
    %v1944 = vunpack.c.l.b16 %v1928
    %v1945 = vunpack.c.h.b16 %v1928
    %v1946 = vunpack.c.l.b16 %v1929
    %v1947 = vunpack.c.h.b16 %v1929
    %v1948 = vunpack.c.l.b16 %v1930
    %v1949 = vunpack.c.h.b16 %v1930
    %v1950 = vunpack.c.l.b16 %v1931
    %v1951 = vunpack.c.h.b16 %v1931
    %v1952 = vunpack.c.l.b16 %v1932
    %v1953 = vunpack.c.h.b16 %v1932
    %v1954 = vunpack.c.l.b16 %v1933
    %v1955 = vunpack.c.h.b16 %v1933
    %v1956 = vunpack.c.l.b16 %v1934
    %v1957 = vunpack.c.h.b16 %v1934
    %v1958 = vunpack.c.l.b16 %v1935
    %v1959 = vunpack.c.h.b16 %v1935
    %v1960 = vpack.c.b16 %v1946, %v1944
    %v1961 = vpack.c.b16 %v1947, %v1945
    %v1962 = vpack.c.b16 %v1950, %v1948
    %v1963 = vpack.c.b16 %v1951, %v1949
    %v1964 = vpack.c.b16 %v1954, %v1952
    %v1965 = vpack.c.b16 %v1955, %v1953
    %v1966 = vpack.c.b16 %v1958, %v1956
    %v1967 = vpack.c.b16 %v1959, %v1957
    %v1977 = vsel %vm64, %v1926, 0
    %1979 = vmatprep.subr.bf16.mxu0 %v1961
    %1980 = vmatpush1.bf16.msra.mxu0 %v1960
    %1981 = vmatprep.subr.bf16.mxu0 %v1963
    %1982 = vmatpush1.bf16.msra.mxu0 %v1962
    %1983 = vmatprep.subr.bf16.mxu0 %v1965
    %1984 = vmatpush1.bf16.msra.mxu0 %v1964
    %1985 = vmatprep.subr.bf16.mxu0 %v1967
    %1986 = vmatpush1.bf16.msra.mxu0 %v1966
    %1987 = vmatprep.subr.bf16.mxu0 0
    %1988 = vmatpush1.bf16.msra.mxu0 0
    %1989 = vmatprep.subr.bf16.mxu0 0
    %1990 = vmatpush1.bf16.msra.mxu0 0
    %1991 = vmatprep.subr.bf16.mxu0 0
    %1992 = vmatpush1.bf16.msra.mxu0 0
    %1993 = vmatprep.subr.bf16.mxu0 0
    %1994 = vmatpush1.bf16.msra.mxu0 0
    %1995 = vmatprep.subr.bf16.mxu0 0
    %1996 = vmatpush1.bf16.msra.mxu0 0
    %1997 = vmatprep.subr.bf16.mxu0 0
    %1998 = vmatpush1.bf16.msra.mxu0 0
    %1999 = vmatprep.subr.bf16.mxu0 0
    %2000 = vmatpush1.bf16.msra.mxu0 0
    %2001 = vmatprep.subr.bf16.mxu0 0
    %2002 = vmatpush1.bf16.msra.mxu0 0
    %2003 = vmatprep.subr.bf16.mxu0 0
    %2004 = vmatpush1.bf16.msra.mxu0 0
    %2005 = vmatprep.subr.bf16.mxu0 0
    %2006 = vmatpush1.bf16.msra.mxu0 0
    %2007 = vmatprep.subr.bf16.mxu0 0
    %2008 = vmatpush1.bf16.msra.mxu0 0
    %2009 = vmatprep.subr.bf16.mxu0 0
    %2010 = vmatpush1.bf16.msra.mxu0 0
    %2011 = vmatprep.mubr.bf16.mxu0 0
    %2012 = vmatmul.mubr.bf16.gmra.mrb[0].mxu0 %v1977
    %v2013 = vpop.f32.mrb[0].mxu0
    %v2014 = vadd.f32 0.0, %v2013
    %v2015 = vpop.f32.mrb[0].mxu0
    %v2016 = vadd.f32 0.0, %v2015
    %v2017 = vpop.f32.mrb[0].mxu0
    %v2018 = vadd.f32 0.0, %v2017
    %v2019 = vpop.f32.mrb[0].mxu0
    %v2020 = vadd.f32 0.0, %v2019
    %2021 = vdwg.mxu0
    %s2022 = scalar_lea.vmem %s4, 32
    %v2023 = vld [vmem:[%s2022] sm:$0xf]
    %v2024 = vld [vmem:[%s2022 + $0x4] sm:$0xf]
    %v2025 = vld [vmem:[%s2022 + $0x8] sm:$0xf]
    %v2026 = vld [vmem:[%s2022 + $0xc] sm:$0xf]
    %v2027 = vld [vmem:[%s2022 + $0x10] sm:$0xf]
    %v2028 = vld [vmem:[%s2022 + $0x14] sm:$0xf]
    %v2029 = vld [vmem:[%s2022 + $0x18] sm:$0xf]
    %v2030 = vld [vmem:[%s2022 + $0x1c] sm:$0xf]
    %2032 = vrot.lane.b32.xlu0 %v2014, 64
    %v2033 = vpop.permute.xlu0 %2032
    %v2034 = vsel %vm214, %v2014, 0
    %v2036 = vsel %vm214, %v2033, 0
    %2038 = vmatprep.subr.mxu0 0.0
    %2039 = vmatpush1.xpose.msra.mxu0 %v2036
    %2040 = vmatprep.subr.mxu0 0.0
    %2041 = vmatpush1.xpose.msra.mxu0 0.0
    %2042 = vmatprep.subr.mxu0 0.0
    %2043 = vmatpush1.xpose.msra.mxu0 0.0
    %2044 = vmatprep.subr.mxu0 0.0
    %2045 = vmatpush1.xpose.msra.mxu0 0.0
    %2046 = vmatprep.subr.mxu0 0.0
    %2047 = vmatpush1.xpose.msra.mxu0 0.0
    %2048 = vmatprep.subr.mxu0 0.0
    %2049 = vmatpush1.xpose.msra.mxu0 0.0
    %2050 = vmatprep.subr.mxu0 0.0
    %2051 = vmatpush1.xpose.msra.mxu0 0.0
    %2052 = vmatprep.subr.mxu0 0.0
    %2053 = vmatpush1.xpose.msra.mxu0 0.0
    %2054 = vmatprep.subr.mxu0 0.0
    %2055 = vmatpush1.xpose.msra.mxu0 0.0
    %2056 = vmatprep.subr.mxu0 0.0
    %2057 = vmatpush1.xpose.msra.mxu0 0.0
    %2058 = vmatprep.subr.mxu0 0.0
    %2059 = vmatpush1.xpose.msra.mxu0 0.0
    %2060 = vmatprep.subr.mxu0 0.0
    %2061 = vmatpush1.xpose.msra.mxu0 0.0
    %2062 = vmatprep.subr.mxu0 0.0
    %2063 = vmatpush1.xpose.msra.mxu0 0.0
    %2064 = vmatprep.subr.mxu0 0.0
    %2065 = vmatpush1.xpose.msra.mxu0 0.0
    %2066 = vmatprep.subr.mxu0 0.0
    %2067 = vmatpush1.xpose.msra.mxu0 0.0
    %2068 = vmatprep.subr.mxu0 0.0
    %2069 = vmatpush1.xpose.msra.mxu0 0.0
    %2070 = vmatprep.subr.mxu0 0.0
    %2071 = vmatpush1.xpose.msra.mxu0 0.0
    %2072 = vmatprep.subr.mxu0 0.0
    %2073 = vmatpush1.xpose.msra.mxu0 0.0
    %2074 = vmatprep.subr.mxu0 0.0
    %2075 = vmatpush1.xpose.msra.mxu0 0.0
    %2076 = vmatprep.subr.mxu0 0.0
    %2077 = vmatpush1.xpose.msra.mxu0 0.0
    %2078 = vmatprep.subr.mxu0 0.0
    %2079 = vmatpush1.xpose.msra.mxu0 0.0
    %2080 = vmatprep.subr.mxu0 0.0
    %2081 = vmatpush1.xpose.msra.mxu0 0.0
    %2082 = vmatprep.subr.mxu0 0.0
    %2083 = vmatpush1.xpose.msra.mxu0 0.0
    %2084 = vmatprep.subr.mxu0 0.0
    %2085 = vmatpush1.xpose.msra.mxu0 0.0
    %2086 = vmatprep.subr.mxu0 0.0
    %2087 = vmatpush1.xpose.msra.mxu0 0.0
    %2088 = vmatprep.subr.mxu0 0.0
    %2089 = vmatpush1.xpose.msra.mxu0 0.0
    %2090 = vmatprep.subr.mxu0 0.0
    %2091 = vmatpush1.xpose.msra.mxu0 0.0
    %2092 = vmatprep.subr.mxu0 0.0
    %2093 = vmatpush1.xpose.msra.mxu0 0.0
    %2094 = vmatprep.subr.mxu0 0.0
    %2095 = vmatpush1.xpose.msra.mxu0 0.0
    %2096 = vmatprep.subr.mxu0 0.0
    %2097 = vmatpush1.xpose.msra.mxu0 0.0
    %2098 = vmatprep.subr.mxu0 0.0
    %2099 = vmatpush1.xpose.msra.mxu0 0.0
    %2100 = vmatprep.subr.mxu0 0.0
    %2101 = vmatpush1.xpose.msra.mxu0 0.0
    %2102 = vmatprep.mubr.f32.mxu0 0.0
    %2103 = vmatmul.mubr.f32.gmra.mrb[0].mxu0 %v2034
    %v2104 = vpop.f32.mrb[0].mxu0
    %v2105 = vadd.f32 0.0, %v2104
    %v2106 = vpop.f32.mrb[0].mxu0
    %2107 = vdwg.mxu0
    %2109 = vrot.lane.b32.xlu0 %v2018, 64
    %v2110 = vpop.permute.xlu0 %2109
    %v2111 = vsel %vm214, %v2018, 0
    %v2113 = vsel %vm214, %v2110, 0
    %2115 = vmatprep.subr.mxu0 0.0
    %2116 = vmatpush1.xpose.msra.mxu0 %v2113
    %2117 = vmatprep.subr.mxu0 0.0
    %2118 = vmatpush1.xpose.msra.mxu0 0.0
    %2119 = vmatprep.subr.mxu0 0.0
    %2120 = vmatpush1.xpose.msra.mxu0 0.0
    %2121 = vmatprep.subr.mxu0 0.0
    %2122 = vmatpush1.xpose.msra.mxu0 0.0
    %2123 = vmatprep.subr.mxu0 0.0
    %2124 = vmatpush1.xpose.msra.mxu0 0.0
    %2125 = vmatprep.subr.mxu0 0.0
    %2126 = vmatpush1.xpose.msra.mxu0 0.0
    %2127 = vmatprep.subr.mxu0 0.0
    %2128 = vmatpush1.xpose.msra.mxu0 0.0
    %2129 = vmatprep.subr.mxu0 0.0
    %2130 = vmatpush1.xpose.msra.mxu0 0.0
    %2131 = vmatprep.subr.mxu0 0.0
    %2132 = vmatpush1.xpose.msra.mxu0 0.0
    %2133 = vmatprep.subr.mxu0 0.0
    %2134 = vmatpush1.xpose.msra.mxu0 0.0
    %2135 = vmatprep.subr.mxu0 0.0
    %2136 = vmatpush1.xpose.msra.mxu0 0.0
    %2137 = vmatprep.subr.mxu0 0.0
    %2138 = vmatpush1.xpose.msra.mxu0 0.0
    %2139 = vmatprep.subr.mxu0 0.0
    %2140 = vmatpush1.xpose.msra.mxu0 0.0
    %2141 = vmatprep.subr.mxu0 0.0
    %2142 = vmatpush1.xpose.msra.mxu0 0.0
    %2143 = vmatprep.subr.mxu0 0.0
    %2144 = vmatpush1.xpose.msra.mxu0 0.0
    %2145 = vmatprep.subr.mxu0 0.0
    %2146 = vmatpush1.xpose.msra.mxu0 0.0
    %2147 = vmatprep.subr.mxu0 0.0
    %2148 = vmatpush1.xpose.msra.mxu0 0.0
    %2149 = vmatprep.subr.mxu0 0.0
    %2150 = vmatpush1.xpose.msra.mxu0 0.0
    %2151 = vmatprep.subr.mxu0 0.0
    %2152 = vmatpush1.xpose.msra.mxu0 0.0
    %2153 = vmatprep.subr.mxu0 0.0
    %2154 = vmatpush1.xpose.msra.mxu0 0.0
    %2155 = vmatprep.subr.mxu0 0.0
    %2156 = vmatpush1.xpose.msra.mxu0 0.0
    %2157 = vmatprep.subr.mxu0 0.0
    %2158 = vmatpush1.xpose.msra.mxu0 0.0
    %2159 = vmatprep.subr.mxu0 0.0
    %2160 = vmatpush1.xpose.msra.mxu0 0.0
    %2161 = vmatprep.subr.mxu0 0.0
    %2162 = vmatpush1.xpose.msra.mxu0 0.0
    %2163 = vmatprep.subr.mxu0 0.0
    %2164 = vmatpush1.xpose.msra.mxu0 0.0
    %2165 = vmatprep.subr.mxu0 0.0
    %2166 = vmatpush1.xpose.msra.mxu0 0.0
    %2167 = vmatprep.subr.mxu0 0.0
    %2168 = vmatpush1.xpose.msra.mxu0 0.0
    %2169 = vmatprep.subr.mxu0 0.0
    %2170 = vmatpush1.xpose.msra.mxu0 0.0
    %2171 = vmatprep.subr.mxu0 0.0
    %2172 = vmatpush1.xpose.msra.mxu0 0.0
    %2173 = vmatprep.subr.mxu0 0.0
    %2174 = vmatpush1.xpose.msra.mxu0 0.0
    %2175 = vmatprep.subr.mxu0 0.0
    %2176 = vmatpush1.xpose.msra.mxu0 0.0
    %2177 = vmatprep.subr.mxu0 0.0
    %2178 = vmatpush1.xpose.msra.mxu0 0.0
    %2179 = vmatprep.mubr.f32.mxu0 0.0
    %2180 = vmatmul.mubr.f32.gmra.mrb[0].mxu0 %v2111
    %v2181 = vpop.f32.mrb[0].mxu0
    %v2182 = vadd.f32 0.0, %v2181
    %v2183 = vpop.f32.mrb[0].mxu0
    %2184 = vdwg.mxu0
    %v2185 = vsel %vm367, %v2105, -1e+30
    %v2186 = vsel %vm367, %v2182, -1e+30
    %v2187 = vsel %vm370, %v2185, -inf
    %2188 = vmax.xlane.f32.xlu0 %v2187
    %v2189 = vpop.xlane.xlu0 %2188
    %v2190 = vsel %vm370, %v2186, -inf
    %2191 = vmax.xlane.f32.xlu0 %v2190
    %v2192 = vpop.xlane.xlu0 %2191
    %v2193 = vsub.f32 %v2185, %v2189
    %v2194 = vsub.f32 %v2186, %v2192
    %v2195 = vmul.f32 %v2193, 1.442695
    %v2196 = vpow.pop %v2195
    %v2197 = vmul.f32 %v2194, 1.442695
    %v2198 = vpow.pop %v2197
    %v2199 = vsel %vm370, %v2196, 0.0
    %2200 = vadd.xlane.f32.xlu0 %v2199
    %v2201 = vpop.xlane.xlu0 %2200
    %v2202 = vsel %vm370, %v2198, 0.0
    %2203 = vadd.xlane.f32.xlu0 %v2202
    %v2204 = vpop.xlane.xlu0 %2203
    %v2205 = vrcp.pop %v2201
    %v2206 = vrcp.pop %v2204
    %v2207 = vmul.f32 %v2196, %v2205
    %v2208 = vmul.f32 %v2198, %v2206
    %v2209 = vpack.c.bf16 %v2207, %v2207
    %v2210 = vpack.c.bf16 %v2208, %v2208
    %v2211 = vpack.c.bf16 %v2016, %v2016
    %v2212 = vpack.c.bf16 %v2020, %v2020
    %v2214 = vsel %vm370, %v2209, 0
    %v2217 = vsel %vm400, %v2211, 0
    %2219 = vmatprep.subr.bf16.mxu0 0
    %2220 = vmatpush1.bf16.msra.mxu0 %v2217
    %2221 = vmatprep.subr.bf16.mxu0 0
    %2222 = vmatpush1.bf16.msra.mxu0 0
    %2223 = vmatprep.subr.bf16.mxu0 0
    %2224 = vmatpush1.bf16.msra.mxu0 0
    %2225 = vmatprep.subr.bf16.mxu0 0
    %2226 = vmatpush1.bf16.msra.mxu0 0
    %2227 = vmatprep.subr.bf16.mxu0 0
    %2228 = vmatpush1.bf16.msra.mxu0 0
    %2229 = vmatprep.subr.bf16.mxu0 0
    %2230 = vmatpush1.bf16.msra.mxu0 0
    %2231 = vmatprep.subr.bf16.mxu0 0
    %2232 = vmatpush1.bf16.msra.mxu0 0
    %2233 = vmatprep.subr.bf16.mxu0 0
    %2234 = vmatpush1.bf16.msra.mxu0 0
    %2235 = vmatprep.subr.bf16.mxu0 0
    %2236 = vmatpush1.bf16.msra.mxu0 0
    %2237 = vmatprep.subr.bf16.mxu0 0
    %2238 = vmatpush1.bf16.msra.mxu0 0
    %2239 = vmatprep.subr.bf16.mxu0 0
    %2240 = vmatpush1.bf16.msra.mxu0 0
    %2241 = vmatprep.subr.bf16.mxu0 0
    %2242 = vmatpush1.bf16.msra.mxu0 0
    %2243 = vmatprep.subr.bf16.mxu0 0
    %2244 = vmatpush1.bf16.msra.mxu0 0
    %2245 = vmatprep.subr.bf16.mxu0 0
    %2246 = vmatpush1.bf16.msra.mxu0 0
    %2247 = vmatprep.subr.bf16.mxu0 0
    %2248 = vmatpush1.bf16.msra.mxu0 0
    %2249 = vmatprep.subr.bf16.mxu0 0
    %2250 = vmatpush1.bf16.msra.mxu0 0
    %2251 = vmatprep.mubr.bf16.mxu0 0
    %2252 = vmatmul.mubr.bf16.gmra.mrb[0].mxu0 %v2214
    %v2253 = vpop.f32.mrb[0].mxu0
    %v2254 = vadd.f32 0.0, %v2253
    %v2255 = vpop.f32.mrb[0].mxu0
    %v2256 = vpop.f32.mrb[0].mxu0
    %v2257 = vpop.f32.mrb[0].mxu0
    %2258 = vdwg.mxu0
    %v2260 = vsel %vm370, %v2210, 0
    %v2263 = vsel %vm400, %v2212, 0
    %2265 = vmatprep.subr.bf16.mxu0 0
    %2266 = vmatpush1.bf16.msra.mxu0 %v2263
    %2267 = vmatprep.subr.bf16.mxu0 0
    %2268 = vmatpush1.bf16.msra.mxu0 0
    %2269 = vmatprep.subr.bf16.mxu0 0
    %2270 = vmatpush1.bf16.msra.mxu0 0
    %2271 = vmatprep.subr.bf16.mxu0 0
    %2272 = vmatpush1.bf16.msra.mxu0 0
    %2273 = vmatprep.subr.bf16.mxu0 0
    %2274 = vmatpush1.bf16.msra.mxu0 0
    %2275 = vmatprep.subr.bf16.mxu0 0
    %2276 = vmatpush1.bf16.msra.mxu0 0
    %2277 = vmatprep.subr.bf16.mxu0 0
    %2278 = vmatpush1.bf16.msra.mxu0 0
    %2279 = vmatprep.subr.bf16.mxu0 0
    %2280 = vmatpush1.bf16.msra.mxu0 0
    %2281 = vmatprep.subr.bf16.mxu0 0
    %2282 = vmatpush1.bf16.msra.mxu0 0
    %2283 = vmatprep.subr.bf16.mxu0 0
    %2284 = vmatpush1.bf16.msra.mxu0 0
    %2285 = vmatprep.subr.bf16.mxu0 0
    %2286 = vmatpush1.bf16.msra.mxu0 0
    %2287 = vmatprep.subr.bf16.mxu0 0
    %2288 = vmatpush1.bf16.msra.mxu0 0
    %2289 = vmatprep.subr.bf16.mxu0 0
    %2290 = vmatpush1.bf16.msra.mxu0 0
    %2291 = vmatprep.subr.bf16.mxu0 0
    %2292 = vmatpush1.bf16.msra.mxu0 0
    %2293 = vmatprep.subr.bf16.mxu0 0
    %2294 = vmatpush1.bf16.msra.mxu0 0
    %2295 = vmatprep.subr.bf16.mxu0 0
    %2296 = vmatpush1.bf16.msra.mxu0 0
    %2297 = vmatprep.mubr.bf16.mxu0 0
    %2298 = vmatmul.mubr.bf16.gmra.mrb[0].mxu0 %v2260
    %v2299 = vpop.f32.mrb[0].mxu0
    %v2300 = vadd.f32 0.0, %v2299
    %v2301 = vpop.f32.mrb[0].mxu0
    %v2302 = vpop.f32.mrb[0].mxu0
    %v2303 = vpop.f32.mrb[0].mxu0
    %2304 = vdwg.mxu0
    %v2305 = vpack.c.bf16 %v2300, %v2254
    %2306 = vrot.lane.b32.xlu0 %v2014, 112
    %v2307 = vpop.permute.xlu0 %2306
    %2308 = vrot.lane.b32.xlu0 %v2014, 48
    %v2309 = vpop.permute.xlu0 %2308
    %v2310 = vsel %vm214, %v2307, 0
    %v2312 = vsel %vm214, %v2309, 0
    %2314 = vmatprep.subr.mxu0 0.0
    %2315 = vmatpush1.xpose.msra.mxu0 %v2312
    %2316 = vmatprep.subr.mxu0 0.0
    %2317 = vmatpush1.xpose.msra.mxu0 0.0
    %2318 = vmatprep.subr.mxu0 0.0
    %2319 = vmatpush1.xpose.msra.mxu0 0.0
    %2320 = vmatprep.subr.mxu0 0.0
    %2321 = vmatpush1.xpose.msra.mxu0 0.0
    %2322 = vmatprep.subr.mxu0 0.0
    %2323 = vmatpush1.xpose.msra.mxu0 0.0
    %2324 = vmatprep.subr.mxu0 0.0
    %2325 = vmatpush1.xpose.msra.mxu0 0.0
    %2326 = vmatprep.subr.mxu0 0.0
    %2327 = vmatpush1.xpose.msra.mxu0 0.0
    %2328 = vmatprep.subr.mxu0 0.0
    %2329 = vmatpush1.xpose.msra.mxu0 0.0
    %2330 = vmatprep.subr.mxu0 0.0
    %2331 = vmatpush1.xpose.msra.mxu0 0.0
    %2332 = vmatprep.subr.mxu0 0.0
    %2333 = vmatpush1.xpose.msra.mxu0 0.0
    %2334 = vmatprep.subr.mxu0 0.0
    %2335 = vmatpush1.xpose.msra.mxu0 0.0
    %2336 = vmatprep.subr.mxu0 0.0
    %2337 = vmatpush1.xpose.msra.mxu0 0.0
    %2338 = vmatprep.subr.mxu0 0.0
    %2339 = vmatpush1.xpose.msra.mxu0 0.0
    %2340 = vmatprep.subr.mxu0 0.0
    %2341 = vmatpush1.xpose.msra.mxu0 0.0
    %2342 = vmatprep.subr.mxu0 0.0
    %2343 = vmatpush1.xpose.msra.mxu0 0.0
    %2344 = vmatprep.subr.mxu0 0.0
    %2345 = vmatpush1.xpose.msra.mxu0 0.0
    %2346 = vmatprep.subr.mxu0 0.0
    %2347 = vmatpush1.xpose.msra.mxu0 0.0
    %2348 = vmatprep.subr.mxu0 0.0
    %2349 = vmatpush1.xpose.msra.mxu0 0.0
    %2350 = vmatprep.subr.mxu0 0.0
    %2351 = vmatpush1.xpose.msra.mxu0 0.0
    %2352 = vmatprep.subr.mxu0 0.0
    %2353 = vmatpush1.xpose.msra.mxu0 0.0
    %2354 = vmatprep.subr.mxu0 0.0
    %2355 = vmatpush1.xpose.msra.mxu0 0.0
    %2356 = vmatprep.subr.mxu0 0.0
    %2357 = vmatpush1.xpose.msra.mxu0 0.0
    %2358 = vmatprep.subr.mxu0 0.0
    %2359 = vmatpush1.xpose.msra.mxu0 0.0
    %2360 = vmatprep.subr.mxu0 0.0
    %2361 = vmatpush1.xpose.msra.mxu0 0.0
    %2362 = vmatprep.subr.mxu0 0.0
    %2363 = vmatpush1.xpose.msra.mxu0 0.0
    %2364 = vmatprep.subr.mxu0 0.0
    %2365 = vmatpush1.xpose.msra.mxu0 0.0
    %2366 = vmatprep.subr.mxu0 0.0
    %2367 = vmatpush1.xpose.msra.mxu0 0.0
    %2368 = vmatprep.subr.mxu0 0.0
    %2369 = vmatpush1.xpose.msra.mxu0 0.0
    %2370 = vmatprep.subr.mxu0 0.0
    %2371 = vmatpush1.xpose.msra.mxu0 0.0
    %2372 = vmatprep.subr.mxu0 0.0
    %2373 = vmatpush1.xpose.msra.mxu0 0.0
    %2374 = vmatprep.subr.mxu0 0.0
    %2375 = vmatpush1.xpose.msra.mxu0 0.0
    %2376 = vmatprep.subr.mxu0 0.0
    %2377 = vmatpush1.xpose.msra.mxu0 0.0
    %2378 = vmatprep.mubr.f32.mxu0 0.0
    %2379 = vmatmul.mubr.f32.gmra.mrb[0].mxu0 %v2310
    %v2380 = vpop.f32.mrb[0].mxu0
    %v2381 = vadd.f32 0.0, %v2380
    %v2382 = vpop.f32.mrb[0].mxu0
    %2383 = vdwg.mxu0
    %2384 = vrot.lane.b32.xlu0 %v2018, 112
    %v2385 = vpop.permute.xlu0 %2384
    %2386 = vrot.lane.b32.xlu0 %v2018, 48
    %v2387 = vpop.permute.xlu0 %2386
    %v2388 = vsel %vm214, %v2385, 0
    %v2390 = vsel %vm214, %v2387, 0
    %2392 = vmatprep.subr.mxu0 0.0
    %2393 = vmatpush1.xpose.msra.mxu0 %v2390
    %2394 = vmatprep.subr.mxu0 0.0
    %2395 = vmatpush1.xpose.msra.mxu0 0.0
    %2396 = vmatprep.subr.mxu0 0.0
    %2397 = vmatpush1.xpose.msra.mxu0 0.0
    %2398 = vmatprep.subr.mxu0 0.0
    %2399 = vmatpush1.xpose.msra.mxu0 0.0
    %2400 = vmatprep.subr.mxu0 0.0
    %2401 = vmatpush1.xpose.msra.mxu0 0.0
    %2402 = vmatprep.subr.mxu0 0.0
    %2403 = vmatpush1.xpose.msra.mxu0 0.0
    %2404 = vmatprep.subr.mxu0 0.0
    %2405 = vmatpush1.xpose.msra.mxu0 0.0
    %2406 = vmatprep.subr.mxu0 0.0
    %2407 = vmatpush1.xpose.msra.mxu0 0.0
    %2408 = vmatprep.subr.mxu0 0.0
    %2409 = vmatpush1.xpose.msra.mxu0 0.0
    %2410 = vmatprep.subr.mxu0 0.0
    %2411 = vmatpush1.xpose.msra.mxu0 0.0
    %2412 = vmatprep.subr.mxu0 0.0
    %2413 = vmatpush1.xpose.msra.mxu0 0.0
    %2414 = vmatprep.subr.mxu0 0.0
    %2415 = vmatpush1.xpose.msra.mxu0 0.0
    %2416 = vmatprep.subr.mxu0 0.0
    %2417 = vmatpush1.xpose.msra.mxu0 0.0
    %2418 = vmatprep.subr.mxu0 0.0
    %2419 = vmatpush1.xpose.msra.mxu0 0.0
    %2420 = vmatprep.subr.mxu0 0.0
    %2421 = vmatpush1.xpose.msra.mxu0 0.0
    %2422 = vmatprep.subr.mxu0 0.0
    %2423 = vmatpush1.xpose.msra.mxu0 0.0
    %2424 = vmatprep.subr.mxu0 0.0
    %2425 = vmatpush1.xpose.msra.mxu0 0.0
    %2426 = vmatprep.subr.mxu0 0.0
    %2427 = vmatpush1.xpose.msra.mxu0 0.0
    %2428 = vmatprep.subr.mxu0 0.0
    %2429 = vmatpush1.xpose.msra.mxu0 0.0
    %2430 = vmatprep.subr.mxu0 0.0
    %2431 = vmatpush1.xpose.msra.mxu0 0.0
    %2432 = vmatprep.subr.mxu0 0.0
    %2433 = vmatpush1.xpose.msra.mxu0 0.0
    %2434 = vmatprep.subr.mxu0 0.0
    %2435 = vmatpush1.xpose.msra.mxu0 0.0
    %2436 = vmatprep.subr.mxu0 0.0
    %2437 = vmatpush1.xpose.msra.mxu0 0.0
    %2438 = vmatprep.subr.mxu0 0.0
    %2439 = vmatpush1.xpose.msra.mxu0 0.0
    %2440 = vmatprep.subr.mxu0 0.0
    %2441 = vmatpush1.xpose.msra.mxu0 0.0
    %2442 = vmatprep.subr.mxu0 0.0
    %2443 = vmatpush1.xpose.msra.mxu0 0.0
    %2444 = vmatprep.subr.mxu0 0.0
    %2445 = vmatpush1.xpose.msra.mxu0 0.0
    %2446 = vmatprep.subr.mxu0 0.0
    %2447 = vmatpush1.xpose.msra.mxu0 0.0
    %2448 = vmatprep.subr.mxu0 0.0
    %2449 = vmatpush1.xpose.msra.mxu0 0.0
    %2450 = vmatprep.subr.mxu0 0.0
    %2451 = vmatpush1.xpose.msra.mxu0 0.0
    %2452 = vmatprep.subr.mxu0 0.0
    %2453 = vmatpush1.xpose.msra.mxu0 0.0
    %2454 = vmatprep.subr.mxu0 0.0
    %2455 = vmatpush1.xpose.msra.mxu0 0.0
    %2456 = vmatprep.mubr.f32.mxu0 0.0
    %2457 = vmatmul.mubr.f32.gmra.mrb[0].mxu0 %v2388
    %v2458 = vpop.f32.mrb[0].mxu0
    %v2459 = vadd.f32 0.0, %v2458
    %v2460 = vpop.f32.mrb[0].mxu0
    %2461 = vdwg.mxu0
    %v2462 = vsel %vm367, %v2381, -1e+30
    %v2463 = vsel %vm367, %v2459, -1e+30
    %v2464 = vsel %vm370, %v2462, -inf
    %2465 = vmax.xlane.f32.xlu0 %v2464
    %v2466 = vpop.xlane.xlu0 %2465
    %v2467 = vsel %vm370, %v2463, -inf
    %2468 = vmax.xlane.f32.xlu0 %v2467
    %v2469 = vpop.xlane.xlu0 %2468
    %v2470 = vsub.f32 %v2462, %v2466
    %v2471 = vsub.f32 %v2463, %v2469
    %v2472 = vmul.f32 %v2470, 1.442695
    %v2473 = vpow.pop %v2472
    %v2474 = vmul.f32 %v2471, 1.442695
    %v2475 = vpow.pop %v2474
    %v2476 = vsel %vm370, %v2473, 0.0
    %2477 = vadd.xlane.f32.xlu0 %v2476
    %v2478 = vpop.xlane.xlu0 %2477
    %v2479 = vsel %vm370, %v2475, 0.0
    %2480 = vadd.xlane.f32.xlu0 %v2479
    %v2481 = vpop.xlane.xlu0 %2480
    %v2482 = vrcp.pop %v2478
    %v2483 = vrcp.pop %v2481
    %v2484 = vmul.f32 %v2473, %v2482
    %v2485 = vmul.f32 %v2475, %v2483
    %v2486 = vpack.c.bf16 %v2484, %v2484
    %v2487 = vpack.c.bf16 %v2485, %v2485
    %2489 = vrot.lane.b32.xlu0 %v2211, 112
    %v2490 = vpop.permute.xlu0 %2489
    %v2492 = vsel %vm370, %v2486, 0
    %v2495 = vsel %vm400, %v2490, 0
    %2497 = vmatprep.subr.bf16.mxu0 0
    %2498 = vmatpush1.bf16.msra.mxu0 %v2495
    %2499 = vmatprep.subr.bf16.mxu0 0
    %2500 = vmatpush1.bf16.msra.mxu0 0
    %2501 = vmatprep.subr.bf16.mxu0 0
    %2502 = vmatpush1.bf16.msra.mxu0 0
    %2503 = vmatprep.subr.bf16.mxu0 0
    %2504 = vmatpush1.bf16.msra.mxu0 0
    %2505 = vmatprep.subr.bf16.mxu0 0
    %2506 = vmatpush1.bf16.msra.mxu0 0
    %2507 = vmatprep.subr.bf16.mxu0 0
    %2508 = vmatpush1.bf16.msra.mxu0 0
    %2509 = vmatprep.subr.bf16.mxu0 0
    %2510 = vmatpush1.bf16.msra.mxu0 0
    %2511 = vmatprep.subr.bf16.mxu0 0
    %2512 = vmatpush1.bf16.msra.mxu0 0
    %2513 = vmatprep.subr.bf16.mxu0 0
    %2514 = vmatpush1.bf16.msra.mxu0 0
    %2515 = vmatprep.subr.bf16.mxu0 0
    %2516 = vmatpush1.bf16.msra.mxu0 0
    %2517 = vmatprep.subr.bf16.mxu0 0
    %2518 = vmatpush1.bf16.msra.mxu0 0
    %2519 = vmatprep.subr.bf16.mxu0 0
    %2520 = vmatpush1.bf16.msra.mxu0 0
    %2521 = vmatprep.subr.bf16.mxu0 0
    %2522 = vmatpush1.bf16.msra.mxu0 0
    %2523 = vmatprep.subr.bf16.mxu0 0
    %2524 = vmatpush1.bf16.msra.mxu0 0
    %2525 = vmatprep.subr.bf16.mxu0 0
    %2526 = vmatpush1.bf16.msra.mxu0 0
    %2527 = vmatprep.subr.bf16.mxu0 0
    %2528 = vmatpush1.bf16.msra.mxu0 0
    %2529 = vmatprep.mubr.bf16.mxu0 0
    %2530 = vmatmul.mubr.bf16.gmra.mrb[0].mxu0 %v2492
    %v2531 = vpop.f32.mrb[0].mxu0
    %v2532 = vadd.f32 0.0, %v2531
    %v2533 = vpop.f32.mrb[0].mxu0
    %v2534 = vpop.f32.mrb[0].mxu0
    %v2535 = vpop.f32.mrb[0].mxu0
    %2536 = vdwg.mxu0
    %2538 = vrot.lane.b32.xlu0 %v2212, 112
    %v2539 = vpop.permute.xlu0 %2538
    %v2541 = vsel %vm370, %v2487, 0
    %v2544 = vsel %vm400, %v2539, 0
    %2546 = vmatprep.subr.bf16.mxu0 0
    %2547 = vmatpush1.bf16.msra.mxu0 %v2544
    %2548 = vmatprep.subr.bf16.mxu0 0
    %2549 = vmatpush1.bf16.msra.mxu0 0
    %2550 = vmatprep.subr.bf16.mxu0 0
    %2551 = vmatpush1.bf16.msra.mxu0 0
    %2552 = vmatprep.subr.bf16.mxu0 0
    %2553 = vmatpush1.bf16.msra.mxu0 0
    %2554 = vmatprep.subr.bf16.mxu0 0
    %2555 = vmatpush1.bf16.msra.mxu0 0
    %2556 = vmatprep.subr.bf16.mxu0 0
    %2557 = vmatpush1.bf16.msra.mxu0 0
    %2558 = vmatprep.subr.bf16.mxu0 0
    %2559 = vmatpush1.bf16.msra.mxu0 0
    %2560 = vmatprep.subr.bf16.mxu0 0
    %2561 = vmatpush1.bf16.msra.mxu0 0
    %2562 = vmatprep.subr.bf16.mxu0 0
    %2563 = vmatpush1.bf16.msra.mxu0 0
    %2564 = vmatprep.subr.bf16.mxu0 0
    %2565 = vmatpush1.bf16.msra.mxu0 0
    %2566 = vmatprep.subr.bf16.mxu0 0
    %2567 = vmatpush1.bf16.msra.mxu0 0
    %2568 = vmatprep.subr.bf16.mxu0 0
    %2569 = vmatpush1.bf16.msra.mxu0 0
    %2570 = vmatprep.subr.bf16.mxu0 0
    %2571 = vmatpush1.bf16.msra.mxu0 0
    %2572 = vmatprep.subr.bf16.mxu0 0
    %2573 = vmatpush1.bf16.msra.mxu0 0
    %2574 = vmatprep.subr.bf16.mxu0 0
    %2575 = vmatpush1.bf16.msra.mxu0 0
    %2576 = vmatprep.subr.bf16.mxu0 0
    %2577 = vmatpush1.bf16.msra.mxu0 0
    %2578 = vmatprep.mubr.bf16.mxu0 0
    %2579 = vmatmul.mubr.bf16.gmra.mrb[0].mxu0 %v2541
    %v2580 = vpop.f32.mrb[0].mxu0
    %v2581 = vadd.f32 0.0, %v2580
    %v2582 = vpop.f32.mrb[0].mxu0
    %v2583 = vpop.f32.mrb[0].mxu0
    %v2584 = vpop.f32.mrb[0].mxu0
    %2585 = vdwg.mxu0
    %v2586 = vpack.c.bf16 %v2581, %v2532
    %v2589 = vunpack.c.l.b16 %v2025
    %v2590 = vunpack.c.l.b16 %v2026
    %v2591 = vpack.c.b16 %v2590, %v2589
    %v2594 = vsel %vm214, %v2586, 0
    %2596 = vmatprep.subr.bf16.mxu0 0
    %2597 = vmatpush1.bf16.msra.mxu0 %v2591
    %2598 = vmatprep.subr.bf16.mxu0 0
    %2599 = vmatpush1.bf16.msra.mxu0 0
    %2600 = vmatprep.subr.bf16.mxu0 0
    %2601 = vmatpush1.bf16.msra.mxu0 0
    %2602 = vmatprep.subr.bf16.mxu0 0
    %2603 = vmatpush1.bf16.msra.mxu0 0
    %2604 = vmatprep.subr.bf16.mxu0 0
    %2605 = vmatpush1.bf16.msra.mxu0 0
    %2606 = vmatprep.subr.bf16.mxu0 0
    %2607 = vmatpush1.bf16.msra.mxu0 0
    %2608 = vmatprep.subr.bf16.mxu0 0
    %2609 = vmatpush1.bf16.msra.mxu0 0
    %2610 = vmatprep.subr.bf16.mxu0 0
    %2611 = vmatpush1.bf16.msra.mxu0 0
    %2612 = vmatprep.subr.bf16.mxu0 0
    %2613 = vmatpush1.bf16.msra.mxu0 0
    %2614 = vmatprep.subr.bf16.mxu0 0
    %2615 = vmatpush1.bf16.msra.mxu0 0
    %2616 = vmatprep.subr.bf16.mxu0 0
    %2617 = vmatpush1.bf16.msra.mxu0 0
    %2618 = vmatprep.subr.bf16.mxu0 0
    %2619 = vmatpush1.bf16.msra.mxu0 0
    %2620 = vmatprep.subr.bf16.mxu0 0
    %2621 = vmatpush1.bf16.msra.mxu0 0
    %2622 = vmatprep.subr.bf16.mxu0 0
    %2623 = vmatpush1.bf16.msra.mxu0 0
    %2624 = vmatprep.subr.bf16.mxu0 0
    %2625 = vmatpush1.bf16.msra.mxu0 0
    %2626 = vmatprep.subr.bf16.mxu0 0
    %2627 = vmatpush1.bf16.msra.mxu0 0
    %2628 = vmatprep.mubr.bf16.mxu0 0
    %2629 = vmatmul.mubr.bf16.gmra.mrb[0].mxu0 %v2594
    %v2630 = vpop.f32.mrb[0].mxu0
    %v2631 = vadd.f32 0.0, %v2630
    %v2632 = vpop.f32.mrb[0].mxu0
    %v2633 = vpop.f32.mrb[0].mxu0
    %v2634 = vadd.f32 0.0, %v2633
    %v2635 = vpop.f32.mrb[0].mxu0
    %2636 = vdwg.mxu0
    %v2639 = vunpack.c.l.b16 %v2023
    %v2640 = vunpack.c.l.b16 %v2024
    %v2641 = vpack.c.b16 %v2640, %v2639
    %v2644 = vsel %vm214, %v2305, 0
    %2646 = vmatprep.subr.bf16.mxu0 0
    %2647 = vmatpush1.bf16.msra.mxu0 %v2641
    %2648 = vmatprep.subr.bf16.mxu0 0
    %2649 = vmatpush1.bf16.msra.mxu0 0
    %2650 = vmatprep.subr.bf16.mxu0 0
    %2651 = vmatpush1.bf16.msra.mxu0 0
    %2652 = vmatprep.subr.bf16.mxu0 0
    %2653 = vmatpush1.bf16.msra.mxu0 0
    %2654 = vmatprep.subr.bf16.mxu0 0
    %2655 = vmatpush1.bf16.msra.mxu0 0
    %2656 = vmatprep.subr.bf16.mxu0 0
    %2657 = vmatpush1.bf16.msra.mxu0 0
    %2658 = vmatprep.subr.bf16.mxu0 0
    %2659 = vmatpush1.bf16.msra.mxu0 0
    %2660 = vmatprep.subr.bf16.mxu0 0
    %2661 = vmatpush1.bf16.msra.mxu0 0
    %2662 = vmatprep.subr.bf16.mxu0 0
    %2663 = vmatpush1.bf16.msra.mxu0 0
    %2664 = vmatprep.subr.bf16.mxu0 0
    %2665 = vmatpush1.bf16.msra.mxu0 0
    %2666 = vmatprep.subr.bf16.mxu0 0
    %2667 = vmatpush1.bf16.msra.mxu0 0
    %2668 = vmatprep.subr.bf16.mxu0 0
    %2669 = vmatpush1.bf16.msra.mxu0 0
    %2670 = vmatprep.subr.bf16.mxu0 0
    %2671 = vmatpush1.bf16.msra.mxu0 0
    %2672 = vmatprep.subr.bf16.mxu0 0
    %2673 = vmatpush1.bf16.msra.mxu0 0
    %2674 = vmatprep.subr.bf16.mxu0 0
    %2675 = vmatpush1.bf16.msra.mxu0 0
    %2676 = vmatprep.subr.bf16.mxu0 0
    %2677 = vmatpush1.bf16.msra.mxu0 0
    %2678 = vmatprep.mubr.bf16.mxu0 0
    %2679 = vmatmul.mubr.bf16.gmra.mrb[0].mxu0 %v2644
    %v2680 = vpop.f32.mrb[0].mxu0
    %v2681 = vadd.f32 %v2631, %v2680
    %v2682 = vpop.f32.mrb[0].mxu0
    %v2683 = vpop.f32.mrb[0].mxu0
    %v2684 = vadd.f32 %v2634, %v2683
    %v2685 = vpop.f32.mrb[0].mxu0
    %2686 = vdwg.mxu0
    %2687 = vrot.lane.b32.xlu0 %v2014, 96
    %v2688 = vpop.permute.xlu0 %2687
    %2689 = vrot.lane.b32.xlu0 %v2014, 32
    %v2690 = vpop.permute.xlu0 %2689
    %v2691 = vsel %vm214, %v2688, 0
    %v2693 = vsel %vm214, %v2690, 0
    %2695 = vmatprep.subr.mxu0 0.0
    %2696 = vmatpush1.xpose.msra.mxu0 %v2693
    %2697 = vmatprep.subr.mxu0 0.0
    %2698 = vmatpush1.xpose.msra.mxu0 0.0
    %2699 = vmatprep.subr.mxu0 0.0
    %2700 = vmatpush1.xpose.msra.mxu0 0.0
    %2701 = vmatprep.subr.mxu0 0.0
    %2702 = vmatpush1.xpose.msra.mxu0 0.0
    %2703 = vmatprep.subr.mxu0 0.0
    %2704 = vmatpush1.xpose.msra.mxu0 0.0
    %2705 = vmatprep.subr.mxu0 0.0
    %2706 = vmatpush1.xpose.msra.mxu0 0.0
    %2707 = vmatprep.subr.mxu0 0.0
    %2708 = vmatpush1.xpose.msra.mxu0 0.0
    %2709 = vmatprep.subr.mxu0 0.0
    %2710 = vmatpush1.xpose.msra.mxu0 0.0
    %2711 = vmatprep.subr.mxu0 0.0
    %2712 = vmatpush1.xpose.msra.mxu0 0.0
    %2713 = vmatprep.subr.mxu0 0.0
    %2714 = vmatpush1.xpose.msra.mxu0 0.0
    %2715 = vmatprep.subr.mxu0 0.0
    %2716 = vmatpush1.xpose.msra.mxu0 0.0
    %2717 = vmatprep.subr.mxu0 0.0
    %2718 = vmatpush1.xpose.msra.mxu0 0.0
    %2719 = vmatprep.subr.mxu0 0.0
    %2720 = vmatpush1.xpose.msra.mxu0 0.0
    %2721 = vmatprep.subr.mxu0 0.0
    %2722 = vmatpush1.xpose.msra.mxu0 0.0
    %2723 = vmatprep.subr.mxu0 0.0
    %2724 = vmatpush1.xpose.msra.mxu0 0.0
    %2725 = vmatprep.subr.mxu0 0.0
    %2726 = vmatpush1.xpose.msra.mxu0 0.0
    %2727 = vmatprep.subr.mxu0 0.0
    %2728 = vmatpush1.xpose.msra.mxu0 0.0
    %2729 = vmatprep.subr.mxu0 0.0
    %2730 = vmatpush1.xpose.msra.mxu0 0.0
    %2731 = vmatprep.subr.mxu0 0.0
    %2732 = vmatpush1.xpose.msra.mxu0 0.0
    %2733 = vmatprep.subr.mxu0 0.0
    %2734 = vmatpush1.xpose.msra.mxu0 0.0
    %2735 = vmatprep.subr.mxu0 0.0
    %2736 = vmatpush1.xpose.msra.mxu0 0.0
    %2737 = vmatprep.subr.mxu0 0.0
    %2738 = vmatpush1.xpose.msra.mxu0 0.0
    %2739 = vmatprep.subr.mxu0 0.0
    %2740 = vmatpush1.xpose.msra.mxu0 0.0
    %2741 = vmatprep.subr.mxu0 0.0
    %2742 = vmatpush1.xpose.msra.mxu0 0.0
    %2743 = vmatprep.subr.mxu0 0.0
    %2744 = vmatpush1.xpose.msra.mxu0 0.0
    %2745 = vmatprep.subr.mxu0 0.0
    %2746 = vmatpush1.xpose.msra.mxu0 0.0
    %2747 = vmatprep.subr.mxu0 0.0
    %2748 = vmatpush1.xpose.msra.mxu0 0.0
    %2749 = vmatprep.subr.mxu0 0.0
    %2750 = vmatpush1.xpose.msra.mxu0 0.0
    %2751 = vmatprep.subr.mxu0 0.0
    %2752 = vmatpush1.xpose.msra.mxu0 0.0
    %2753 = vmatprep.subr.mxu0 0.0
    %2754 = vmatpush1.xpose.msra.mxu0 0.0
    %2755 = vmatprep.subr.mxu0 0.0
    %2756 = vmatpush1.xpose.msra.mxu0 0.0
    %2757 = vmatprep.subr.mxu0 0.0
    %2758 = vmatpush1.xpose.msra.mxu0 0.0
    %2759 = vmatprep.mubr.f32.mxu0 0.0
    %2760 = vmatmul.mubr.f32.gmra.mrb[0].mxu0 %v2691
    %v2761 = vpop.f32.mrb[0].mxu0
    %v2762 = vadd.f32 0.0, %v2761
    %v2763 = vpop.f32.mrb[0].mxu0
    %2764 = vdwg.mxu0
    %2765 = vrot.lane.b32.xlu0 %v2018, 96
    %v2766 = vpop.permute.xlu0 %2765
    %2767 = vrot.lane.b32.xlu0 %v2018, 32
    %v2768 = vpop.permute.xlu0 %2767
    %v2769 = vsel %vm214, %v2766, 0
    %v2771 = vsel %vm214, %v2768, 0
    %2773 = vmatprep.subr.mxu0 0.0
    %2774 = vmatpush1.xpose.msra.mxu0 %v2771
    %2775 = vmatprep.subr.mxu0 0.0
    %2776 = vmatpush1.xpose.msra.mxu0 0.0
    %2777 = vmatprep.subr.mxu0 0.0
    %2778 = vmatpush1.xpose.msra.mxu0 0.0
    %2779 = vmatprep.subr.mxu0 0.0
    %2780 = vmatpush1.xpose.msra.mxu0 0.0
    %2781 = vmatprep.subr.mxu0 0.0
    %2782 = vmatpush1.xpose.msra.mxu0 0.0
    %2783 = vmatprep.subr.mxu0 0.0
    %2784 = vmatpush1.xpose.msra.mxu0 0.0
    %2785 = vmatprep.subr.mxu0 0.0
    %2786 = vmatpush1.xpose.msra.mxu0 0.0
    %2787 = vmatprep.subr.mxu0 0.0
    %2788 = vmatpush1.xpose.msra.mxu0 0.0
    %2789 = vmatprep.subr.mxu0 0.0
    %2790 = vmatpush1.xpose.msra.mxu0 0.0
    %2791 = vmatprep.subr.mxu0 0.0
    %2792 = vmatpush1.xpose.msra.mxu0 0.0
    %2793 = vmatprep.subr.mxu0 0.0
    %2794 = vmatpush1.xpose.msra.mxu0 0.0
    %2795 = vmatprep.subr.mxu0 0.0
    %2796 = vmatpush1.xpose.msra.mxu0 0.0
    %2797 = vmatprep.subr.mxu0 0.0
    %2798 = vmatpush1.xpose.msra.mxu0 0.0
    %2799 = vmatprep.subr.mxu0 0.0
    %2800 = vmatpush1.xpose.msra.mxu0 0.0
    %2801 = vmatprep.subr.mxu0 0.0
    %2802 = vmatpush1.xpose.msra.mxu0 0.0
    %2803 = vmatprep.subr.mxu0 0.0
    %2804 = vmatpush1.xpose.msra.mxu0 0.0
    %2805 = vmatprep.subr.mxu0 0.0
    %2806 = vmatpush1.xpose.msra.mxu0 0.0
    %2807 = vmatprep.subr.mxu0 0.0
    %2808 = vmatpush1.xpose.msra.mxu0 0.0
    %2809 = vmatprep.subr.mxu0 0.0
    %2810 = vmatpush1.xpose.msra.mxu0 0.0
    %2811 = vmatprep.subr.mxu0 0.0
    %2812 = vmatpush1.xpose.msra.mxu0 0.0
    %2813 = vmatprep.subr.mxu0 0.0
    %2814 = vmatpush1.xpose.msra.mxu0 0.0
    %2815 = vmatprep.subr.mxu0 0.0
    %2816 = vmatpush1.xpose.msra.mxu0 0.0
    %2817 = vmatprep.subr.mxu0 0.0
    %2818 = vmatpush1.xpose.msra.mxu0 0.0
    %2819 = vmatprep.subr.mxu0 0.0
    %2820 = vmatpush1.xpose.msra.mxu0 0.0
    %2821 = vmatprep.subr.mxu0 0.0
    %2822 = vmatpush1.xpose.msra.mxu0 0.0
    %2823 = vmatprep.subr.mxu0 0.0
    %2824 = vmatpush1.xpose.msra.mxu0 0.0
    %2825 = vmatprep.subr.mxu0 0.0
    %2826 = vmatpush1.xpose.msra.mxu0 0.0
    %2827 = vmatprep.subr.mxu0 0.0
    %2828 = vmatpush1.xpose.msra.mxu0 0.0
    %2829 = vmatprep.subr.mxu0 0.0
    %2830 = vmatpush1.xpose.msra.mxu0 0.0
    %2831 = vmatprep.subr.mxu0 0.0
    %2832 = vmatpush1.xpose.msra.mxu0 0.0
    %2833 = vmatprep.subr.mxu0 0.0
    %2834 = vmatpush1.xpose.msra.mxu0 0.0
    %2835 = vmatprep.subr.mxu0 0.0
    %2836 = vmatpush1.xpose.msra.mxu0 0.0
    %2837 = vmatprep.mubr.f32.mxu0 0.0
    %2838 = vmatmul.mubr.f32.gmra.mrb[0].mxu0 %v2769
    %v2839 = vpop.f32.mrb[0].mxu0
    %v2840 = vadd.f32 0.0, %v2839
    %v2841 = vpop.f32.mrb[0].mxu0
    %2842 = vdwg.mxu0
    %v2843 = vsel %vm367, %v2762, -1e+30
    %v2844 = vsel %vm367, %v2840, -1e+30
    %v2845 = vsel %vm370, %v2843, -inf
    %2846 = vmax.xlane.f32.xlu0 %v2845
    %v2847 = vpop.xlane.xlu0 %2846
    %v2848 = vsel %vm370, %v2844, -inf
    %2849 = vmax.xlane.f32.xlu0 %v2848
    %v2850 = vpop.xlane.xlu0 %2849
    %v2851 = vsub.f32 %v2843, %v2847
    %v2852 = vsub.f32 %v2844, %v2850
    %v2853 = vmul.f32 %v2851, 1.442695
    %v2854 = vpow.pop %v2853
    %v2855 = vmul.f32 %v2852, 1.442695
    %v2856 = vpow.pop %v2855
    %v2857 = vsel %vm370, %v2854, 0.0
    %2858 = vadd.xlane.f32.xlu0 %v2857
    %v2859 = vpop.xlane.xlu0 %2858
    %v2860 = vsel %vm370, %v2856, 0.0
    %2861 = vadd.xlane.f32.xlu0 %v2860
    %v2862 = vpop.xlane.xlu0 %2861
    %v2863 = vrcp.pop %v2859
    %v2864 = vrcp.pop %v2862
    %v2865 = vmul.f32 %v2854, %v2863
    %v2866 = vmul.f32 %v2856, %v2864
    %v2867 = vpack.c.bf16 %v2865, %v2865
    %v2868 = vpack.c.bf16 %v2866, %v2866
    %2869 = vrot.lane.b32.xlu0 %v2211, 96
    %v2870 = vpop.permute.xlu0 %2869
    %v2872 = vsel %vm370, %v2867, 0
    %v2875 = vsel %vm400, %v2870, 0
    %2877 = vmatprep.subr.bf16.mxu0 0
    %2878 = vmatpush1.bf16.msra.mxu0 %v2875
    %2879 = vmatprep.subr.bf16.mxu0 0
    %2880 = vmatpush1.bf16.msra.mxu0 0
    %2881 = vmatprep.subr.bf16.mxu0 0
    %2882 = vmatpush1.bf16.msra.mxu0 0
    %2883 = vmatprep.subr.bf16.mxu0 0
    %2884 = vmatpush1.bf16.msra.mxu0 0
    %2885 = vmatprep.subr.bf16.mxu0 0
    %2886 = vmatpush1.bf16.msra.mxu0 0
    %2887 = vmatprep.subr.bf16.mxu0 0
    %2888 = vmatpush1.bf16.msra.mxu0 0
    %2889 = vmatprep.subr.bf16.mxu0 0
    %2890 = vmatpush1.bf16.msra.mxu0 0
    %2891 = vmatprep.subr.bf16.mxu0 0
    %2892 = vmatpush1.bf16.msra.mxu0 0
    %2893 = vmatprep.subr.bf16.mxu0 0
    %2894 = vmatpush1.bf16.msra.mxu0 0
    %2895 = vmatprep.subr.bf16.mxu0 0
    %2896 = vmatpush1.bf16.msra.mxu0 0
    %2897 = vmatprep.subr.bf16.mxu0 0
    %2898 = vmatpush1.bf16.msra.mxu0 0
    %2899 = vmatprep.subr.bf16.mxu0 0
    %2900 = vmatpush1.bf16.msra.mxu0 0
    %2901 = vmatprep.subr.bf16.mxu0 0
    %2902 = vmatpush1.bf16.msra.mxu0 0
    %2903 = vmatprep.subr.bf16.mxu0 0
    %2904 = vmatpush1.bf16.msra.mxu0 0
    %2905 = vmatprep.subr.bf16.mxu0 0
    %2906 = vmatpush1.bf16.msra.mxu0 0
    %2907 = vmatprep.subr.bf16.mxu0 0
    %2908 = vmatpush1.bf16.msra.mxu0 0
    %2909 = vmatprep.mubr.bf16.mxu0 0
    %2910 = vmatmul.mubr.bf16.gmra.mrb[0].mxu0 %v2872
    %v2911 = vpop.f32.mrb[0].mxu0
    %v2912 = vadd.f32 0.0, %v2911
    %v2913 = vpop.f32.mrb[0].mxu0
    %v2914 = vpop.f32.mrb[0].mxu0
    %v2915 = vpop.f32.mrb[0].mxu0
    %2916 = vdwg.mxu0
    %2917 = vrot.lane.b32.xlu0 %v2212, 96
    %v2918 = vpop.permute.xlu0 %2917
    %v2920 = vsel %vm370, %v2868, 0
    %v2923 = vsel %vm400, %v2918, 0
    %2925 = vmatprep.subr.bf16.mxu0 0
    %2926 = vmatpush1.bf16.msra.mxu0 %v2923
    %2927 = vmatprep.subr.bf16.mxu0 0
    %2928 = vmatpush1.bf16.msra.mxu0 0
    %2929 = vmatprep.subr.bf16.mxu0 0
    %2930 = vmatpush1.bf16.msra.mxu0 0
    %2931 = vmatprep.subr.bf16.mxu0 0
    %2932 = vmatpush1.bf16.msra.mxu0 0
    %2933 = vmatprep.subr.bf16.mxu0 0
    %2934 = vmatpush1.bf16.msra.mxu0 0
    %2935 = vmatprep.subr.bf16.mxu0 0
    %2936 = vmatpush1.bf16.msra.mxu0 0
    %2937 = vmatprep.subr.bf16.mxu0 0
    %2938 = vmatpush1.bf16.msra.mxu0 0
    %2939 = vmatprep.subr.bf16.mxu0 0
    %2940 = vmatpush1.bf16.msra.mxu0 0
    %2941 = vmatprep.subr.bf16.mxu0 0
    %2942 = vmatpush1.bf16.msra.mxu0 0
    %2943 = vmatprep.subr.bf16.mxu0 0
    %2944 = vmatpush1.bf16.msra.mxu0 0
    %2945 = vmatprep.subr.bf16.mxu0 0
    %2946 = vmatpush1.bf16.msra.mxu0 0
    %2947 = vmatprep.subr.bf16.mxu0 0
    %2948 = vmatpush1.bf16.msra.mxu0 0
    %2949 = vmatprep.subr.bf16.mxu0 0
    %2950 = vmatpush1.bf16.msra.mxu0 0
    %2951 = vmatprep.subr.bf16.mxu0 0
    %2952 = vmatpush1.bf16.msra.mxu0 0
    %2953 = vmatprep.subr.bf16.mxu0 0
    %2954 = vmatpush1.bf16.msra.mxu0 0
    %2955 = vmatprep.subr.bf16.mxu0 0
    %2956 = vmatpush1.bf16.msra.mxu0 0
    %2957 = vmatprep.mubr.bf16.mxu0 0
    %2958 = vmatmul.mubr.bf16.gmra.mrb[0].mxu0 %v2920
    %v2959 = vpop.f32.mrb[0].mxu0
    %v2960 = vadd.f32 0.0, %v2959
    %v2961 = vpop.f32.mrb[0].mxu0
    %v2962 = vpop.f32.mrb[0].mxu0
    %v2963 = vpop.f32.mrb[0].mxu0
    %2964 = vdwg.mxu0
    %v2965 = vpack.c.bf16 %v2960, %v2912
    %v2968 = vunpack.c.l.b16 %v2027
    %v2969 = vunpack.c.l.b16 %v2028
    %v2970 = vpack.c.b16 %v2969, %v2968
    %v2973 = vsel %vm214, %v2965, 0
    %2975 = vmatprep.subr.bf16.mxu0 0
    %2976 = vmatpush1.bf16.msra.mxu0 %v2970
    %2977 = vmatprep.subr.bf16.mxu0 0
    %2978 = vmatpush1.bf16.msra.mxu0 0
    %2979 = vmatprep.subr.bf16.mxu0 0
    %2980 = vmatpush1.bf16.msra.mxu0 0
    %2981 = vmatprep.subr.bf16.mxu0 0
    %2982 = vmatpush1.bf16.msra.mxu0 0
    %2983 = vmatprep.subr.bf16.mxu0 0
    %2984 = vmatpush1.bf16.msra.mxu0 0
    %2985 = vmatprep.subr.bf16.mxu0 0
    %2986 = vmatpush1.bf16.msra.mxu0 0
    %2987 = vmatprep.subr.bf16.mxu0 0
    %2988 = vmatpush1.bf16.msra.mxu0 0
    %2989 = vmatprep.subr.bf16.mxu0 0
    %2990 = vmatpush1.bf16.msra.mxu0 0
    %2991 = vmatprep.subr.bf16.mxu0 0
    %2992 = vmatpush1.bf16.msra.mxu0 0
    %2993 = vmatprep.subr.bf16.mxu0 0
    %2994 = vmatpush1.bf16.msra.mxu0 0
    %2995 = vmatprep.subr.bf16.mxu0 0
    %2996 = vmatpush1.bf16.msra.mxu0 0
    %2997 = vmatprep.subr.bf16.mxu0 0
    %2998 = vmatpush1.bf16.msra.mxu0 0
    %2999 = vmatprep.subr.bf16.mxu0 0
    %3000 = vmatpush1.bf16.msra.mxu0 0
    %3001 = vmatprep.subr.bf16.mxu0 0
    %3002 = vmatpush1.bf16.msra.mxu0 0
    %3003 = vmatprep.subr.bf16.mxu0 0
    %3004 = vmatpush1.bf16.msra.mxu0 0
    %3005 = vmatprep.subr.bf16.mxu0 0
    %3006 = vmatpush1.bf16.msra.mxu0 0
    %3007 = vmatprep.mubr.bf16.mxu0 0
    %3008 = vmatmul.mubr.bf16.gmra.mrb[0].mxu0 %v2973
    %v3009 = vpop.f32.mrb[0].mxu0
    %v3010 = vadd.f32 0.0, %v3009
    %v3011 = vpop.f32.mrb[0].mxu0
    %v3012 = vpop.f32.mrb[0].mxu0
    %v3013 = vadd.f32 0.0, %v3012
    %v3014 = vpop.f32.mrb[0].mxu0
    %3015 = vdwg.mxu0
    %v3016 = vadd.f32 %v2681, %v3010
    %v3017 = vadd.f32 %v2684, %v3013
    %3018 = vrot.lane.b32.xlu0 %v2014, 80
    %v3019 = vpop.permute.xlu0 %3018
    %3020 = vrot.lane.b32.xlu0 %v2014, 16
    %v3021 = vpop.permute.xlu0 %3020
    %v3022 = vsel %vm214, %v3019, 0
    %v3024 = vsel %vm214, %v3021, 0
    %3026 = vmatprep.subr.mxu0 0.0
    %3027 = vmatpush1.xpose.msra.mxu0 %v3024
    %3028 = vmatprep.subr.mxu0 0.0
    %3029 = vmatpush1.xpose.msra.mxu0 0.0
    %3030 = vmatprep.subr.mxu0 0.0
    %3031 = vmatpush1.xpose.msra.mxu0 0.0
    %3032 = vmatprep.subr.mxu0 0.0
    %3033 = vmatpush1.xpose.msra.mxu0 0.0
    %3034 = vmatprep.subr.mxu0 0.0
    %3035 = vmatpush1.xpose.msra.mxu0 0.0
    %3036 = vmatprep.subr.mxu0 0.0
    %3037 = vmatpush1.xpose.msra.mxu0 0.0
    %3038 = vmatprep.subr.mxu0 0.0
    %3039 = vmatpush1.xpose.msra.mxu0 0.0
    %3040 = vmatprep.subr.mxu0 0.0
    %3041 = vmatpush1.xpose.msra.mxu0 0.0
    %3042 = vmatprep.subr.mxu0 0.0
    %3043 = vmatpush1.xpose.msra.mxu0 0.0
    %3044 = vmatprep.subr.mxu0 0.0
    %3045 = vmatpush1.xpose.msra.mxu0 0.0
    %3046 = vmatprep.subr.mxu0 0.0
    %3047 = vmatpush1.xpose.msra.mxu0 0.0
    %3048 = vmatprep.subr.mxu0 0.0
    %3049 = vmatpush1.xpose.msra.mxu0 0.0
    %3050 = vmatprep.subr.mxu0 0.0
    %3051 = vmatpush1.xpose.msra.mxu0 0.0
    %3052 = vmatprep.subr.mxu0 0.0
    %3053 = vmatpush1.xpose.msra.mxu0 0.0
    %3054 = vmatprep.subr.mxu0 0.0
    %3055 = vmatpush1.xpose.msra.mxu0 0.0
    %3056 = vmatprep.subr.mxu0 0.0
    %3057 = vmatpush1.xpose.msra.mxu0 0.0
    %3058 = vmatprep.subr.mxu0 0.0
    %3059 = vmatpush1.xpose.msra.mxu0 0.0
    %3060 = vmatprep.subr.mxu0 0.0
    %3061 = vmatpush1.xpose.msra.mxu0 0.0
    %3062 = vmatprep.subr.mxu0 0.0
    %3063 = vmatpush1.xpose.msra.mxu0 0.0
    %3064 = vmatprep.subr.mxu0 0.0
    %3065 = vmatpush1.xpose.msra.mxu0 0.0
    %3066 = vmatprep.subr.mxu0 0.0
    %3067 = vmatpush1.xpose.msra.mxu0 0.0
    %3068 = vmatprep.subr.mxu0 0.0
    %3069 = vmatpush1.xpose.msra.mxu0 0.0
    %3070 = vmatprep.subr.mxu0 0.0
    %3071 = vmatpush1.xpose.msra.mxu0 0.0
    %3072 = vmatprep.subr.mxu0 0.0
    %3073 = vmatpush1.xpose.msra.mxu0 0.0
    %3074 = vmatprep.subr.mxu0 0.0
    %3075 = vmatpush1.xpose.msra.mxu0 0.0
    %3076 = vmatprep.subr.mxu0 0.0
    %3077 = vmatpush1.xpose.msra.mxu0 0.0
    %3078 = vmatprep.subr.mxu0 0.0
    %3079 = vmatpush1.xpose.msra.mxu0 0.0
    %3080 = vmatprep.subr.mxu0 0.0
    %3081 = vmatpush1.xpose.msra.mxu0 0.0
    %3082 = vmatprep.subr.mxu0 0.0
    %3083 = vmatpush1.xpose.msra.mxu0 0.0
    %3084 = vmatprep.subr.mxu0 0.0
    %3085 = vmatpush1.xpose.msra.mxu0 0.0
    %3086 = vmatprep.subr.mxu0 0.0
    %3087 = vmatpush1.xpose.msra.mxu0 0.0
    %3088 = vmatprep.subr.mxu0 0.0
    %3089 = vmatpush1.xpose.msra.mxu0 0.0
    %3090 = vmatprep.mubr.f32.mxu0 0.0
    %3091 = vmatmul.mubr.f32.gmra.mrb[0].mxu0 %v3022
    %v3092 = vpop.f32.mrb[0].mxu0
    %v3093 = vadd.f32 0.0, %v3092
    %v3094 = vpop.f32.mrb[0].mxu0
    %3095 = vdwg.mxu0
    %3096 = vrot.lane.b32.xlu0 %v2018, 80
    %v3097 = vpop.permute.xlu0 %3096
    %3098 = vrot.lane.b32.xlu0 %v2018, 16
    %v3099 = vpop.permute.xlu0 %3098
    %v3100 = vsel %vm214, %v3097, 0
    %v3102 = vsel %vm214, %v3099, 0
    %3104 = vmatprep.subr.mxu0 0.0
    %3105 = vmatpush1.xpose.msra.mxu0 %v3102
    %3106 = vmatprep.subr.mxu0 0.0
    %3107 = vmatpush1.xpose.msra.mxu0 0.0
    %3108 = vmatprep.subr.mxu0 0.0
    %3109 = vmatpush1.xpose.msra.mxu0 0.0
    %3110 = vmatprep.subr.mxu0 0.0
    %3111 = vmatpush1.xpose.msra.mxu0 0.0
    %3112 = vmatprep.subr.mxu0 0.0
    %3113 = vmatpush1.xpose.msra.mxu0 0.0
    %3114 = vmatprep.subr.mxu0 0.0
    %3115 = vmatpush1.xpose.msra.mxu0 0.0
    %3116 = vmatprep.subr.mxu0 0.0
    %3117 = vmatpush1.xpose.msra.mxu0 0.0
    %3118 = vmatprep.subr.mxu0 0.0
    %3119 = vmatpush1.xpose.msra.mxu0 0.0
    %3120 = vmatprep.subr.mxu0 0.0
    %3121 = vmatpush1.xpose.msra.mxu0 0.0
    %3122 = vmatprep.subr.mxu0 0.0
    %3123 = vmatpush1.xpose.msra.mxu0 0.0
    %3124 = vmatprep.subr.mxu0 0.0
    %3125 = vmatpush1.xpose.msra.mxu0 0.0
    %3126 = vmatprep.subr.mxu0 0.0
    %3127 = vmatpush1.xpose.msra.mxu0 0.0
    %3128 = vmatprep.subr.mxu0 0.0
    %3129 = vmatpush1.xpose.msra.mxu0 0.0
    %3130 = vmatprep.subr.mxu0 0.0
    %3131 = vmatpush1.xpose.msra.mxu0 0.0
    %3132 = vmatprep.subr.mxu0 0.0
    %3133 = vmatpush1.xpose.msra.mxu0 0.0
    %3134 = vmatprep.subr.mxu0 0.0
    %3135 = vmatpush1.xpose.msra.mxu0 0.0
    %3136 = vmatprep.subr.mxu0 0.0
    %3137 = vmatpush1.xpose.msra.mxu0 0.0
    %3138 = vmatprep.subr.mxu0 0.0
    %3139 = vmatpush1.xpose.msra.mxu0 0.0
    %3140 = vmatprep.subr.mxu0 0.0
    %3141 = vmatpush1.xpose.msra.mxu0 0.0
    %3142 = vmatprep.subr.mxu0 0.0
    %3143 = vmatpush1.xpose.msra.mxu0 0.0
    %3144 = vmatprep.subr.mxu0 0.0
    %3145 = vmatpush1.xpose.msra.mxu0 0.0
    %3146 = vmatprep.subr.mxu0 0.0
    %3147 = vmatpush1.xpose.msra.mxu0 0.0
    %3148 = vmatprep.subr.mxu0 0.0
    %3149 = vmatpush1.xpose.msra.mxu0 0.0
    %3150 = vmatprep.subr.mxu0 0.0
    %3151 = vmatpush1.xpose.msra.mxu0 0.0
    %3152 = vmatprep.subr.mxu0 0.0
    %3153 = vmatpush1.xpose.msra.mxu0 0.0
    %3154 = vmatprep.subr.mxu0 0.0
    %3155 = vmatpush1.xpose.msra.mxu0 0.0
    %3156 = vmatprep.subr.mxu0 0.0
    %3157 = vmatpush1.xpose.msra.mxu0 0.0
    %3158 = vmatprep.subr.mxu0 0.0
    %3159 = vmatpush1.xpose.msra.mxu0 0.0
    %3160 = vmatprep.subr.mxu0 0.0
    %3161 = vmatpush1.xpose.msra.mxu0 0.0
    %3162 = vmatprep.subr.mxu0 0.0
    %3163 = vmatpush1.xpose.msra.mxu0 0.0
    %3164 = vmatprep.subr.mxu0 0.0
    %3165 = vmatpush1.xpose.msra.mxu0 0.0
    %3166 = vmatprep.subr.mxu0 0.0
    %3167 = vmatpush1.xpose.msra.mxu0 0.0
    %3168 = vmatprep.mubr.f32.mxu0 0.0
    %3169 = vmatmul.mubr.f32.gmra.mrb[0].mxu0 %v3100
    %v3170 = vpop.f32.mrb[0].mxu0
    %v3171 = vadd.f32 0.0, %v3170
    %v3172 = vpop.f32.mrb[0].mxu0
    %3173 = vdwg.mxu0
    %v3174 = vsel %vm367, %v3093, -1e+30
    %v3175 = vsel %vm367, %v3171, -1e+30
    %v3176 = vsel %vm370, %v3174, -inf
    %3177 = vmax.xlane.f32.xlu0 %v3176
    %v3178 = vpop.xlane.xlu0 %3177
    %v3179 = vsel %vm370, %v3175, -inf
    %3180 = vmax.xlane.f32.xlu0 %v3179
    %v3181 = vpop.xlane.xlu0 %3180
    %v3182 = vsub.f32 %v3174, %v3178
    %v3183 = vsub.f32 %v3175, %v3181
    %v3184 = vmul.f32 %v3182, 1.442695
    %v3185 = vpow.pop %v3184
    %v3186 = vmul.f32 %v3183, 1.442695
    %v3187 = vpow.pop %v3186
    %v3188 = vsel %vm370, %v3185, 0.0
    %3189 = vadd.xlane.f32.xlu0 %v3188
    %v3190 = vpop.xlane.xlu0 %3189
    %v3191 = vsel %vm370, %v3187, 0.0
    %3192 = vadd.xlane.f32.xlu0 %v3191
    %v3193 = vpop.xlane.xlu0 %3192
    %v3194 = vrcp.pop %v3190
    %v3195 = vrcp.pop %v3193
    %v3196 = vmul.f32 %v3185, %v3194
    %v3197 = vmul.f32 %v3187, %v3195
    %v3198 = vpack.c.bf16 %v3196, %v3196
    %v3199 = vpack.c.bf16 %v3197, %v3197
    %3200 = vrot.lane.b32.xlu0 %v2211, 80
    %v3201 = vpop.permute.xlu0 %3200
    %v3203 = vsel %vm370, %v3198, 0
    %v3206 = vsel %vm400, %v3201, 0
    %3208 = vmatprep.subr.bf16.mxu0 0
    %3209 = vmatpush1.bf16.msra.mxu0 %v3206
    %3210 = vmatprep.subr.bf16.mxu0 0
    %3211 = vmatpush1.bf16.msra.mxu0 0
    %3212 = vmatprep.subr.bf16.mxu0 0
    %3213 = vmatpush1.bf16.msra.mxu0 0
    %3214 = vmatprep.subr.bf16.mxu0 0
    %3215 = vmatpush1.bf16.msra.mxu0 0
    %3216 = vmatprep.subr.bf16.mxu0 0
    %3217 = vmatpush1.bf16.msra.mxu0 0
    %3218 = vmatprep.subr.bf16.mxu0 0
    %3219 = vmatpush1.bf16.msra.mxu0 0
    %3220 = vmatprep.subr.bf16.mxu0 0
    %3221 = vmatpush1.bf16.msra.mxu0 0
    %3222 = vmatprep.subr.bf16.mxu0 0
    %3223 = vmatpush1.bf16.msra.mxu0 0
    %3224 = vmatprep.subr.bf16.mxu0 0
    %3225 = vmatpush1.bf16.msra.mxu0 0
    %3226 = vmatprep.subr.bf16.mxu0 0
    %3227 = vmatpush1.bf16.msra.mxu0 0
    %3228 = vmatprep.subr.bf16.mxu0 0
    %3229 = vmatpush1.bf16.msra.mxu0 0
    %3230 = vmatprep.subr.bf16.mxu0 0
    %3231 = vmatpush1.bf16.msra.mxu0 0
    %3232 = vmatprep.subr.bf16.mxu0 0
    %3233 = vmatpush1.bf16.msra.mxu0 0
    %3234 = vmatprep.subr.bf16.mxu0 0
    %3235 = vmatpush1.bf16.msra.mxu0 0
    %3236 = vmatprep.subr.bf16.mxu0 0
    %3237 = vmatpush1.bf16.msra.mxu0 0
    %3238 = vmatprep.subr.bf16.mxu0 0
    %3239 = vmatpush1.bf16.msra.mxu0 0
    %3240 = vmatprep.mubr.bf16.mxu0 0
    %3241 = vmatmul.mubr.bf16.gmra.mrb[0].mxu0 %v3203
    %v3242 = vpop.f32.mrb[0].mxu0
    %v3243 = vadd.f32 0.0, %v3242
    %v3244 = vpop.f32.mrb[0].mxu0
    %v3245 = vpop.f32.mrb[0].mxu0
    %v3246 = vpop.f32.mrb[0].mxu0
    %3247 = vdwg.mxu0
    %3248 = vrot.lane.b32.xlu0 %v2212, 80
    %v3249 = vpop.permute.xlu0 %3248
    %v3251 = vsel %vm370, %v3199, 0
    %v3254 = vsel %vm400, %v3249, 0
    %3256 = vmatprep.subr.bf16.mxu0 0
    %3257 = vmatpush1.bf16.msra.mxu0 %v3254
    %3258 = vmatprep.subr.bf16.mxu0 0
    %3259 = vmatpush1.bf16.msra.mxu0 0
    %3260 = vmatprep.subr.bf16.mxu0 0
    %3261 = vmatpush1.bf16.msra.mxu0 0
    %3262 = vmatprep.subr.bf16.mxu0 0
    %3263 = vmatpush1.bf16.msra.mxu0 0
    %3264 = vmatprep.subr.bf16.mxu0 0
    %3265 = vmatpush1.bf16.msra.mxu0 0
    %3266 = vmatprep.subr.bf16.mxu0 0
    %3267 = vmatpush1.bf16.msra.mxu0 0
    %3268 = vmatprep.subr.bf16.mxu0 0
    %3269 = vmatpush1.bf16.msra.mxu0 0
    %3270 = vmatprep.subr.bf16.mxu0 0
    %3271 = vmatpush1.bf16.msra.mxu0 0
    %3272 = vmatprep.subr.bf16.mxu0 0
    %3273 = vmatpush1.bf16.msra.mxu0 0
    %3274 = vmatprep.subr.bf16.mxu0 0
    %3275 = vmatpush1.bf16.msra.mxu0 0
    %3276 = vmatprep.subr.bf16.mxu0 0
    %3277 = vmatpush1.bf16.msra.mxu0 0
    %3278 = vmatprep.subr.bf16.mxu0 0
    %3279 = vmatpush1.bf16.msra.mxu0 0
    %3280 = vmatprep.subr.bf16.mxu0 0
    %3281 = vmatpush1.bf16.msra.mxu0 0
    %3282 = vmatprep.subr.bf16.mxu0 0
    %3283 = vmatpush1.bf16.msra.mxu0 0
    %3284 = vmatprep.subr.bf16.mxu0 0
    %3285 = vmatpush1.bf16.msra.mxu0 0
    %3286 = vmatprep.subr.bf16.mxu0 0
    %3287 = vmatpush1.bf16.msra.mxu0 0
    %3288 = vmatprep.mubr.bf16.mxu0 0
    %3289 = vmatmul.mubr.bf16.gmra.mrb[0].mxu0 %v3251
    %v3290 = vpop.f32.mrb[0].mxu0
    %v3291 = vadd.f32 0.0, %v3290
    %v3292 = vpop.f32.mrb[0].mxu0
    %v3293 = vpop.f32.mrb[0].mxu0
    %v3294 = vpop.f32.mrb[0].mxu0
    %3295 = vdwg.mxu0
    %v3296 = vpack.c.bf16 %v3291, %v3243
    %v3299 = vunpack.c.l.b16 %v2029
    %v3300 = vunpack.c.l.b16 %v2030
    %v3301 = vpack.c.b16 %v3300, %v3299
    %v3304 = vsel %vm214, %v3296, 0
    %3306 = vmatprep.subr.bf16.mxu0 0
    %3307 = vmatpush1.bf16.msra.mxu0 %v3301
    %3308 = vmatprep.subr.bf16.mxu0 0
    %3309 = vmatpush1.bf16.msra.mxu0 0
    %3310 = vmatprep.subr.bf16.mxu0 0
    %3311 = vmatpush1.bf16.msra.mxu0 0
    %3312 = vmatprep.subr.bf16.mxu0 0
    %3313 = vmatpush1.bf16.msra.mxu0 0
    %3314 = vmatprep.subr.bf16.mxu0 0
    %3315 = vmatpush1.bf16.msra.mxu0 0
    %3316 = vmatprep.subr.bf16.mxu0 0
    %3317 = vmatpush1.bf16.msra.mxu0 0
    %3318 = vmatprep.subr.bf16.mxu0 0
    %3319 = vmatpush1.bf16.msra.mxu0 0
    %3320 = vmatprep.subr.bf16.mxu0 0
    %3321 = vmatpush1.bf16.msra.mxu0 0
    %3322 = vmatprep.subr.bf16.mxu0 0
    %3323 = vmatpush1.bf16.msra.mxu0 0
    %3324 = vmatprep.subr.bf16.mxu0 0
    %3325 = vmatpush1.bf16.msra.mxu0 0
    %3326 = vmatprep.subr.bf16.mxu0 0
    %3327 = vmatpush1.bf16.msra.mxu0 0
    %3328 = vmatprep.subr.bf16.mxu0 0
    %3329 = vmatpush1.bf16.msra.mxu0 0
    %3330 = vmatprep.subr.bf16.mxu0 0
    %3331 = vmatpush1.bf16.msra.mxu0 0
    %3332 = vmatprep.subr.bf16.mxu0 0
    %3333 = vmatpush1.bf16.msra.mxu0 0
    %3334 = vmatprep.subr.bf16.mxu0 0
    %3335 = vmatpush1.bf16.msra.mxu0 0
    %3336 = vmatprep.subr.bf16.mxu0 0
    %3337 = vmatpush1.bf16.msra.mxu0 0
    %3338 = vmatprep.mubr.bf16.mxu0 0
    %3339 = vmatmul.mubr.bf16.gmra.mrb[0].mxu0 %v3304
    %v3340 = vpop.f32.mrb[0].mxu0
    %v3341 = vadd.f32 0.0, %v3340
    %v3342 = vpop.f32.mrb[0].mxu0
    %v3343 = vpop.f32.mrb[0].mxu0
    %v3344 = vadd.f32 0.0, %v3343
    %v3345 = vpop.f32.mrb[0].mxu0
    %3346 = vdwg.mxu0
    %v3347 = vadd.f32 %v3016, %v3341
    %v3348 = vadd.f32 %v3017, %v3344
    %v3349 = vadd.f32 %v1878, %v3347
    %v3350 = vadd.f32 %v1879, %v3348
    %s3351 = scalar_lea.vmem %s5, 1
    %v3352 = vld [vmem:[%s3351] sm:$0x1]
    %v3354 = vlaneseq
    %v3355 = vshrl.u32 %v3354, 7
    %v3356 = vsub.s32 0, %v3355
    %v3357 = vrot.slane %v3352, %v3356
    %v3359 = vadd.f32 %v3349, %v3357
    %v3360 = vadd.f32 %v3350, %v3357
    %s3361 = scalar_lea.vmem %s6, 1
    %v3362 = vld [vmem:[%s3361] sm:$0x1]
    %s3363 = scalar_lea.vmem %s7, 1
    %v3364 = vld [vmem:[%s3363] sm:$0x1]
    %v3365 = vsel %vm64, %v3359, 0.0
    %3366 = vadd.xlane.f32.xlu0 %v3365
    %v3367 = vpop.xlane.xlu0 %3366
    %v3368 = vsel %vm64, %v3360, 0.0
    %3369 = vadd.xlane.f32.xlu0 %v3368
    %v3370 = vpop.xlane.xlu0 %3369
    %v3371 = vmul.f32 %v3367, %v71
    %v3372 = vmul.f32 %v3370, %v71
    %v3373 = vsub.f32 %v3359, %v3371
    %v3374 = vsub.f32 %v3360, %v3372
    %v3375 = vmul.f32 %v3373, %v3373
    %v3376 = vmul.f32 %v3374, %v3374
    %v3377 = vsel %vm64, %v3375, 0.0
    %3378 = vadd.xlane.f32.xlu0 %v3377
    %v3379 = vpop.xlane.xlu0 %3378
    %v3380 = vsel %vm64, %v3376, 0.0
    %3381 = vadd.xlane.f32.xlu0 %v3380
    %v3382 = vpop.xlane.xlu0 %3381
    %v3383 = vmul.f32 %v3379, %v71
    %v3384 = vmul.f32 %v3382, %v71
    %v3385 = vadd.f32 %v3383, 1e-05
    %v3386 = vadd.f32 %v3384, 1e-05
    %v3387 = vrsqrt.pop %v3385
    %v3388 = vrsqrt.pop %v3386
    %v3389 = vmul.f32 %v3373, %v3387
    %v3390 = vmul.f32 %v3374, %v3388
    %v3392 = vlaneseq
    %v3393 = vshrl.u32 %v3392, 7
    %v3394 = vsub.s32 0, %v3393
    %v3395 = vrot.slane %v3362, %v3394
    %v3397 = vmul.f32 %v3389, %v3395
    %v3398 = vmul.f32 %v3390, %v3395
    %v3400 = vlaneseq
    %v3401 = vshrl.u32 %v3400, 7
    %v3402 = vsub.s32 0, %v3401
    %v3403 = vrot.slane %v3364, %v3402
    %v3405 = vadd.f32 %v3397, %v3403
    %v3406 = vadd.f32 %v3398, %v3403
    %v3407 = vpack.c.bf16 %v3406, %v3405
    %s3408 = scalar_lea.vmem %s8, 64
    %v3409 = vld [vmem:[%s3408] sm:$0xff]
    %v3410 = vld [vmem:[%s3408 + $0x8] sm:$0xff]
    %v3411 = vld [vmem:[%s3408 + $0x10] sm:$0xff]
    %v3412 = vld [vmem:[%s3408 + $0x18] sm:$0xff]
    %v3413 = vld [vmem:[%s3408 + $0x20] sm:$0xff]
    %v3414 = vld [vmem:[%s3408 + $0x28] sm:$0xff]
    %v3415 = vld [vmem:[%s3408 + $0x30] sm:$0xff]
    %v3416 = vld [vmem:[%s3408 + $0x38] sm:$0xff]
    %s3417 = scalar_lea.vmem %s9, 2
    %v3418 = vld [vmem:[%s3417] sm:$0x3]
    %v3420 = vlaneseq
    %v3421 = vshrl.u32 %v3420, 7
    %v3422 = vsub.s32 0, %v3421
    %v3423 = vrot.slane %v3418, %v3422
    %v3424 = vlaneseq
    %v3425 = vshrl.u32 %v3424, 7
    %v3426 = vsub.s32 1, %v3425
    %v3427 = vrot.slane %v3418, %v3426
    %v3438 = vunpack.c.l.b16 %v3409
    %v3439 = vunpack.c.h.b16 %v3409
    %v3440 = vunpack.c.l.b16 %v3410
    %v3441 = vunpack.c.h.b16 %v3410
    %v3442 = vunpack.c.l.b16 %v3411
    %v3443 = vunpack.c.h.b16 %v3411
    %v3444 = vunpack.c.l.b16 %v3412
    %v3445 = vunpack.c.h.b16 %v3412
    %v3446 = vunpack.c.l.b16 %v3413
    %v3447 = vunpack.c.h.b16 %v3413
    %v3448 = vunpack.c.l.b16 %v3414
    %v3449 = vunpack.c.h.b16 %v3414
    %v3450 = vunpack.c.l.b16 %v3415
    %v3451 = vunpack.c.h.b16 %v3415
    %v3452 = vunpack.c.l.b16 %v3416
    %v3453 = vunpack.c.h.b16 %v3416
    %v3454 = vpack.c.b16 %v3440, %v3438
    %v3455 = vpack.c.b16 %v3441, %v3439
    %v3456 = vpack.c.b16 %v3444, %v3442
    %v3457 = vpack.c.b16 %v3445, %v3443
    %v3458 = vpack.c.b16 %v3448, %v3446
    %v3459 = vpack.c.b16 %v3449, %v3447
    %v3460 = vpack.c.b16 %v3452, %v3450
    %v3461 = vpack.c.b16 %v3453, %v3451
    %v3471 = vsel %vm64, %v3407, 0
    %3473 = vmatprep.subr.bf16.mxu0 %v3455
    %3474 = vmatpush1.bf16.msra.mxu0 %v3454
    %3475 = vmatprep.subr.bf16.mxu0 %v3457
    %3476 = vmatpush1.bf16.msra.mxu0 %v3456
    %3477 = vmatprep.subr.bf16.mxu0 %v3459
    %3478 = vmatpush1.bf16.msra.mxu0 %v3458
    %3479 = vmatprep.subr.bf16.mxu0 %v3461
    %3480 = vmatpush1.bf16.msra.mxu0 %v3460
    %3481 = vmatprep.subr.bf16.mxu0 0
    %3482 = vmatpush1.bf16.msra.mxu0 0
    %3483 = vmatprep.subr.bf16.mxu0 0
    %3484 = vmatpush1.bf16.msra.mxu0 0
    %3485 = vmatprep.subr.bf16.mxu0 0
    %3486 = vmatpush1.bf16.msra.mxu0 0
    %3487 = vmatprep.subr.bf16.mxu0 0
    %3488 = vmatpush1.bf16.msra.mxu0 0
    %3489 = vmatprep.subr.bf16.mxu0 0
    %3490 = vmatpush1.bf16.msra.mxu0 0
    %3491 = vmatprep.subr.bf16.mxu0 0
    %3492 = vmatpush1.bf16.msra.mxu0 0
    %3493 = vmatprep.subr.bf16.mxu0 0
    %3494 = vmatpush1.bf16.msra.mxu0 0
    %3495 = vmatprep.subr.bf16.mxu0 0
    %3496 = vmatpush1.bf16.msra.mxu0 0
    %3497 = vmatprep.subr.bf16.mxu0 0
    %3498 = vmatpush1.bf16.msra.mxu0 0
    %3499 = vmatprep.subr.bf16.mxu0 0
    %3500 = vmatpush1.bf16.msra.mxu0 0
    %3501 = vmatprep.subr.bf16.mxu0 0
    %3502 = vmatpush1.bf16.msra.mxu0 0
    %3503 = vmatprep.subr.bf16.mxu0 0
    %3504 = vmatpush1.bf16.msra.mxu0 0
    %3505 = vmatprep.mubr.bf16.mxu0 0
    %3506 = vmatmul.mubr.bf16.gmra.mrb[0].mxu0 %v3471
    %v3507 = vpop.f32.mrb[0].mxu0
    %v3508 = vadd.f32 %v3423, %v3507
    %v3509 = vpop.f32.mrb[0].mxu0
    %v3510 = vadd.f32 %v3427, %v3509
    %v3511 = vpop.f32.mrb[0].mxu0
    %v3512 = vadd.f32 %v3423, %v3511
    %v3513 = vpop.f32.mrb[0].mxu0
    %v3514 = vadd.f32 %v3427, %v3513
    %3515 = vdwg.mxu0
    %v3516 = vmax.f32 %v3508, 0.0
    %v3517 = vmax.f32 %v3510, 0.0
    %v3518 = vmax.f32 %v3512, 0.0
    %v3519 = vmax.f32 %v3514, 0.0
    %v3520 = vpack.c.bf16 %v3518, %v3516
    %v3521 = vpack.c.bf16 %v3519, %v3517
    %s3522 = scalar_lea.vmem %s10, 128
    %v3523 = vld [vmem:[%s3522] sm:$0xf]
    %v3524 = vld [vmem:[%s3522 + $0x4] sm:$0xf]
    %v3525 = vld [vmem:[%s3522 + $0x8] sm:$0xf]
    %v3526 = vld [vmem:[%s3522 + $0xc] sm:$0xf]
    %v3527 = vld [vmem:[%s3522 + $0x10] sm:$0xf]
    %v3528 = vld [vmem:[%s3522 + $0x14] sm:$0xf]
    %v3529 = vld [vmem:[%s3522 + $0x18] sm:$0xf]
    %v3530 = vld [vmem:[%s3522 + $0x1c] sm:$0xf]
    %v3531 = vld [vmem:[%s3522 + $0x20] sm:$0xf]
    %v3532 = vld [vmem:[%s3522 + $0x24] sm:$0xf]
    %v3533 = vld [vmem:[%s3522 + $0x28] sm:$0xf]
    %v3534 = vld [vmem:[%s3522 + $0x2c] sm:$0xf]
    %v3535 = vld [vmem:[%s3522 + $0x30] sm:$0xf]
    %v3536 = vld [vmem:[%s3522 + $0x34] sm:$0xf]
    %v3537 = vld [vmem:[%s3522 + $0x38] sm:$0xf]
    %v3538 = vld [vmem:[%s3522 + $0x3c] sm:$0xf]
    %v3539 = vld [vmem:[%s3522 + $0x40] sm:$0xf]
    %v3540 = vld [vmem:[%s3522 + $0x44] sm:$0xf]
    %v3541 = vld [vmem:[%s3522 + $0x48] sm:$0xf]
    %v3542 = vld [vmem:[%s3522 + $0x4c] sm:$0xf]
    %v3543 = vld [vmem:[%s3522 + $0x50] sm:$0xf]
    %v3544 = vld [vmem:[%s3522 + $0x54] sm:$0xf]
    %v3545 = vld [vmem:[%s3522 + $0x58] sm:$0xf]
    %v3546 = vld [vmem:[%s3522 + $0x5c] sm:$0xf]
    %v3547 = vld [vmem:[%s3522 + $0x60] sm:$0xf]
    %v3548 = vld [vmem:[%s3522 + $0x64] sm:$0xf]
    %v3549 = vld [vmem:[%s3522 + $0x68] sm:$0xf]
    %v3550 = vld [vmem:[%s3522 + $0x6c] sm:$0xf]
    %v3551 = vld [vmem:[%s3522 + $0x70] sm:$0xf]
    %v3552 = vld [vmem:[%s3522 + $0x74] sm:$0xf]
    %v3553 = vld [vmem:[%s3522 + $0x78] sm:$0xf]
    %v3554 = vld [vmem:[%s3522 + $0x7c] sm:$0xf]
    %s3555 = scalar_lea.vmem %s11, 1
    %v3556 = vld [vmem:[%s3555] sm:$0x1]
    %v3558 = vlaneseq
    %v3559 = vshrl.u32 %v3558, 7
    %v3560 = vsub.s32 0, %v3559
    %v3561 = vrot.slane %v3556, %v3560
    %v3595 = vunpack.c.l.b16 %v3523
    %v3596 = vunpack.c.l.b16 %v3524
    %v3597 = vunpack.c.l.b16 %v3525
    %v3598 = vunpack.c.l.b16 %v3526
    %v3599 = vunpack.c.l.b16 %v3527
    %v3600 = vunpack.c.l.b16 %v3528
    %v3601 = vunpack.c.l.b16 %v3529
    %v3602 = vunpack.c.l.b16 %v3530
    %v3603 = vunpack.c.l.b16 %v3531
    %v3604 = vunpack.c.l.b16 %v3532
    %v3605 = vunpack.c.l.b16 %v3533
    %v3606 = vunpack.c.l.b16 %v3534
    %v3607 = vunpack.c.l.b16 %v3535
    %v3608 = vunpack.c.l.b16 %v3536
    %v3609 = vunpack.c.l.b16 %v3537
    %v3610 = vunpack.c.l.b16 %v3538
    %v3611 = vunpack.c.l.b16 %v3539
    %v3612 = vunpack.c.l.b16 %v3540
    %v3613 = vunpack.c.l.b16 %v3541
    %v3614 = vunpack.c.l.b16 %v3542
    %v3615 = vunpack.c.l.b16 %v3543
    %v3616 = vunpack.c.l.b16 %v3544
    %v3617 = vunpack.c.l.b16 %v3545
    %v3618 = vunpack.c.l.b16 %v3546
    %v3619 = vunpack.c.l.b16 %v3547
    %v3620 = vunpack.c.l.b16 %v3548
    %v3621 = vunpack.c.l.b16 %v3549
    %v3622 = vunpack.c.l.b16 %v3550
    %v3623 = vunpack.c.l.b16 %v3551
    %v3624 = vunpack.c.l.b16 %v3552
    %v3625 = vunpack.c.l.b16 %v3553
    %v3626 = vunpack.c.l.b16 %v3554
    %v3627 = vpack.c.b16 %v3596, %v3595
    %v3628 = vpack.c.b16 %v3598, %v3597
    %v3629 = vpack.c.b16 %v3600, %v3599
    %v3630 = vpack.c.b16 %v3602, %v3601
    %v3631 = vpack.c.b16 %v3604, %v3603
    %v3632 = vpack.c.b16 %v3606, %v3605
    %v3633 = vpack.c.b16 %v3608, %v3607
    %v3634 = vpack.c.b16 %v3610, %v3609
    %v3635 = vpack.c.b16 %v3612, %v3611
    %v3636 = vpack.c.b16 %v3614, %v3613
    %v3637 = vpack.c.b16 %v3616, %v3615
    %v3638 = vpack.c.b16 %v3618, %v3617
    %v3639 = vpack.c.b16 %v3620, %v3619
    %v3640 = vpack.c.b16 %v3622, %v3621
    %v3641 = vpack.c.b16 %v3624, %v3623
    %v3642 = vpack.c.b16 %v3626, %v3625
    %3659 = vmatprep.subr.bf16.mxu0 0
    %3660 = vmatpush1.bf16.msra.mxu0 %v3627
    %3661 = vmatprep.subr.bf16.mxu0 0
    %3662 = vmatpush1.bf16.msra.mxu0 %v3628
    %3663 = vmatprep.subr.bf16.mxu0 0
    %3664 = vmatpush1.bf16.msra.mxu0 %v3629
    %3665 = vmatprep.subr.bf16.mxu0 0
    %3666 = vmatpush1.bf16.msra.mxu0 %v3630
    %3667 = vmatprep.subr.bf16.mxu0 0
    %3668 = vmatpush1.bf16.msra.mxu0 %v3631
    %3669 = vmatprep.subr.bf16.mxu0 0
    %3670 = vmatpush1.bf16.msra.mxu0 %v3632
    %3671 = vmatprep.subr.bf16.mxu0 0
    %3672 = vmatpush1.bf16.msra.mxu0 %v3633
    %3673 = vmatprep.subr.bf16.mxu0 0
    %3674 = vmatpush1.bf16.msra.mxu0 %v3634
    %3675 = vmatprep.subr.bf16.mxu0 0
    %3676 = vmatpush1.bf16.msra.mxu0 %v3635
    %3677 = vmatprep.subr.bf16.mxu0 0
    %3678 = vmatpush1.bf16.msra.mxu0 %v3636
    %3679 = vmatprep.subr.bf16.mxu0 0
    %3680 = vmatpush1.bf16.msra.mxu0 %v3637
    %3681 = vmatprep.subr.bf16.mxu0 0
    %3682 = vmatpush1.bf16.msra.mxu0 %v3638
    %3683 = vmatprep.subr.bf16.mxu0 0
    %3684 = vmatpush1.bf16.msra.mxu0 %v3639
    %3685 = vmatprep.subr.bf16.mxu0 0
    %3686 = vmatpush1.bf16.msra.mxu0 %v3640
    %3687 = vmatprep.subr.bf16.mxu0 0
    %3688 = vmatpush1.bf16.msra.mxu0 %v3641
    %3689 = vmatprep.subr.bf16.mxu0 0
    %3690 = vmatpush1.bf16.msra.mxu0 %v3642
    %3691 = vmatprep.mubr.bf16.mxu0 %v3521
    %3692 = vmatmul.mubr.bf16.gmra.mrb[0].mxu0 %v3520
    %v3693 = vpop.f32.mrb[0].mxu0
    %v3694 = vadd.f32 %v3561, %v3693
    %v3695 = vpop.f32.mrb[0].mxu0
    %v3696 = vpop.f32.mrb[0].mxu0
    %v3697 = vadd.f32 %v3561, %v3696
    %v3698 = vpop.f32.mrb[0].mxu0
    %3699 = vdwg.mxu0
    %v3700 = vadd.f32 %v3359, %v3694
    %v3701 = vadd.f32 %v3360, %v3697
    %v3702 = vld [vmem:[%s12] sm:$0x1]
    %v3703 = vld [vmem:[%s13] sm:$0x1]
    %v3704 = vsel %vm64, %v3700, 0.0
    %3705 = vadd.xlane.f32.xlu0 %v3704
    %v3706 = vpop.xlane.xlu0 %3705
    %v3707 = vsel %vm64, %v3701, 0.0
    %3708 = vadd.xlane.f32.xlu0 %v3707
    %v3709 = vpop.xlane.xlu0 %3708
    %v3710 = vmul.f32 %v3706, %v71
    %v3711 = vmul.f32 %v3709, %v71
    %v3712 = vsub.f32 %v3700, %v3710
    %v3713 = vsub.f32 %v3701, %v3711
    %v3714 = vmul.f32 %v3712, %v3712
    %v3715 = vmul.f32 %v3713, %v3713
    %v3716 = vsel %vm64, %v3714, 0.0
    %3717 = vadd.xlane.f32.xlu0 %v3716
    %v3718 = vpop.xlane.xlu0 %3717
    %v3719 = vsel %vm64, %v3715, 0.0
    %3720 = vadd.xlane.f32.xlu0 %v3719
    %v3721 = vpop.xlane.xlu0 %3720
    %v3722 = vmul.f32 %v3718, %v71
    %v3723 = vmul.f32 %v3721, %v71
    %v3724 = vadd.f32 %v3722, 1e-05
    %v3725 = vadd.f32 %v3723, 1e-05
    %v3726 = vrsqrt.pop %v3724
    %v3727 = vrsqrt.pop %v3725
    %v3728 = vmul.f32 %v3712, %v3726
    %v3729 = vmul.f32 %v3713, %v3727
    %v3731 = vlaneseq
    %v3732 = vshrl.u32 %v3731, 7
    %v3733 = vsub.s32 0, %v3732
    %v3734 = vrot.slane %v3702, %v3733
    %v3736 = vmul.f32 %v3728, %v3734
    %v3737 = vmul.f32 %v3729, %v3734
    %v3739 = vlaneseq
    %v3740 = vshrl.u32 %v3739, 7
    %v3741 = vsub.s32 0, %v3740
    %v3742 = vrot.slane %v3703, %v3741
    %v3744 = vadd.f32 %v3736, %v3742
    %v3745 = vadd.f32 %v3737, %v3742
    %v3746 = vpack.c.bf16 %v3745, %v3744
    %v3747 = vld [vmem:[%s14] sm:$0xff]
    %v3748 = vld [vmem:[%s14 + $0x8] sm:$0xff]
    %v3749 = vld [vmem:[%s14 + $0x10] sm:$0xff]
    %v3750 = vld [vmem:[%s14 + $0x18] sm:$0xff]
    %v3751 = vld [vmem:[%s14 + $0x20] sm:$0xff]
    %v3752 = vld [vmem:[%s14 + $0x28] sm:$0xff]
    %v3753 = vld [vmem:[%s14 + $0x30] sm:$0xff]
    %v3754 = vld [vmem:[%s14 + $0x38] sm:$0xff]
    %v3755 = vld [vmem:[%s15] sm:$0x3]
    %v3757 = vlaneseq
    %v3758 = vshrl.u32 %v3757, 7
    %v3759 = vsub.s32 0, %v3758
    %v3760 = vrot.slane %v3755, %v3759
    %v3761 = vlaneseq
    %v3762 = vshrl.u32 %v3761, 7
    %v3763 = vsub.s32 1, %v3762
    %v3764 = vrot.slane %v3755, %v3763
    %v3775 = vunpack.c.l.b16 %v3747
    %v3776 = vunpack.c.h.b16 %v3747
    %v3777 = vunpack.c.l.b16 %v3748
    %v3778 = vunpack.c.h.b16 %v3748
    %v3779 = vunpack.c.l.b16 %v3749
    %v3780 = vunpack.c.h.b16 %v3749
    %v3781 = vunpack.c.l.b16 %v3750
    %v3782 = vunpack.c.h.b16 %v3750
    %v3783 = vunpack.c.l.b16 %v3751
    %v3784 = vunpack.c.h.b16 %v3751
    %v3785 = vunpack.c.l.b16 %v3752
    %v3786 = vunpack.c.h.b16 %v3752
    %v3787 = vunpack.c.l.b16 %v3753
    %v3788 = vunpack.c.h.b16 %v3753
    %v3789 = vunpack.c.l.b16 %v3754
    %v3790 = vunpack.c.h.b16 %v3754
    %v3791 = vpack.c.b16 %v3777, %v3775
    %v3792 = vpack.c.b16 %v3778, %v3776
    %v3793 = vpack.c.b16 %v3781, %v3779
    %v3794 = vpack.c.b16 %v3782, %v3780
    %v3795 = vpack.c.b16 %v3785, %v3783
    %v3796 = vpack.c.b16 %v3786, %v3784
    %v3797 = vpack.c.b16 %v3789, %v3787
    %v3798 = vpack.c.b16 %v3790, %v3788
    %v3808 = vsel %vm64, %v3746, 0
    %3810 = vmatprep.subr.bf16.mxu0 %v3792
    %3811 = vmatpush1.bf16.msra.mxu0 %v3791
    %3812 = vmatprep.subr.bf16.mxu0 %v3794
    %3813 = vmatpush1.bf16.msra.mxu0 %v3793
    %3814 = vmatprep.subr.bf16.mxu0 %v3796
    %3815 = vmatpush1.bf16.msra.mxu0 %v3795
    %3816 = vmatprep.subr.bf16.mxu0 %v3798
    %3817 = vmatpush1.bf16.msra.mxu0 %v3797
    %3818 = vmatprep.subr.bf16.mxu0 0
    %3819 = vmatpush1.bf16.msra.mxu0 0
    %3820 = vmatprep.subr.bf16.mxu0 0
    %3821 = vmatpush1.bf16.msra.mxu0 0
    %3822 = vmatprep.subr.bf16.mxu0 0
    %3823 = vmatpush1.bf16.msra.mxu0 0
    %3824 = vmatprep.subr.bf16.mxu0 0
    %3825 = vmatpush1.bf16.msra.mxu0 0
    %3826 = vmatprep.subr.bf16.mxu0 0
    %3827 = vmatpush1.bf16.msra.mxu0 0
    %3828 = vmatprep.subr.bf16.mxu0 0
    %3829 = vmatpush1.bf16.msra.mxu0 0
    %3830 = vmatprep.subr.bf16.mxu0 0
    %3831 = vmatpush1.bf16.msra.mxu0 0
    %3832 = vmatprep.subr.bf16.mxu0 0
    %3833 = vmatpush1.bf16.msra.mxu0 0
    %3834 = vmatprep.subr.bf16.mxu0 0
    %3835 = vmatpush1.bf16.msra.mxu0 0
    %3836 = vmatprep.subr.bf16.mxu0 0
    %3837 = vmatpush1.bf16.msra.mxu0 0
    %3838 = vmatprep.subr.bf16.mxu0 0
    %3839 = vmatpush1.bf16.msra.mxu0 0
    %3840 = vmatprep.subr.bf16.mxu0 0
    %3841 = vmatpush1.bf16.msra.mxu0 0
    %3842 = vmatprep.mubr.bf16.mxu0 0
    %3843 = vmatmul.mubr.bf16.gmra.mrb[0].mxu0 %v3808
    %v3844 = vpop.f32.mrb[0].mxu0
    %v3845 = vadd.f32 %v3760, %v3844
    %v3846 = vpop.f32.mrb[0].mxu0
    %v3847 = vadd.f32 %v3764, %v3846
    %v3848 = vpop.f32.mrb[0].mxu0
    %v3849 = vadd.f32 %v3760, %v3848
    %v3850 = vpop.f32.mrb[0].mxu0
    %v3851 = vadd.f32 %v3764, %v3850
    %3852 = vdwg.mxu0
    %3853 = vst [vmem:[#allocation2] sm:$0xff] %v3845
    %3854 = vst [vmem:[#allocation2 + $0x8] sm:$0xff] %v3847
    %3855 = vst [vmem:[#allocation2 + $0x10] sm:$0xff] %v3849
    %3856 = vst [vmem:[#allocation2 + $0x18] sm:$0xff] %v3851
    // Predicated region
    $region66: #{gpt_forward.1} parent=1 // pred_check
      _
    $region67: #{gpt_forward.1} parent=1 // pred_check_branch
      %3858 = sbr.rel (0) target = $region69
    $region68: #{gpt_forward.1} parent=1 // pred_region
      %s3860 = ssub.s32 512, 512
      %3861 = vsyncadd [#allocation3], %s3860
      %s3862 = sshll.u32 [#allocation2], 4
      %s3863 = int_to_ptr.vmem [resolvable:$true] %s3862
      %3868 = dma.vmem_to_hbm [thread:$0]  %s3863, 512, %s16, [#allocation3], 256, 256, 16
    $region69: #{gpt_forward.1} parent=1 // pred_fallthru
      _
    // Predicated region
    $region70: #{gpt_forward.1} parent=1 // pred_check
      _
    $region71: #{gpt_forward.1} parent=1 // pred_check_branch
      %3870 = sbr.rel (0) target = $region73
    $region72: #{gpt_forward.1} parent=1 // pred_region
      %3871 = dma.done [#allocation3], 512
    $region73: #{gpt_forward.1} parent=1 // pred_fallthru
      _
    %3872 = vsyncpa [#allocation3], 1

</llo_original>
